<compile_context>
chip_gen: v6e
topology: v6e:2x2x1
jax: 0.10.0
libtpu: 0.0.40
codegen_flags: <defaults>
</compile_context>

<pallas_src>
import jax
import jax.numpy as jnp
import numpy as np
from jax import lax
from jax.experimental import pallas as pl
from jax.experimental.pallas import tpu as pltpu


# (kernel, stride, pad, relu) for the 4 encoder convs (matches the nn.Module)
CONV_CFG = [(5, 2, 2, True), (3, 2, 1, True), (3, 2, 1, True), (3, 5, 1, False)]
CODE_PAD = 128      # mu lives in lanes [0,128), logvar in [128,256), z in [256,384)


def _round_up(x, m):
    return (x + m - 1) // m * m


def _conv_out(n, k, s, p):
    return (n + 2 * p - k) // s + 1


def _full_spec(shape):
    # single-block spec: block == full array (no grid)
    return pl.BlockSpec(shape, lambda: (0,) * len(shape))


# --------------------------------------------------------------------------- #
# In-kernel helpers
# --------------------------------------------------------------------------- #
def _conv_onehot(act, gidx_ref, w_ref, b_col, *, relu, op_dtype):
    """One conv layer: out(Cout, Mo) = sum_t W_t @ (act @ G_t) + b, optional ReLU.

    act:      (Cin, Ml) value, columns ordered (b, h, w), dtype == op_dtype.
    gidx_ref: (k*k, 1, Mo) int32 ref; gidx[t, 0, m'] = source column of `act`
              for tap t at output position m' (-1 encodes zero padding).
    w_ref:    (k*k, Cout, Cin) ref, dtype == op_dtype.
    b_col:    (Cout, 1) f32 value.
    """
    kk, _, mo = gidx_ref.shape
    cout = w_ref.shape[1]
    ml = act.shape[1]
    # Row index of every source column; compared against the per-tap index row
    # this yields an exact {0,1} gather matrix consumed by the MXU.
    mids = lax.broadcasted_iota(jnp.int32, (ml, mo), 0)

    def tap(t, acc):
        g = jnp.where(mids == gidx_ref[t], 1.0, 0.0).astype(op_dtype)   # (Ml, Mo)
        patch = jnp.dot(act, g, preferred_element_type=jnp.float32)     # (Cin, Mo)
        return acc + jnp.dot(w_ref[t], patch.astype(op_dtype),
                             preferred_element_type=jnp.float32)

    # fori_loop (not a Python for) bounds the live ranges of the big per-tap
    # one-hot temporaries so VMEM stays a few MB even with 9 taps.
    acc = lax.fori_loop(0, kk, tap, jnp.zeros((cout, mo), jnp.float32))
    acc = acc + b_col
    if relu:
        acc = jnp.maximum(acc, 0.0)
    return acc                                   # f32 (Cout, Mo)


def _vae_enc_kernel(p1_ref, w1_ref, b1_ref,
                    g2_ref, w2_ref, b2_ref,
                    g3_ref, w3_ref, b3_ref,
                    g4_ref, w4_ref, b4_ref,
                    wh_ref, bh_ref, eps_ref, out_ref):
    # conv1: plain matmul on the pre-im2col'd input patches (bf16 x bf16 -> f32).
    a1 = jnp.dot(w1_ref[...], p1_ref[...], preferred_element_type=jnp.float32)
    a1 = jnp.maximum(a1 + b1_ref[...], 0.0)

    # convs 2-3: bf16 operands, f32 accumulation; activation stays (C, B*H*W).
    a2 = _conv_onehot(a1.astype(jnp.bfloat16), g2_ref, w2_ref, b2_ref[...],
                      relu=True, op_dtype=jnp.bfloat16)
    a3 = _conv_onehot(a2.astype(jnp.bfloat16), g3_ref, w3_ref, b3_ref[...],
                      relu=True, op_dtype=jnp.bfloat16)

    # conv4 in f32 (tiny); its output columns are ordered (spatial s, batch b)
    # by construction of gidx4 so the head can take contiguous row slices.
    a4 = _conv_onehot(a3, g4_ref, w4_ref, b4_ref[...],
                      relu=False, op_dtype=jnp.float32)

    # VAE head: the PyTorch NCHW flatten is folded into wh (s4, Cout4, 2*CODE_PAD).
    batch = eps_ref.shape[0]
    s4, _, nh = wh_ref.shape
    a4t = a4.T                                           # (s4*batch, Cout4)
    acc = jnp.zeros((batch, nh), jnp.float32)
    for s in range(s4):                                  # s4 = 4, tiny, unrolled
        acc = acc + jnp.dot(a4t[s * batch:(s + 1) * batch, :], wh_ref[s],
                            preferred_element_type=jnp.float32)
    acc = acc + bh_ref[...]

    mu = acc[:, :CODE_PAD]
    lv = acc[:, CODE_PAD:]
    z = mu + eps_ref[...] * jnp.exp(0.5 * lv)
    out_ref[:, 0:CODE_PAD] = mu
    out_ref[:, CODE_PAD:2 * CODE_PAD] = lv
    out_ref[:, 2 * CODE_PAD:3 * CODE_PAD] = z


# --------------------------------------------------------------------------- #
# Host-side (trace-time) index tables and the one remaining XLA im2col
# --------------------------------------------------------------------------- #
def _gather_idx(batch, h_in, w_in, k, stride, pad, out_order="bhw"):
    """int32 (k*k, 1, Mo) source-column table for the in-kernel one-hot gather."""
    ho = _conv_out(h_in, k, stride, pad)
    wo = _conv_out(w_in, k, stride, pad)
    b_i = np.arange(batch).reshape(batch, 1, 1)
    ho_i = np.arange(ho).reshape(1, ho, 1)
    wo_i = np.arange(wo).reshape(1, 1, wo)
    idx = np.zeros((k * k, batch, ho, wo), np.int64)
    for dh in range(k):
        for dw in range(k):
            h = stride * ho_i + dh - pad
            w = stride * wo_i + dw - pad
            valid = (h >= 0) & (h < h_in) & (w >= 0) & (w < w_in)
            src = b_i * (h_in * w_in) + h * w_in + w
            idx[dh * k + dw] = np.where(valid, src, -1)
    if out_order == "hwb":                   # conv4: column = (ho*Wo + wo)*B + b
        idx = idx.transpose(0, 2, 3, 1)
    return idx.reshape(k * k, 1, batch * ho * wo).astype(np.int32), ho, wo


def _im2col_conv1(x_nchw, k, stride, pad, k_pad):
    """(B,C,H,W) -> bf16 (k_pad, B*Ho*Wo) patches; K ordered (tap, c), M (b,ho,wo).

    The K-pad and bf16 cast are folded in here so XLA emits ONE fusion.
    TODO(synk): move this last im2col in-kernel once Mosaic supports the
    strided sublane gather at these odd spatial tile widths.
    """
    x = jnp.transpose(x_nchw, (1, 0, 2, 3))                  # (C, B, H, W)
    c, b, h, w = x.shape
    xp = jnp.pad(x, ((0, 0), (0, 0), (pad, pad), (pad, pad)))
    ho = _conv_out(h, k, stride, pad)
    wo = _conv_out(w, k, stride, pad)
    taps = []
    for i in range(k):
        for j in range(k):
            taps.append(xp[:, :, i:i + stride * (ho - 1) + 1:stride,
                           j:j + stride * (wo - 1) + 1:stride])
    pt = jnp.stack(taps, axis=0).reshape(k * k * c, b * ho * wo)
    pt = jnp.pad(pt, ((0, k_pad - k * k * c), (0, 0)))
    return pt.astype(jnp.bfloat16), ho, wo


# --------------------------------------------------------------------------- #
# Parameters: synthetic init + one-time repack into kernel-friendly layouts
# --------------------------------------------------------------------------- #
def init_params(key, in_channels=3, base_features=8, code_dim_base=100):
    conv_shapes = [
        (base_features, in_channels, 5, 5),
        (2 * base_features, base_features, 3, 3),
        (4 * base_features, 2 * base_features, 3, 3),
        (8 * base_features, 4 * base_features, 3, 3),
    ]
    keys = jax.random.split(key, 2 * len(conv_shapes) + 4)
    convs = []
    for idx, s in enumerate(conv_shapes):
        fan_in = s[1] * s[2] * s[3]
        bound = 1.0 / np.sqrt(fan_in)
        w = jax.random.uniform(keys[2 * idx], s, jnp.float32, -bound, bound)
        b = jax.random.uniform(keys[2 * idx + 1], (s[0],), jnp.float32, -bound, bound)
        convs.append((w, b))
    out_features = 8 * base_features * 4                 # 64 channels * 2*2 spatial
    kb = 2 * len(conv_shapes)
    bound = 1.0 / np.sqrt(out_features)
    w_mu = jax.random.uniform(keys[kb + 0], (out_features, code_dim_base),
                              jnp.float32, -bound, bound)
    b_mu = jax.random.uniform(keys[kb + 1], (code_dim_base,), jnp.float32, -bound, bound)
    w_lv = jax.random.uniform(keys[kb + 2], (out_features, code_dim_base),
                              jnp.float32, -bound, bound)
    b_lv = jax.random.uniform(keys[kb + 3], (code_dim_base,), jnp.float32, -bound, bound)
    return {"convs": convs, "w_mu": w_mu, "b_mu": b_mu, "w_lv": w_lv, "b_lv": b_lv}


def prepare_params(params):
    """One-time weight repack (runs OUTSIDE the jitted hot path)."""
    convs = params["convs"]
    pp = {}

    # conv1: (Cout, Cin, 5, 5) -> (Cout_pad=16, Kpad=80) bf16, K ordered (tap, cin).
    w1, b1 = convs[0]
    co1, ci1, kh1, kw1 = w1.shape
    k1 = kh1 * kw1 * ci1
    co1p = _round_up(co1, 16)                 # fully packed bf16 sublane tile
    k1p = _round_up(k1, 16)
    w1m = jnp.transpose(w1, (0, 2, 3, 1)).reshape(co1, k1)
    pp["w1"] = jnp.pad(w1m, ((0, co1p - co1), (0, k1p - k1))).astype(jnp.bfloat16)
    pp["b1"] = jnp.pad(b1, (0, co1p - co1)).reshape(co1p, 1).astype(jnp.float32)

    # convs 2-4: per-tap weights (k*k, Cout, Cin_pad); conv2 sees conv1's padded Cout.
    def tap_pack(w, cin_pad, dtype):
        co, ci, kh, kw = w.shape
        wt = jnp.transpose(w, (2, 3, 0, 1)).reshape(kh * kw, co, ci)
        if cin_pad > ci:
            wt = jnp.pad(wt, ((0, 0), (0, 0), (0, cin_pad - ci)))
        return wt.astype(dtype)

    (w2, b2), (w3, b3), (w4, b4) = convs[1], convs[2], convs[3]
    pp["w2"] = tap_pack(w2, co1p, jnp.bfloat16)
    pp["b2"] = b2.reshape(-1, 1).astype(jnp.float32)
    pp["w3"] = tap_pack(w3, w3.shape[1], jnp.bfloat16)
    pp["b3"] = b3.reshape(-1, 1).astype(jnp.float32)
    pp["w4"] = tap_pack(w4, w4.shape[1], jnp.float32)     # f32 for head parity
    pp["b4"] = b4.reshape(-1, 1).astype(jnp.float32)

    # VAE head: fuse mu/logvar into one (F, 256) weight, fold the NCHW flatten
    # (feature = c*s4 + s) into a per-spatial-position (s4, Cout4, 256) layout.
    co4 = w4.shape[0]
    w_mu, b_mu = params["w_mu"], params["b_mu"]
    w_lv, b_lv = params["w_lv"], params["b_lv"]
    feat, code = w_mu.shape
    s4 = feat // co4
    nh = 2 * CODE_PAD
    wcat = jnp.zeros((feat, nh), jnp.float32)
    wcat = wcat.at[:, :code].set(w_mu).at[:, CODE_PAD:CODE_PAD + code].set(w_lv)
    pp["wh"] = wcat.reshape(co4, s4, nh).transpose(1, 0, 2)   # (s4, Cout4, nh)
    bh = jnp.zeros((1, nh), jnp.float32)
    bh = bh.at[0, :code].set(b_mu).at[0, CODE_PAD:CODE_PAD + code].set(b_lv)
    pp["bh"] = bh
    return pp


# --------------------------------------------------------------------------- #
# Forward pass (single Pallas kernel) and pure-JAX reference
# --------------------------------------------------------------------------- #
def vae_enc_forward(prepped, x_nchw, eps):
    batch, _, h_in, w_in = x_nchw.shape
    code = eps.shape[1]

    # conv1 patches: the only host-side im2col (its source is the raw input).
    k1, st1, pd1, _ = CONV_CFG[0]
    p1, ho1, wo1 = _im2col_conv1(x_nchw, k1, st1, pd1, prepped["w1"].shape[1])

    # Trace-time (numpy) source-index tables for the in-kernel one-hot gathers.
    k2, st2, pd2, _ = CONV_CFG[1]
    g2, ho2, wo2 = _gather_idx(batch, ho1, wo1, k2, st2, pd2)
    k3, st3, pd3, _ = CONV_CFG[2]
    g3, ho3, wo3 = _gather_idx(batch, ho2, wo2, k3, st3, pd3)
    k4, st4, pd4, _ = CONV_CFG[3]
    g4, ho4, wo4 = _gather_idx(batch, ho3, wo3, k4, st4, pd4, out_order="hwb")
    assert ho4 * wo4 == prepped["wh"].shape[0], "head repack / geometry mismatch"

    eps_p = jnp.pad(eps, ((0, 0), (0, CODE_PAD - code)))

    out = pl.pallas_call(
        _vae_enc_kernel,
        out_shape=jax.ShapeDtypeStruct((batch, 3 * CODE_PAD), jnp.float32),
        in_specs=[
            _full_spec(p1.shape),
            _full_spec(prepped["w1"].shape), _full_spec(prepped["b1"].shape),
            _full_spec(g2.shape), _full_spec(prepped["w2"].shape),
            _full_spec(prepped["b2"].shape),
            _full_spec(g3.shape), _full_spec(prepped["w3"].shape),
            _full_spec(prepped["b3"].shape),
            _full_spec(g4.shape), _full_spec(prepped["w4"].shape),
            _full_spec(prepped["b4"].shape),
            _full_spec(prepped["wh"].shape), _full_spec(prepped["bh"].shape),
            _full_spec((batch, CODE_PAD)),
        ],
        out_specs=_full_spec((batch, 3 * CODE_PAD)),
        # Explicit scoped-VMEM limit (safe on v5e/v6e 128 MiB and v7x 64 MiB);
        # actual peak usage here is a few MB.
        compiler_params=pltpu.CompilerParams(vmem_limit_bytes=32 * 1024 * 1024),
    )(p1, prepped["w1"], prepped["b1"],
      jnp.asarray(g2), prepped["w2"], prepped["b2"],
      jnp.asarray(g3), prepped["w3"], prepped["b3"],
      jnp.asarray(g4), prepped["w4"], prepped["b4"],
      prepped["wh"], prepped["bh"], eps_p)

    mu = out[:, :code]
    lv = out[:, CODE_PAD:CODE_PAD + code]
    z = out[:, 2 * CODE_PAD:2 * CODE_PAD + code]
    return mu, lv, z


def reference_forward(params, x_nchw, eps):
    x = x_nchw
    for (w, b), (k, stride, pad, relu) in zip(params["convs"], CONV_CFG):
        x = lax.conv_general_dilated(
            x, w, (stride, stride), [(pad, pad), (pad, pad)],
            dimension_numbers=("NCHW", "OIHW", "NCHW"),
            precision=lax.Precision.HIGHEST)
        x = x + b[None, :, None, None]
        if relu:
            x = jnp.maximum(x, 0.0)
    x = x.reshape(x.shape[0], -1)
    mu = jnp.dot(x, params["w_mu"], precision=lax.Precision.HIGHEST) + params["b_mu"]
    lv = jnp.dot(x, params["w_lv"], precision=lax.Precision.HIGHEST) + params["b_lv"]
    z = mu + eps * jnp.exp(0.5 * lv)
    return mu, lv, z


# --------------------------------------------------------------------------- #
if __name__ == "__main__":
    key = jax.random.PRNGKey(0)
    k_params, k_x, k_eps = jax.random.split(key, 3)

    # Spatial 48 -> 24 -> 12 -> 6 -> 2, so the flattened feature dim is
    # 64 * 2 * 2 = 256, matching the module's out_features.
    B, C, H, W = 2, 3, 48, 48
    CODE = 100
    params = init_params(k_params, in_channels=C, base_features=8, code_dim_base=CODE)
    prepped = prepare_params(params)     # one-time repack, outside the jitted hot path

    x = jax.random.normal(k_x, (B, C, H, W), dtype=jnp.float32)
    eps = jax.random.normal(k_eps, (B, CODE), dtype=jnp.float32)  # reparametrize noise

    fwd = jax.jit(vae_enc_forward)
    mu, logvar, z = fwd(prepped, x, eps)
    jax.block_until_ready((mu, logvar, z))

    # sanity check against an f32 HIGHEST-precision pure-JAX reference
    mu_r, lv_r, z_r = reference_forward(params, x, eps)
    np.testing.assert_allclose(np.asarray(mu), np.asarray(mu_r), rtol=2e-2, atol=2e-2)
    np.testing.assert_allclose(np.asarray(logvar), np.asarray(lv_r), rtol=2e-2, atol=2e-2)
    np.testing.assert_allclose(np.asarray(z), np.asarray(z_r), rtol=2e-2, atol=2e-2)

    print("KERNEL_OK")
</pallas_src>

<mosaic_0001>
module attributes {stable_mosaic.version = 11 : i64} {
  func.func @_vae_enc_kernel(%arg0: memref<80x1152xbf16, #tpu.memory_space<vmem>>, %arg1: memref<16x80xbf16, #tpu.memory_space<vmem>>, %arg2: memref<16x1xf32, #tpu.memory_space<vmem>>, %arg3: memref<9x1x288xi32, #tpu.memory_space<vmem>>, %arg4: memref<9x16x16xbf16, #tpu.memory_space<vmem>>, %arg5: memref<16x1xf32, #tpu.memory_space<vmem>>, %arg6: memref<9x1x72xi32, #tpu.memory_space<vmem>>, %arg7: memref<9x32x16xbf16, #tpu.memory_space<vmem>>, %arg8: memref<32x1xf32, #tpu.memory_space<vmem>>, %arg9: memref<9x1x8xi32, #tpu.memory_space<vmem>>, %arg10: memref<9x64x32xf32, #tpu.memory_space<vmem>>, %arg11: memref<64x1xf32, #tpu.memory_space<vmem>>, %arg12: memref<4x64x256xf32, #tpu.memory_space<vmem>>, %arg13: memref<1x256xf32, #tpu.memory_space<vmem>>, %arg14: memref<2x128xf32, #tpu.memory_space<vmem>>, %arg15: memref<2x384xf32, #tpu.memory_space<vmem>>) attributes {dimension_semantics = [], scalar_prefetch = 0 : i64, scratch_operands = 0 : i64, tpu.core_type = #tpu.core_type<tc>} {
    %c0 = arith.constant 0 : index
    %c0_0 = arith.constant 0 : index
    %0 = vector.load %arg1[%c0, %c0_0] : memref<16x80xbf16, #tpu.memory_space<vmem>>, vector<16x80xbf16>
    %c0_1 = arith.constant 0 : index
    %c0_2 = arith.constant 0 : index
    %1 = vector.load %arg0[%c0_1, %c0_2] : memref<80x1152xbf16, #tpu.memory_space<vmem>>, vector<80x1152xbf16>
    %cst = arith.constant dense<0.000000e+00> : vector<16x1152xf32>
    %2 = tpu.matmul %0, %1, %cst {dimension_numbers = #tpu.dot_dimension_numbers<[1], [0], [0], [1], [0, 0, 1, 1], [], []>} : vector<16x80xbf16>, vector<80x1152xbf16>, vector<16x1152xf32> -> vector<16x1152xf32>
    %c0_3 = arith.constant 0 : index
    %c0_4 = arith.constant 0 : index
    %3 = vector.load %arg2[%c0_3, %c0_4] : memref<16x1xf32, #tpu.memory_space<vmem>>, vector<16x1xf32>
    %4 = vector.broadcast %3 : vector<16x1xf32> to vector<16x1152xf32>
    %5 = arith.addf %2, %4 : vector<16x1152xf32>
    %cst_5 = arith.constant 0.000000e+00 : f32
    %6 = vector.broadcast %cst_5 : f32 to vector<16x1152xf32>
    %7 = arith.maximumf %5, %6 : vector<16x1152xf32>
    %8 = arith.truncf %7 : vector<16x1152xf32> to vector<16x1152xbf16>
    %c0_6 = arith.constant 0 : index
    %c0_7 = arith.constant 0 : index
    %9 = vector.load %arg5[%c0_6, %c0_7] : memref<16x1xf32, #tpu.memory_space<vmem>>, vector<16x1xf32>
    %10 = tpu.iota {dimensions = array<i32: 0>} : vector<1152x288xi32>
    %cst_8 = arith.constant 0.000000e+00 : f32
    %11 = vector.broadcast %cst_8 : f32 to vector<16x288xf32>
    %c0_i32 = arith.constant 0 : i32
    %c9_i32 = arith.constant 9 : i32
    %12 = arith.addi %c0_i32, %c9_i32 : i32
    %c1_i32 = arith.constant 1 : i32
    %13 = scf.for %arg16 = %c0_i32 to %12 step %c1_i32 iter_args(%arg17 = %11) -> (vector<16x288xf32>)  : i32 {
      %71 = arith.index_cast %arg16 : i32 to index
      %c0_49 = arith.constant 0 : index
      %c0_50 = arith.constant 0 : index
      %72 = vector.load %arg3[%71, %c0_49, %c0_50] : memref<9x1x288xi32, #tpu.memory_space<vmem>>, vector<1x1x288xi32>
      %73 = vector.shape_cast %72 : vector<1x1x288xi32> to vector<1x288xi32>
      %74 = vector.broadcast %73 : vector<1x288xi32> to vector<1152x288xi32>
      %75 = arith.cmpi eq, %10, %74 : vector<1152x288xi32>
      %cst_51 = arith.constant 1.000000e+00 : f32
      %cst_52 = arith.constant 0.000000e+00 : f32
      %76 = vector.broadcast %cst_51 : f32 to vector<1152x288xf32>
      %77 = vector.broadcast %cst_52 : f32 to vector<1152x288xf32>
      %78 = arith.select %75, %76, %77 : vector<1152x288xi1>, vector<1152x288xf32>
      %79 = arith.truncf %78 : vector<1152x288xf32> to vector<1152x288xbf16>
      %cst_53 = arith.constant dense<0.000000e+00> : vector<16x288xf32>
      %80 = tpu.matmul %8, %79, %cst_53 {dimension_numbers = #tpu.dot_dimension_numbers<[1], [0], [0], [1], [0, 0, 1, 1], [], []>} : vector<16x1152xbf16>, vector<1152x288xbf16>, vector<16x288xf32> -> vector<16x288xf32>
      %81 = arith.index_cast %arg16 : i32 to index
      %c0_54 = arith.constant 0 : index
      %c0_55 = arith.constant 0 : index
      %82 = vector.load %arg4[%81, %c0_54, %c0_55] : memref<9x16x16xbf16, #tpu.memory_space<vmem>>, vector<1x16x16xbf16>
      %83 = vector.shape_cast %82 : vector<1x16x16xbf16> to vector<16x16xbf16>
      %84 = arith.truncf %80 : vector<16x288xf32> to vector<16x288xbf16>
      %cst_56 = arith.constant dense<0.000000e+00> : vector<16x288xf32>
      %85 = tpu.matmul %83, %84, %cst_56 {dimension_numbers = #tpu.dot_dimension_numbers<[1], [0], [0], [1], [0, 0, 1, 1], [], []>} : vector<16x16xbf16>, vector<16x288xbf16>, vector<16x288xf32> -> vector<16x288xf32>
      %86 = arith.addf %arg17, %85 : vector<16x288xf32>
      scf.yield %86 : vector<16x288xf32>
    }
    %c9_i32_9 = arith.constant 9 : i32
    %14 = vector.broadcast %9 : vector<16x1xf32> to vector<16x288xf32>
    %15 = arith.addf %13, %14 : vector<16x288xf32>
    %cst_10 = arith.constant 0.000000e+00 : f32
    %16 = vector.broadcast %cst_10 : f32 to vector<16x288xf32>
    %17 = arith.maximumf %15, %16 : vector<16x288xf32>
    %18 = arith.truncf %17 : vector<16x288xf32> to vector<16x288xbf16>
    %c0_11 = arith.constant 0 : index
    %c0_12 = arith.constant 0 : index
    %19 = vector.load %arg8[%c0_11, %c0_12] : memref<32x1xf32, #tpu.memory_space<vmem>>, vector<32x1xf32>
    %20 = tpu.iota {dimensions = array<i32: 0>} : vector<288x72xi32>
    %cst_13 = arith.constant 0.000000e+00 : f32
    %21 = vector.broadcast %cst_13 : f32 to vector<32x72xf32>
    %c0_i32_14 = arith.constant 0 : i32
    %c9_i32_15 = arith.constant 9 : i32
    %22 = arith.addi %c0_i32_14, %c9_i32_15 : i32
    %c1_i32_16 = arith.constant 1 : i32
    %23 = scf.for %arg16 = %c0_i32_14 to %22 step %c1_i32_16 iter_args(%arg17 = %21) -> (vector<32x72xf32>)  : i32 {
      %71 = arith.index_cast %arg16 : i32 to index
      %c0_49 = arith.constant 0 : index
      %c0_50 = arith.constant 0 : index
      %72 = vector.load %arg6[%71, %c0_49, %c0_50] : memref<9x1x72xi32, #tpu.memory_space<vmem>>, vector<1x1x72xi32>
      %73 = vector.shape_cast %72 : vector<1x1x72xi32> to vector<1x72xi32>
      %74 = vector.broadcast %73 : vector<1x72xi32> to vector<288x72xi32>
      %75 = arith.cmpi eq, %20, %74 : vector<288x72xi32>
      %cst_51 = arith.constant 1.000000e+00 : f32
      %cst_52 = arith.constant 0.000000e+00 : f32
      %76 = vector.broadcast %cst_51 : f32 to vector<288x72xf32>
      %77 = vector.broadcast %cst_52 : f32 to vector<288x72xf32>
      %78 = arith.select %75, %76, %77 : vector<288x72xi1>, vector<288x72xf32>
      %79 = arith.truncf %78 : vector<288x72xf32> to vector<288x72xbf16>
      %cst_53 = arith.constant dense<0.000000e+00> : vector<16x72xf32>
      %80 = tpu.matmul %18, %79, %cst_53 {dimension_numbers = #tpu.dot_dimension_numbers<[1], [0], [0], [1], [0, 0, 1, 1], [], []>} : vector<16x288xbf16>, vector<288x72xbf16>, vector<16x72xf32> -> vector<16x72xf32>
      %81 = arith.index_cast %arg16 : i32 to index
      %c0_54 = arith.constant 0 : index
      %c0_55 = arith.constant 0 : index
      %82 = vector.load %arg7[%81, %c0_54, %c0_55] : memref<9x32x16xbf16, #tpu.memory_space<vmem>>, vector<1x32x16xbf16>
      %83 = vector.shape_cast %82 : vector<1x32x16xbf16> to vector<32x16xbf16>
      %84 = arith.truncf %80 : vector<16x72xf32> to vector<16x72xbf16>
      %cst_56 = arith.constant dense<0.000000e+00> : vector<32x72xf32>
      %85 = tpu.matmul %83, %84, %cst_56 {dimension_numbers = #tpu.dot_dimension_numbers<[1], [0], [0], [1], [0, 0, 1, 1], [], []>} : vector<32x16xbf16>, vector<16x72xbf16>, vector<32x72xf32> -> vector<32x72xf32>
      %86 = arith.addf %arg17, %85 : vector<32x72xf32>
      scf.yield %86 : vector<32x72xf32>
    }
    %c9_i32_17 = arith.constant 9 : i32
    %24 = vector.broadcast %19 : vector<32x1xf32> to vector<32x72xf32>
    %25 = arith.addf %23, %24 : vector<32x72xf32>
    %cst_18 = arith.constant 0.000000e+00 : f32
    %26 = vector.broadcast %cst_18 : f32 to vector<32x72xf32>
    %27 = arith.maximumf %25, %26 : vector<32x72xf32>
    %c0_19 = arith.constant 0 : index
    %c0_20 = arith.constant 0 : index
    %28 = vector.load %arg11[%c0_19, %c0_20] : memref<64x1xf32, #tpu.memory_space<vmem>>, vector<64x1xf32>
    %29 = tpu.iota {dimensions = array<i32: 0>} : vector<72x8xi32>
    %cst_21 = arith.constant 0.000000e+00 : f32
    %30 = vector.broadcast %cst_21 : f32 to vector<64x8xf32>
    %c0_i32_22 = arith.constant 0 : i32
    %c9_i32_23 = arith.constant 9 : i32
    %31 = arith.addi %c0_i32_22, %c9_i32_23 : i32
    %c1_i32_24 = arith.constant 1 : i32
    %32 = scf.for %arg16 = %c0_i32_22 to %31 step %c1_i32_24 iter_args(%arg17 = %30) -> (vector<64x8xf32>)  : i32 {
      %71 = arith.index_cast %arg16 : i32 to index
      %c0_49 = arith.constant 0 : index
      %c0_50 = arith.constant 0 : index
      %72 = vector.load %arg9[%71, %c0_49, %c0_50] : memref<9x1x8xi32, #tpu.memory_space<vmem>>, vector<1x1x8xi32>
      %73 = vector.shape_cast %72 : vector<1x1x8xi32> to vector<1x8xi32>
      %74 = vector.broadcast %73 : vector<1x8xi32> to vector<72x8xi32>
      %75 = arith.cmpi eq, %29, %74 : vector<72x8xi32>
      %cst_51 = arith.constant 1.000000e+00 : f32
      %cst_52 = arith.constant 0.000000e+00 : f32
      %76 = vector.broadcast %cst_51 : f32 to vector<72x8xf32>
      %77 = vector.broadcast %cst_52 : f32 to vector<72x8xf32>
      %78 = arith.select %75, %76, %77 : vector<72x8xi1>, vector<72x8xf32>
      %cst_53 = arith.constant dense<0.000000e+00> : vector<32x8xf32>
      %79 = tpu.matmul %27, %78, %cst_53 {dimension_numbers = #tpu.dot_dimension_numbers<[1], [0], [0], [1], [0, 0, 1, 1], [], []>} : vector<32x72xf32>, vector<72x8xf32>, vector<32x8xf32> -> vector<32x8xf32>
      %80 = arith.index_cast %arg16 : i32 to index
      %c0_54 = arith.constant 0 : index
      %c0_55 = arith.constant 0 : index
      %81 = vector.load %arg10[%80, %c0_54, %c0_55] : memref<9x64x32xf32, #tpu.memory_space<vmem>>, vector<1x64x32xf32>
      %82 = vector.shape_cast %81 : vector<1x64x32xf32> to vector<64x32xf32>
      %cst_56 = arith.constant dense<0.000000e+00> : vector<64x8xf32>
      %83 = tpu.matmul %82, %79, %cst_56 {dimension_numbers = #tpu.dot_dimension_numbers<[1], [0], [0], [1], [0, 0, 1, 1], [], []>} : vector<64x32xf32>, vector<32x8xf32>, vector<64x8xf32> -> vector<64x8xf32>
      %84 = arith.addf %arg17, %83 : vector<64x8xf32>
      scf.yield %84 : vector<64x8xf32>
    }
    %c9_i32_25 = arith.constant 9 : i32
    %33 = vector.broadcast %28 : vector<64x1xf32> to vector<64x8xf32>
    %34 = arith.addf %32, %33 : vector<64x8xf32>
    %35 = tpu.transpose %34, [1, 0] : vector<64x8xf32> -> vector<8x64xf32>
    %cst_26 = arith.constant 0.000000e+00 : f32
    %36 = vector.broadcast %cst_26 : f32 to vector<2x256xf32>
    %37 = vector.extract_strided_slice %35 {offsets = [0, 0], sizes = [2, 64], strides = [1, 1]} : vector<8x64xf32> to vector<2x64xf32>
    %c0_27 = arith.constant 0 : index
    %c0_28 = arith.constant 0 : index
    %c0_29 = arith.constant 0 : index
    %38 = vector.load %arg12[%c0_27, %c0_28, %c0_29] : memref<4x64x256xf32, #tpu.memory_space<vmem>>, vector<1x64x256xf32>
    %39 = vector.shape_cast %38 : vector<1x64x256xf32> to vector<64x256xf32>
    %cst_30 = arith.constant dense<0.000000e+00> : vector<2x256xf32>
    %40 = tpu.matmul %37, %39, %cst_30 {dimension_numbers = #tpu.dot_dimension_numbers<[1], [0], [0], [1], [0, 0, 1, 1], [], []>} : vector<2x64xf32>, vector<64x256xf32>, vector<2x256xf32> -> vector<2x256xf32>
    %41 = arith.addf %36, %40 : vector<2x256xf32>
    %42 = vector.extract_strided_slice %35 {offsets = [2, 0], sizes = [2, 64], strides = [1, 1]} : vector<8x64xf32> to vector<2x64xf32>
    %c1 = arith.constant 1 : index
    %c0_31 = arith.constant 0 : index
    %c0_32 = arith.constant 0 : index
    %43 = vector.load %arg12[%c1, %c0_31, %c0_32] : memref<4x64x256xf32, #tpu.memory_space<vmem>>, vector<1x64x256xf32>
    %44 = vector.shape_cast %43 : vector<1x64x256xf32> to vector<64x256xf32>
    %cst_33 = arith.constant dense<0.000000e+00> : vector<2x256xf32>
    %45 = tpu.matmul %42, %44, %cst_33 {dimension_numbers = #tpu.dot_dimension_numbers<[1], [0], [0], [1], [0, 0, 1, 1], [], []>} : vector<2x64xf32>, vector<64x256xf32>, vector<2x256xf32> -> vector<2x256xf32>
    %46 = arith.addf %41, %45 : vector<2x256xf32>
    %47 = vector.extract_strided_slice %35 {offsets = [4, 0], sizes = [2, 64], strides = [1, 1]} : vector<8x64xf32> to vector<2x64xf32>
    %c2 = arith.constant 2 : index
    %c0_34 = arith.constant 0 : index
    %c0_35 = arith.constant 0 : index
    %48 = vector.load %arg12[%c2, %c0_34, %c0_35] : memref<4x64x256xf32, #tpu.memory_space<vmem>>, vector<1x64x256xf32>
    %49 = vector.shape_cast %48 : vector<1x64x256xf32> to vector<64x256xf32>
    %cst_36 = arith.constant dense<0.000000e+00> : vector<2x256xf32>
    %50 = tpu.matmul %47, %49, %cst_36 {dimension_numbers = #tpu.dot_dimension_numbers<[1], [0], [0], [1], [0, 0, 1, 1], [], []>} : vector<2x64xf32>, vector<64x256xf32>, vector<2x256xf32> -> vector<2x256xf32>
    %51 = arith.addf %46, %50 : vector<2x256xf32>
    %52 = vector.extract_strided_slice %35 {offsets = [6, 0], sizes = [2, 64], strides = [1, 1]} : vector<8x64xf32> to vector<2x64xf32>
    %c3 = arith.constant 3 : index
    %c0_37 = arith.constant 0 : index
    %c0_38 = arith.constant 0 : index
    %53 = vector.load %arg12[%c3, %c0_37, %c0_38] : memref<4x64x256xf32, #tpu.memory_space<vmem>>, vector<1x64x256xf32>
    %54 = vector.shape_cast %53 : vector<1x64x256xf32> to vector<64x256xf32>
    %cst_39 = arith.constant dense<0.000000e+00> : vector<2x256xf32>
    %55 = tpu.matmul %52, %54, %cst_39 {dimension_numbers = #tpu.dot_dimension_numbers<[1], [0], [0], [1], [0, 0, 1, 1], [], []>} : vector<2x64xf32>, vector<64x256xf32>, vector<2x256xf32> -> vector<2x256xf32>
    %56 = arith.addf %51, %55 : vector<2x256xf32>
    %c0_40 = arith.constant 0 : index
    %c0_41 = arith.constant 0 : index
    %57 = vector.load %arg13[%c0_40, %c0_41] : memref<1x256xf32, #tpu.memory_space<vmem>>, vector<1x256xf32>
    %58 = vector.broadcast %57 : vector<1x256xf32> to vector<2x256xf32>
    %59 = arith.addf %56, %58 : vector<2x256xf32>
    %60 = vector.extract_strided_slice %59 {offsets = [0, 0], sizes = [2, 128], strides = [1, 1]} : vector<2x256xf32> to vector<2x128xf32>
    %61 = vector.extract_strided_slice %59 {offsets = [0, 128], sizes = [2, 128], strides = [1, 1]} : vector<2x256xf32> to vector<2x128xf32>
    %c0_42 = arith.constant 0 : index
    %c0_43 = arith.constant 0 : index
    %62 = vector.load %arg14[%c0_42, %c0_43] : memref<2x128xf32, #tpu.memory_space<vmem>>, vector<2x128xf32>
    %cst_44 = arith.constant 5.000000e-01 : f32
    %63 = vector.broadcast %cst_44 : f32 to vector<2x128xf32>
    %64 = arith.mulf %63, %61 : vector<2x128xf32>
    %65 = math.exp %64 : vector<2x128xf32>
    %66 = arith.mulf %62, %65 : vector<2x128xf32>
    %67 = arith.addf %60, %66 : vector<2x128xf32>
    %c0_45 = arith.constant 0 : index
    %c0_46 = arith.constant 0 : index
    %68 = vector.load %arg15[%c0_45, %c0_46] : memref<2x384xf32, #tpu.memory_space<vmem>>, vector<2x128xf32>
    tpu.vector_store %arg15[%c0_45, %c0_46], %60 {strides = array<i32>} : memref<2x384xf32, #tpu.memory_space<vmem>>, vector<2x128xf32>,
    %c0_47 = arith.constant 0 : index
    %c128 = arith.constant 128 : index
    %69 = vector.load %arg15[%c0_47, %c128] : memref<2x384xf32, #tpu.memory_space<vmem>>, vector<2x128xf32>
    tpu.vector_store %arg15[%c0_47, %c128], %61 {strides = array<i32>} : memref<2x384xf32, #tpu.memory_space<vmem>>, vector<2x128xf32>,
    %c0_48 = arith.constant 0 : index
    %c256 = arith.constant 256 : index
    %70 = vector.load %arg15[%c0_48, %c256] : memref<2x384xf32, #tpu.memory_space<vmem>>, vector<2x128xf32>
    tpu.vector_store %arg15[%c0_48, %c256], %67 {strides = array<i32>} : memref<2x384xf32, #tpu.memory_space<vmem>>, vector<2x128xf32>,
    return
  }
}

</mosaic_0001>

<llo_original>
// kernel: vae_enc_forward.1
$region0: #{vae_enc_forward.1}
  #allocation0 [shape = 'u32[]', space=smem, size = 0x4, offset = 0x4, fixed_abs, tag = 'smem constant byte address 0x4 - core index']
  #allocation1 [shape = 'u32[144,128]{1,0:T(1,128)}', space=vmem, size = 0x12000, scoped, tag = 'internal scratch']
  %s0 = inlined_call_operand.vmem [shape: bf16[80,1152], index: 0, kind: input, shape index: {}]
  %s1 = inlined_call_operand.vmem [shape: bf16[16,80], index: 1, kind: input, shape index: {}]
  %s2 = inlined_call_operand.vmem [shape: f32[16,1], index: 2, kind: input, shape index: {}]
  %s3 = inlined_call_operand.vmem [shape: s32[9,1,288], index: 3, kind: input, shape index: {}]
  %s4 = inlined_call_operand.vmem [shape: bf16[9,16,16], index: 4, kind: input, shape index: {}]
  %s5 = inlined_call_operand.vmem [shape: f32[16,1], index: 5, kind: input, shape index: {}]
  %s6 = inlined_call_operand.vmem [shape: s32[9,1,72], index: 6, kind: input, shape index: {}]
  %s7 = inlined_call_operand.vmem [shape: bf16[9,32,16], index: 7, kind: input, shape index: {}]
  %s8 = inlined_call_operand.vmem [shape: f32[32,1], index: 8, kind: input, shape index: {}]
  %s9 = inlined_call_operand.vmem [shape: s32[9,1,8], index: 9, kind: input, shape index: {}]
  %s10 = inlined_call_operand.vmem [shape: f32[9,64,32], index: 10, kind: input, shape index: {}]
  %s11 = inlined_call_operand.vmem [shape: f32[64,1], index: 11, kind: input, shape index: {}]
  %s12 = inlined_call_operand.vmem [shape: f32[4,64,256], index: 12, kind: input, shape index: {}]
  %s13 = inlined_call_operand.vmem [shape: f32[1,256], index: 13, kind: input, shape index: {}]
  %s14 = inlined_call_operand.vmem [shape: f32[2,128], index: 14, kind: input, shape index: {}]
  %s15 = inlined_call_operand.vmem [shape: f32[2,384], index: 15, kind: output, shape index: {}]
  %s16 = sld [smem:[#allocation0]]
  $region91: #{vae_enc_forward.1} parent=0
    _
  %s18 = ssub.s32 1, %s16
  %s19 = scalar_select 0, %s18, %s16
  // Predicated region
  $region2: #{vae_enc_forward.1} parent=0 // pred_check
    _
  $region3: #{vae_enc_forward.1} parent=0 // pred_check_branch
    %21 = sbr.rel (0) target = $region5
  $region4: #{vae_enc_forward.1} parent=0 // pred_region
    _
  $region5: #{vae_enc_forward.1} parent=0 // pred_fallthru
    _
  // Predicated region
  $region6: #{vae_enc_forward.1} parent=0 // pred_check
    _
  $region7: #{vae_enc_forward.1} parent=0 // pred_check_branch
    %23 = sbr.rel (0) target = $region9
  $region8: #{vae_enc_forward.1} parent=0 // pred_region
    _
  $region9: #{vae_enc_forward.1} parent=0 // pred_fallthru
    _
  // Predicated region
  $region10: #{vae_enc_forward.1} parent=0 // pred_check
    _
  $region11: #{vae_enc_forward.1} parent=0 // pred_check_branch
    %25 = sbr.rel (0) target = $region13
  $region12: #{vae_enc_forward.1} parent=0 // pred_region
    _
  $region13: #{vae_enc_forward.1} parent=0 // pred_fallthru
    _
  // Predicated region
  $region14: #{vae_enc_forward.1} parent=0 // pred_check
    _
  $region15: #{vae_enc_forward.1} parent=0 // pred_check_branch
    %27 = sbr.rel (0) target = $region17
  $region16: #{vae_enc_forward.1} parent=0 // pred_region
    _
  $region17: #{vae_enc_forward.1} parent=0 // pred_fallthru
    _
  // Predicated region
  $region18: #{vae_enc_forward.1} parent=0 // pred_check
    _
  $region19: #{vae_enc_forward.1} parent=0 // pred_check_branch
    %29 = sbr.rel (0) target = $region21
  $region20: #{vae_enc_forward.1} parent=0 // pred_region
    _
  $region21: #{vae_enc_forward.1} parent=0 // pred_fallthru
    _
  // Predicated region
  $region22: #{vae_enc_forward.1} parent=0 // pred_check
    _
  $region23: #{vae_enc_forward.1} parent=0 // pred_check_branch
    %31 = sbr.rel (0) target = $region25
  $region24: #{vae_enc_forward.1} parent=0 // pred_region
    _
  $region25: #{vae_enc_forward.1} parent=0 // pred_fallthru
    _
  // Predicated region
  $region26: #{vae_enc_forward.1} parent=0 // pred_check
    _
  $region27: #{vae_enc_forward.1} parent=0 // pred_check_branch
    %33 = sbr.rel (0) target = $region29
  $region28: #{vae_enc_forward.1} parent=0 // pred_region
    _
  $region29: #{vae_enc_forward.1} parent=0 // pred_fallthru
    _
  // Predicated region
  $region30: #{vae_enc_forward.1} parent=0 // pred_check
    _
  $region31: #{vae_enc_forward.1} parent=0 // pred_check_branch
    %35 = sbr.rel (0) target = $region33
  $region32: #{vae_enc_forward.1} parent=0 // pred_region
    _
  $region33: #{vae_enc_forward.1} parent=0 // pred_fallthru
    _
  // Predicated region
  $region34: #{vae_enc_forward.1} parent=0 // pred_check
    _
  $region35: #{vae_enc_forward.1} parent=0 // pred_check_branch
    %37 = sbr.rel (0) target = $region37
  $region36: #{vae_enc_forward.1} parent=0 // pred_region
    _
  $region37: #{vae_enc_forward.1} parent=0 // pred_fallthru
    _
  // Predicated region
  $region38: #{vae_enc_forward.1} parent=0 // pred_check
    _
  $region39: #{vae_enc_forward.1} parent=0 // pred_check_branch
    %39 = sbr.rel (0) target = $region41
  $region40: #{vae_enc_forward.1} parent=0 // pred_region
    _
  $region41: #{vae_enc_forward.1} parent=0 // pred_fallthru
    _
  // Predicated region
  $region42: #{vae_enc_forward.1} parent=0 // pred_check
    _
  $region43: #{vae_enc_forward.1} parent=0 // pred_check_branch
    %41 = sbr.rel (0) target = $region45
  $region44: #{vae_enc_forward.1} parent=0 // pred_region
    _
  $region45: #{vae_enc_forward.1} parent=0 // pred_fallthru
    _
  // Predicated region
  $region46: #{vae_enc_forward.1} parent=0 // pred_check
    _
  $region47: #{vae_enc_forward.1} parent=0 // pred_check_branch
    %43 = sbr.rel (0) target = $region49
  $region48: #{vae_enc_forward.1} parent=0 // pred_region
    _
  $region49: #{vae_enc_forward.1} parent=0 // pred_fallthru
    _
  // Predicated region
  $region50: #{vae_enc_forward.1} parent=0 // pred_check
    _
  $region51: #{vae_enc_forward.1} parent=0 // pred_check_branch
    %45 = sbr.rel (0) target = $region53
  $region52: #{vae_enc_forward.1} parent=0 // pred_region
    _
  $region53: #{vae_enc_forward.1} parent=0 // pred_fallthru
    _
  // Predicated region
  $region54: #{vae_enc_forward.1} parent=0 // pred_check
    _
  $region55: #{vae_enc_forward.1} parent=0 // pred_check_branch
    %47 = sbr.rel (0) target = $region57
  $region56: #{vae_enc_forward.1} parent=0 // pred_region
    _
  $region57: #{vae_enc_forward.1} parent=0 // pred_fallthru
    _
  // Predicated region
  $region58: #{vae_enc_forward.1} parent=0 // pred_check
    _
  $region59: #{vae_enc_forward.1} parent=0 // pred_check_branch
    %49 = sbr.rel (0) target = $region61
  $region60: #{vae_enc_forward.1} parent=0 // pred_region
    _
  $region61: #{vae_enc_forward.1} parent=0 // pred_fallthru
    _
  %v51 = vld [vmem:[%s1] sm:$0xf]
  %v52 = vld [vmem:[%s1 + $0x4] sm:$0xf]
  %v53 = vld [vmem:[%s0] sm:$0xff]
  %v54 = vld [vmem:[%s0 + $0x8] sm:$0xff]
  %v55 = vld [vmem:[%s0 + $0x10] sm:$0xff]
  %v56 = vld [vmem:[%s0 + $0x18] sm:$0xff]
  %v57 = vld [vmem:[%s0 + $0x20] sm:$0xf]
  %v58 = vld [vmem:[%s0 + $0x24] sm:$0xff]
  %v59 = vld [vmem:[%s0 + $0x2c] sm:$0xff]
  %v60 = vld [vmem:[%s0 + $0x34] sm:$0xff]
  %v61 = vld [vmem:[%s0 + $0x3c] sm:$0xff]
  %v62 = vld [vmem:[%s0 + $0x44] sm:$0xf]
  %v63 = vld [vmem:[%s0 + $0x48] sm:$0xff]
  %v64 = vld [vmem:[%s0 + $0x50] sm:$0xff]
  %v65 = vld [vmem:[%s0 + $0x58] sm:$0xff]
  %v66 = vld [vmem:[%s0 + $0x60] sm:$0xff]
  %v67 = vld [vmem:[%s0 + $0x68] sm:$0xf]
  %v68 = vld [vmem:[%s0 + $0x6c] sm:$0xff]
  %v69 = vld [vmem:[%s0 + $0x74] sm:$0xff]
  %v70 = vld [vmem:[%s0 + $0x7c] sm:$0xff]
  %v71 = vld [vmem:[%s0 + $0x84] sm:$0xff]
  %v72 = vld [vmem:[%s0 + $0x8c] sm:$0xf]
  %v73 = vld [vmem:[%s0 + $0x90] sm:$0xff]
  %v74 = vld [vmem:[%s0 + $0x98] sm:$0xff]
  %v75 = vld [vmem:[%s0 + $0xa0] sm:$0xff]
  %v76 = vld [vmem:[%s0 + $0xa8] sm:$0xff]
  %v77 = vld [vmem:[%s0 + $0xb0] sm:$0xf]
  %v78 = vld [vmem:[%s0 + $0xb4] sm:$0xff]
  %v79 = vld [vmem:[%s0 + $0xbc] sm:$0xff]
  %v80 = vld [vmem:[%s0 + $0xc4] sm:$0xff]
  %v81 = vld [vmem:[%s0 + $0xcc] sm:$0xff]
  %v82 = vld [vmem:[%s0 + $0xd4] sm:$0xf]
  %v83 = vld [vmem:[%s0 + $0xd8] sm:$0xff]
  %v84 = vld [vmem:[%s0 + $0xe0] sm:$0xff]
  %v85 = vld [vmem:[%s0 + $0xe8] sm:$0xff]
  %v86 = vld [vmem:[%s0 + $0xf0] sm:$0xff]
  %v87 = vld [vmem:[%s0 + $0xf8] sm:$0xf]
  %v88 = vld [vmem:[%s0 + $0xfc] sm:$0xff]
  %v89 = vld [vmem:[%s0 + $0x104] sm:$0xff]
  %v90 = vld [vmem:[%s0 + $0x10c] sm:$0xff]
  %v91 = vld [vmem:[%s0 + $0x114] sm:$0xff]
  %v92 = vld [vmem:[%s0 + $0x11c] sm:$0xf]
  %v93 = vld [vmem:[%s0 + $0x120] sm:$0xff]
  %v94 = vld [vmem:[%s0 + $0x128] sm:$0xff]
  %v95 = vld [vmem:[%s0 + $0x130] sm:$0xff]
  %v96 = vld [vmem:[%s0 + $0x138] sm:$0xff]
  %v97 = vld [vmem:[%s0 + $0x140] sm:$0xf]
  %v98 = vld [vmem:[%s0 + $0x144] sm:$0xff]
  %v99 = vld [vmem:[%s0 + $0x14c] sm:$0xff]
  %v100 = vld [vmem:[%s0 + $0x154] sm:$0xff]
  %v101 = vld [vmem:[%s0 + $0x15c] sm:$0xff]
  %v102 = vld [vmem:[%s0 + $0x164] sm:$0xf]
  %v103 = vld [vmem:[%s2] sm:$0xff]
  %v104 = vld [vmem:[%s2 + $0x8] sm:$0xff]
  %106 = vset.pattern.permute.xlu0 0
  %107 = vperm.xlu0 %106, %v103
  %v108 = vpop.permute.xlu0 %107
  %111 = vset.pattern.permute.xlu0 0
  %112 = vperm.xlu0 %111, %v104
  %v113 = vpop.permute.xlu0 %112
  %v117 = vunpack.c.l.b16 %v51
  %v118 = vunpack.c.l.b16 %v52
  %v119 = vpack.c.b16 %v118, %v117
  %v170 = vunpack.c.l.b16 %v53
  %v171 = vunpack.c.h.b16 %v53
  %v172 = vunpack.c.l.b16 %v54
  %v173 = vunpack.c.h.b16 %v54
  %v174 = vunpack.c.l.b16 %v55
  %v175 = vunpack.c.h.b16 %v55
  %v176 = vunpack.c.l.b16 %v56
  %v177 = vunpack.c.h.b16 %v56
  %v178 = vunpack.c.l.b16 %v57
  %v179 = vunpack.c.l.b16 %v58
  %v180 = vunpack.c.h.b16 %v58
  %v181 = vunpack.c.l.b16 %v59
  %v182 = vunpack.c.h.b16 %v59
  %v183 = vunpack.c.l.b16 %v60
  %v184 = vunpack.c.h.b16 %v60
  %v185 = vunpack.c.l.b16 %v61
  %v186 = vunpack.c.h.b16 %v61
  %v187 = vunpack.c.l.b16 %v62
  %v188 = vunpack.c.l.b16 %v63
  %v189 = vunpack.c.h.b16 %v63
  %v190 = vunpack.c.l.b16 %v64
  %v191 = vunpack.c.h.b16 %v64
  %v192 = vunpack.c.l.b16 %v65
  %v193 = vunpack.c.h.b16 %v65
  %v194 = vunpack.c.l.b16 %v66
  %v195 = vunpack.c.h.b16 %v66
  %v196 = vunpack.c.l.b16 %v67
  %v197 = vunpack.c.l.b16 %v68
  %v198 = vunpack.c.h.b16 %v68
  %v199 = vunpack.c.l.b16 %v69
  %v200 = vunpack.c.h.b16 %v69
  %v201 = vunpack.c.l.b16 %v70
  %v202 = vunpack.c.h.b16 %v70
  %v203 = vunpack.c.l.b16 %v71
  %v204 = vunpack.c.h.b16 %v71
  %v205 = vunpack.c.l.b16 %v72
  %v206 = vunpack.c.l.b16 %v73
  %v207 = vunpack.c.h.b16 %v73
  %v208 = vunpack.c.l.b16 %v74
  %v209 = vunpack.c.h.b16 %v74
  %v210 = vunpack.c.l.b16 %v75
  %v211 = vunpack.c.h.b16 %v75
  %v212 = vunpack.c.l.b16 %v76
  %v213 = vunpack.c.h.b16 %v76
  %v214 = vunpack.c.l.b16 %v77
  %v215 = vunpack.c.l.b16 %v78
  %v216 = vunpack.c.h.b16 %v78
  %v217 = vunpack.c.l.b16 %v79
  %v218 = vunpack.c.h.b16 %v79
  %v219 = vunpack.c.l.b16 %v80
  %v220 = vunpack.c.h.b16 %v80
  %v221 = vunpack.c.l.b16 %v81
  %v222 = vunpack.c.h.b16 %v81
  %v223 = vunpack.c.l.b16 %v82
  %v224 = vunpack.c.l.b16 %v83
  %v225 = vunpack.c.h.b16 %v83
  %v226 = vunpack.c.l.b16 %v84
  %v227 = vunpack.c.h.b16 %v84
  %v228 = vunpack.c.l.b16 %v85
  %v229 = vunpack.c.h.b16 %v85
  %v230 = vunpack.c.l.b16 %v86
  %v231 = vunpack.c.h.b16 %v86
  %v232 = vunpack.c.l.b16 %v87
  %v233 = vunpack.c.l.b16 %v88
  %v234 = vunpack.c.h.b16 %v88
  %v235 = vunpack.c.l.b16 %v89
  %v236 = vunpack.c.h.b16 %v89
  %v237 = vunpack.c.l.b16 %v90
  %v238 = vunpack.c.h.b16 %v90
  %v239 = vunpack.c.l.b16 %v91
  %v240 = vunpack.c.h.b16 %v91
  %v241 = vunpack.c.l.b16 %v92
  %v242 = vunpack.c.l.b16 %v93
  %v243 = vunpack.c.h.b16 %v93
  %v244 = vunpack.c.l.b16 %v94
  %v245 = vunpack.c.h.b16 %v94
  %v246 = vunpack.c.l.b16 %v95
  %v247 = vunpack.c.h.b16 %v95
  %v248 = vunpack.c.l.b16 %v96
  %v249 = vunpack.c.h.b16 %v96
  %v250 = vunpack.c.l.b16 %v97
  %v251 = vunpack.c.l.b16 %v98
  %v252 = vunpack.c.h.b16 %v98
  %v253 = vunpack.c.l.b16 %v99
  %v254 = vunpack.c.h.b16 %v99
  %v255 = vunpack.c.l.b16 %v100
  %v256 = vunpack.c.h.b16 %v100
  %v257 = vunpack.c.l.b16 %v101
  %v258 = vunpack.c.h.b16 %v101
  %v259 = vunpack.c.l.b16 %v102
  %v260 = vpack.c.b16 %v179, %v170
  %v261 = vpack.c.b16 %v180, %v171
  %v262 = vpack.c.b16 %v181, %v172
  %v263 = vpack.c.b16 %v182, %v173
  %v264 = vpack.c.b16 %v183, %v174
  %v265 = vpack.c.b16 %v184, %v175
  %v266 = vpack.c.b16 %v185, %v176
  %v267 = vpack.c.b16 %v186, %v177
  %v268 = vpack.c.b16 %v187, %v178
  %v269 = vpack.c.b16 %v197, %v188
  %v270 = vpack.c.b16 %v198, %v189
  %v271 = vpack.c.b16 %v199, %v190
  %v272 = vpack.c.b16 %v200, %v191
  %v273 = vpack.c.b16 %v201, %v192
  %v274 = vpack.c.b16 %v202, %v193
  %v275 = vpack.c.b16 %v203, %v194
  %v276 = vpack.c.b16 %v204, %v195
  %v277 = vpack.c.b16 %v205, %v196
  %v278 = vpack.c.b16 %v215, %v206
  %v279 = vpack.c.b16 %v216, %v207
  %v280 = vpack.c.b16 %v217, %v208
  %v281 = vpack.c.b16 %v218, %v209
  %v282 = vpack.c.b16 %v219, %v210
  %v283 = vpack.c.b16 %v220, %v211
  %v284 = vpack.c.b16 %v221, %v212
  %v285 = vpack.c.b16 %v222, %v213
  %v286 = vpack.c.b16 %v223, %v214
  %v287 = vpack.c.b16 %v233, %v224
  %v288 = vpack.c.b16 %v234, %v225
  %v289 = vpack.c.b16 %v235, %v226
  %v290 = vpack.c.b16 %v236, %v227
  %v291 = vpack.c.b16 %v237, %v228
  %v292 = vpack.c.b16 %v238, %v229
  %v293 = vpack.c.b16 %v239, %v230
  %v294 = vpack.c.b16 %v240, %v231
  %v295 = vpack.c.b16 %v241, %v232
  %v296 = vpack.c.b16 %v251, %v242
  %v297 = vpack.c.b16 %v252, %v243
  %v298 = vpack.c.b16 %v253, %v244
  %v299 = vpack.c.b16 %v254, %v245
  %v300 = vpack.c.b16 %v255, %v246
  %v301 = vpack.c.b16 %v256, %v247
  %v302 = vpack.c.b16 %v257, %v248
  %v303 = vpack.c.b16 %v258, %v249
  %v304 = vpack.c.b16 %v259, %v250
  %vm350 = vcmask 654336
  %v352 = vsel %vm350, %v119, 0
  %354 = vmatprep.subr.bf16.mxu0 0
  %355 = vmatpush1.bf16.msra.mxu0 0
  %356 = vmatprep.subr.bf16.mxu0 0
  %357 = vmatpush1.bf16.msra.mxu0 0
  %358 = vmatprep.subr.bf16.mxu0 0
  %359 = vmatpush1.bf16.msra.mxu0 0
  %360 = vmatprep.subr.bf16.mxu0 %v297
  %361 = vmatpush1.bf16.msra.mxu0 %v296
  %362 = vmatprep.subr.bf16.mxu0 %v288
  %363 = vmatpush1.bf16.msra.mxu0 %v287
  %364 = vmatprep.subr.bf16.mxu0 %v279
  %365 = vmatpush1.bf16.msra.mxu0 %v278
  %366 = vmatprep.subr.bf16.mxu0 %v270
  %367 = vmatpush1.bf16.msra.mxu0 %v269
  %368 = vmatprep.subr.bf16.mxu0 %v261
  %369 = vmatpush1.bf16.msra.mxu0 %v260
  %370 = vmatprep.subr.bf16.mxu0 0
  %371 = vmatpush2.bf16.msra.mxu0 0
  %372 = vmatprep.subr.bf16.mxu0 0
  %373 = vmatpush2.bf16.msra.mxu0 0
  %374 = vmatprep.subr.bf16.mxu0 0
  %375 = vmatpush2.bf16.msra.mxu0 0
  %376 = vmatprep.subr.bf16.mxu0 0
  %377 = vmatpush2.bf16.msra.mxu0 0
  %378 = vmatprep.subr.bf16.mxu0 0
  %379 = vmatpush2.bf16.msra.mxu0 0
  %380 = vmatprep.subr.bf16.mxu0 0
  %381 = vmatpush2.bf16.msra.mxu0 0
  %382 = vmatprep.subr.bf16.mxu0 0
  %383 = vmatpush2.bf16.msra.mxu0 0
  %384 = vmatprep.subr.bf16.mxu0 0
  %385 = vmatpush2.bf16.msra.mxu0 0
  %386 = vmatprep.mubr.bf16.mxu0 0
  %387 = vmatmul.mubr.bf16.gmra.mxu0 %v352
  %v388 = vpop.f32.mrf.mxu0
  %v389 = vadd.f32 %v108, %v388
  %v390 = vpop.f32.mrf.mxu0
  %v391 = vadd.f32 %v108, %v390
  %v392 = vpop.f32.mrf.mxu0
  %v393 = vadd.f32 %v113, %v392
  %v394 = vpop.f32.mrf.mxu0
  %v395 = vadd.f32 %v113, %v394
  %396 = vdwg.mxu0
  %397 = vmatprep.subr.bf16.mxu0 0
  %398 = vmatpush1.bf16.msra.mxu0 0
  %399 = vmatprep.subr.bf16.mxu0 0
  %400 = vmatpush1.bf16.msra.mxu0 0
  %401 = vmatprep.subr.bf16.mxu0 0
  %402 = vmatpush1.bf16.msra.mxu0 0
  %403 = vmatprep.subr.bf16.mxu0 %v299
  %404 = vmatpush1.bf16.msra.mxu0 %v298
  %405 = vmatprep.subr.bf16.mxu0 %v290
  %406 = vmatpush1.bf16.msra.mxu0 %v289
  %407 = vmatprep.subr.bf16.mxu0 %v281
  %408 = vmatpush1.bf16.msra.mxu0 %v280
  %409 = vmatprep.subr.bf16.mxu0 %v272
  %410 = vmatpush1.bf16.msra.mxu0 %v271
  %411 = vmatprep.subr.bf16.mxu0 %v263
  %412 = vmatpush1.bf16.msra.mxu0 %v262
  %413 = vmatprep.subr.bf16.mxu0 0
  %414 = vmatpush2.bf16.msra.mxu0 0
  %415 = vmatprep.subr.bf16.mxu0 0
  %416 = vmatpush2.bf16.msra.mxu0 0
  %417 = vmatprep.subr.bf16.mxu0 0
  %418 = vmatpush2.bf16.msra.mxu0 0
  %419 = vmatprep.subr.bf16.mxu0 0
  %420 = vmatpush2.bf16.msra.mxu0 0
  %421 = vmatprep.subr.bf16.mxu0 0
  %422 = vmatpush2.bf16.msra.mxu0 0
  %423 = vmatprep.subr.bf16.mxu0 0
  %424 = vmatpush2.bf16.msra.mxu0 0
  %425 = vmatprep.subr.bf16.mxu0 0
  %426 = vmatpush2.bf16.msra.mxu0 0
  %427 = vmatprep.subr.bf16.mxu0 0
  %428 = vmatpush2.bf16.msra.mxu0 0
  %429 = vmatprep.mubr.bf16.mxu0 0
  %430 = vmatmul.mubr.bf16.gmra.mxu0 %v352
  %v431 = vpop.f32.mrf.mxu0
  %v432 = vadd.f32 %v108, %v431
  %v433 = vpop.f32.mrf.mxu0
  %v434 = vadd.f32 %v108, %v433
  %v435 = vpop.f32.mrf.mxu0
  %v436 = vadd.f32 %v113, %v435
  %v437 = vpop.f32.mrf.mxu0
  %v438 = vadd.f32 %v113, %v437
  %439 = vdwg.mxu0
  %440 = vmatprep.subr.bf16.mxu0 0
  %441 = vmatpush1.bf16.msra.mxu0 0
  %442 = vmatprep.subr.bf16.mxu0 0
  %443 = vmatpush1.bf16.msra.mxu0 0
  %444 = vmatprep.subr.bf16.mxu0 0
  %445 = vmatpush1.bf16.msra.mxu0 0
  %446 = vmatprep.subr.bf16.mxu0 %v301
  %447 = vmatpush1.bf16.msra.mxu0 %v300
  %448 = vmatprep.subr.bf16.mxu0 %v292
  %449 = vmatpush1.bf16.msra.mxu0 %v291
  %450 = vmatprep.subr.bf16.mxu0 %v283
  %451 = vmatpush1.bf16.msra.mxu0 %v282
  %452 = vmatprep.subr.bf16.mxu0 %v274
  %453 = vmatpush1.bf16.msra.mxu0 %v273
  %454 = vmatprep.subr.bf16.mxu0 %v265
  %455 = vmatpush1.bf16.msra.mxu0 %v264
  %456 = vmatprep.subr.bf16.mxu0 0
  %457 = vmatpush2.bf16.msra.mxu0 0
  %458 = vmatprep.subr.bf16.mxu0 0
  %459 = vmatpush2.bf16.msra.mxu0 0
  %460 = vmatprep.subr.bf16.mxu0 0
  %461 = vmatpush2.bf16.msra.mxu0 0
  %462 = vmatprep.subr.bf16.mxu0 0
  %463 = vmatpush2.bf16.msra.mxu0 0
  %464 = vmatprep.subr.bf16.mxu0 0
  %465 = vmatpush2.bf16.msra.mxu0 0
  %466 = vmatprep.subr.bf16.mxu0 0
  %467 = vmatpush2.bf16.msra.mxu0 0
  %468 = vmatprep.subr.bf16.mxu0 0
  %469 = vmatpush2.bf16.msra.mxu0 0
  %470 = vmatprep.subr.bf16.mxu0 0
  %471 = vmatpush2.bf16.msra.mxu0 0
  %472 = vmatprep.mubr.bf16.mxu0 0
  %473 = vmatmul.mubr.bf16.gmra.mxu0 %v352
  %v474 = vpop.f32.mrf.mxu0
  %v475 = vadd.f32 %v108, %v474
  %v476 = vpop.f32.mrf.mxu0
  %v477 = vadd.f32 %v108, %v476
  %v478 = vpop.f32.mrf.mxu0
  %v479 = vadd.f32 %v113, %v478
  %v480 = vpop.f32.mrf.mxu0
  %v481 = vadd.f32 %v113, %v480
  %482 = vdwg.mxu0
  %483 = vmatprep.subr.bf16.mxu0 0
  %484 = vmatpush1.bf16.msra.mxu0 0
  %485 = vmatprep.subr.bf16.mxu0 0
  %486 = vmatpush1.bf16.msra.mxu0 0
  %487 = vmatprep.subr.bf16.mxu0 0
  %488 = vmatpush1.bf16.msra.mxu0 0
  %489 = vmatprep.subr.bf16.mxu0 %v303
  %490 = vmatpush1.bf16.msra.mxu0 %v302
  %491 = vmatprep.subr.bf16.mxu0 %v294
  %492 = vmatpush1.bf16.msra.mxu0 %v293
  %493 = vmatprep.subr.bf16.mxu0 %v285
  %494 = vmatpush1.bf16.msra.mxu0 %v284
  %495 = vmatprep.subr.bf16.mxu0 %v276
  %496 = vmatpush1.bf16.msra.mxu0 %v275
  %497 = vmatprep.subr.bf16.mxu0 %v267
  %498 = vmatpush1.bf16.msra.mxu0 %v266
  %499 = vmatprep.subr.bf16.mxu0 0
  %500 = vmatpush2.bf16.msra.mxu0 0
  %501 = vmatprep.subr.bf16.mxu0 0
  %502 = vmatpush2.bf16.msra.mxu0 0
  %503 = vmatprep.subr.bf16.mxu0 0
  %504 = vmatpush2.bf16.msra.mxu0 0
  %505 = vmatprep.subr.bf16.mxu0 0
  %506 = vmatpush2.bf16.msra.mxu0 0
  %507 = vmatprep.subr.bf16.mxu0 0
  %508 = vmatpush2.bf16.msra.mxu0 0
  %509 = vmatprep.subr.bf16.mxu0 0
  %510 = vmatpush2.bf16.msra.mxu0 0
  %511 = vmatprep.subr.bf16.mxu0 0
  %512 = vmatpush2.bf16.msra.mxu0 0
  %513 = vmatprep.subr.bf16.mxu0 0
  %514 = vmatpush2.bf16.msra.mxu0 0
  %515 = vmatprep.mubr.bf16.mxu0 0
  %516 = vmatmul.mubr.bf16.gmra.mxu0 %v352
  %v517 = vpop.f32.mrf.mxu0
  %v518 = vadd.f32 %v108, %v517
  %v519 = vpop.f32.mrf.mxu0
  %v520 = vadd.f32 %v108, %v519
  %v521 = vpop.f32.mrf.mxu0
  %v522 = vadd.f32 %v113, %v521
  %v523 = vpop.f32.mrf.mxu0
  %v524 = vadd.f32 %v113, %v523
  %525 = vdwg.mxu0
  %526 = vmatprep.subr.bf16.mxu0 0
  %527 = vmatpush1.bf16.msra.mxu0 0
  %528 = vmatprep.subr.bf16.mxu0 0
  %529 = vmatpush1.bf16.msra.mxu0 0
  %530 = vmatprep.subr.bf16.mxu0 0
  %531 = vmatpush1.bf16.msra.mxu0 0
  %532 = vmatprep.subr.bf16.mxu0 0
  %533 = vmatpush1.bf16.msra.mxu0 %v304
  %534 = vmatprep.subr.bf16.mxu0 0
  %535 = vmatpush1.bf16.msra.mxu0 %v295
  %536 = vmatprep.subr.bf16.mxu0 0
  %537 = vmatpush1.bf16.msra.mxu0 %v286
  %538 = vmatprep.subr.bf16.mxu0 0
  %539 = vmatpush1.bf16.msra.mxu0 %v277
  %540 = vmatprep.subr.bf16.mxu0 0
  %541 = vmatpush1.bf16.msra.mxu0 %v268
  %542 = vmatprep.subr.bf16.mxu0 0
  %543 = vmatpush2.bf16.msra.mxu0 0
  %544 = vmatprep.subr.bf16.mxu0 0
  %545 = vmatpush2.bf16.msra.mxu0 0
  %546 = vmatprep.subr.bf16.mxu0 0
  %547 = vmatpush2.bf16.msra.mxu0 0
  %548 = vmatprep.subr.bf16.mxu0 0
  %549 = vmatpush2.bf16.msra.mxu0 0
  %550 = vmatprep.subr.bf16.mxu0 0
  %551 = vmatpush2.bf16.msra.mxu0 0
  %552 = vmatprep.subr.bf16.mxu0 0
  %553 = vmatpush2.bf16.msra.mxu0 0
  %554 = vmatprep.subr.bf16.mxu0 0
  %555 = vmatpush2.bf16.msra.mxu0 0
  %556 = vmatprep.subr.bf16.mxu0 0
  %557 = vmatpush2.bf16.msra.mxu0 0
  %558 = vmatprep.mubr.bf16.mxu0 0
  %559 = vmatmul.mubr.bf16.gmra.mxu0 %v352
  %v560 = vpop.f32.mrf.mxu0
  %v561 = vadd.f32 %v108, %v560
  %v562 = vpop.f32.mrf.mxu0
  %v563 = vpop.f32.mrf.mxu0
  %v564 = vadd.f32 %v113, %v563
  %v565 = vpop.f32.mrf.mxu0
  %566 = vdwg.mxu0
  %v567 = vmax.f32 %v389, 0.0
  %v568 = vmax.f32 %v391, 0.0
  %v569 = vmax.f32 %v432, 0.0
  %v570 = vmax.f32 %v434, 0.0
  %v571 = vmax.f32 %v475, 0.0
  %v572 = vmax.f32 %v477, 0.0
  %v573 = vmax.f32 %v518, 0.0
  %v574 = vmax.f32 %v520, 0.0
  %v575 = vmax.f32 %v561, 0.0
  %v576 = vmax.f32 %v393, 0.0
  %v577 = vmax.f32 %v395, 0.0
  %v578 = vmax.f32 %v436, 0.0
  %v579 = vmax.f32 %v438, 0.0
  %v580 = vmax.f32 %v479, 0.0
  %v581 = vmax.f32 %v481, 0.0
  %v582 = vmax.f32 %v522, 0.0
  %v583 = vmax.f32 %v524, 0.0
  %v584 = vmax.f32 %v564, 0.0
  %v585 = vpack.c.bf16 %v576, %v567
  %v586 = vpack.c.bf16 %v577, %v568
  %v587 = vpack.c.bf16 %v578, %v569
  %v588 = vpack.c.bf16 %v579, %v570
  %v589 = vpack.c.bf16 %v580, %v571
  %v590 = vpack.c.bf16 %v581, %v572
  %v591 = vpack.c.bf16 %v582, %v573
  %v592 = vpack.c.bf16 %v583, %v574
  %v593 = vpack.c.bf16 %v584, %v575
  %v594 = vld [vmem:[%s5] sm:$0xff]
  %v595 = vld [vmem:[%s5 + $0x8] sm:$0xff]
  %v596 = vlaneseq
  %v597 = vshrl.u32 %v596, 7
  %v598 = vadd.s32 %v597, 8
  %v599 = vadd.s32 %v597, 16
  %v600 = vadd.s32 %v597, 24
  %v601 = vadd.s32 %v597, 32
  %v602 = vadd.s32 %v597, 40
  %v603 = vadd.s32 %v597, 48
  %v604 = vadd.s32 %v597, 56
  %v605 = vadd.s32 %v597, 64
  %v606 = vadd.s32 %v597, 72
  %v607 = vadd.s32 %v597, 80
  %v608 = vadd.s32 %v597, 88
  %v609 = vadd.s32 %v597, 96
  %v610 = vadd.s32 %v597, 104
  %v611 = vadd.s32 %v597, 112
  %v612 = vadd.s32 %v597, 120
  %v613 = vadd.s32 %v597, 128
  %v614 = vadd.s32 %v597, 136
  %v615 = vadd.s32 %v597, 144
  %v616 = vadd.s32 %v597, 152
  %v617 = vadd.s32 %v597, 160
  %v618 = vadd.s32 %v597, 168
  %v619 = vadd.s32 %v597, 176
  %v620 = vadd.s32 %v597, 184
  %v621 = vadd.s32 %v597, 192
  %v622 = vadd.s32 %v597, 200
  %v623 = vadd.s32 %v597, 208
  %v624 = vadd.s32 %v597, 216
  %v625 = vadd.s32 %v597, 224
  %v626 = vadd.s32 %v597, 232
  %v627 = vadd.s32 %v597, 240
  %v628 = vadd.s32 %v597, 248
  %v629 = vadd.s32 %v597, 256
  %v630 = vadd.s32 %v597, 264
  %v631 = vadd.s32 %v597, 272
  %v632 = vadd.s32 %v597, 280
  %v633 = vadd.s32 %v597, 288
  %v634 = vadd.s32 %v597, 296
  %v635 = vadd.s32 %v597, 304
  %v636 = vadd.s32 %v597, 312
  %v637 = vadd.s32 %v597, 320
  %v638 = vadd.s32 %v597, 328
  %v639 = vadd.s32 %v597, 336
  %v640 = vadd.s32 %v597, 344
  %v641 = vadd.s32 %v597, 352
  %v642 = vadd.s32 %v597, 360
  %v643 = vadd.s32 %v597, 368
  %v644 = vadd.s32 %v597, 376
  %v645 = vadd.s32 %v597, 384
  %v646 = vadd.s32 %v597, 392
  %v647 = vadd.s32 %v597, 400
  %v648 = vadd.s32 %v597, 408
  %v649 = vadd.s32 %v597, 416
  %v650 = vadd.s32 %v597, 424
  %v651 = vadd.s32 %v597, 432
  %v652 = vadd.s32 %v597, 440
  %v653 = vadd.s32 %v597, 448
  %v654 = vadd.s32 %v597, 456
  %v655 = vadd.s32 %v597, 464
  %v656 = vadd.s32 %v597, 472
  %v657 = vadd.s32 %v597, 480
  %v658 = vadd.s32 %v597, 488
  %v659 = vadd.s32 %v597, 496
  %v660 = vadd.s32 %v597, 504
  %v661 = vadd.s32 %v597, 512
  %v662 = vadd.s32 %v597, 520
  %v663 = vadd.s32 %v597, 528
  %v664 = vadd.s32 %v597, 536
  %v665 = vadd.s32 %v597, 544
  %v666 = vadd.s32 %v597, 552
  %v667 = vadd.s32 %v597, 560
  %v668 = vadd.s32 %v597, 568
  %v669 = vadd.s32 %v597, 576
  %v670 = vadd.s32 %v597, 584
  %v671 = vadd.s32 %v597, 592
  %v672 = vadd.s32 %v597, 600
  %v673 = vadd.s32 %v597, 608
  %v674 = vadd.s32 %v597, 616
  %v675 = vadd.s32 %v597, 624
  %v676 = vadd.s32 %v597, 632
  %v677 = vadd.s32 %v597, 640
  %v678 = vadd.s32 %v597, 648
  %v679 = vadd.s32 %v597, 656
  %v680 = vadd.s32 %v597, 664
  %v681 = vadd.s32 %v597, 672
  %v682 = vadd.s32 %v597, 680
  %v683 = vadd.s32 %v597, 688
  %v684 = vadd.s32 %v597, 696
  %v685 = vadd.s32 %v597, 704
  %v686 = vadd.s32 %v597, 712
  %v687 = vadd.s32 %v597, 720
  %v688 = vadd.s32 %v597, 728
  %v689 = vadd.s32 %v597, 736
  %v690 = vadd.s32 %v597, 744
  %v691 = vadd.s32 %v597, 752
  %v692 = vadd.s32 %v597, 760
  %v693 = vadd.s32 %v597, 768
  %v694 = vadd.s32 %v597, 776
  %v695 = vadd.s32 %v597, 784
  %v696 = vadd.s32 %v597, 792
  %v697 = vadd.s32 %v597, 800
  %v698 = vadd.s32 %v597, 808
  %v699 = vadd.s32 %v597, 816
  %v700 = vadd.s32 %v597, 824
  %v701 = vadd.s32 %v597, 832
  %v702 = vadd.s32 %v597, 840
  %v703 = vadd.s32 %v597, 848
  %v704 = vadd.s32 %v597, 856
  %v705 = vadd.s32 %v597, 864
  %v706 = vadd.s32 %v597, 872
  %v707 = vadd.s32 %v597, 880
  %v708 = vadd.s32 %v597, 888
  %v709 = vadd.s32 %v597, 896
  %v710 = vadd.s32 %v597, 904
  %v711 = vadd.s32 %v597, 912
  %v712 = vadd.s32 %v597, 920
  %v713 = vadd.s32 %v597, 928
  %v714 = vadd.s32 %v597, 936
  %v715 = vadd.s32 %v597, 944
  %v716 = vadd.s32 %v597, 952
  %v717 = vadd.s32 %v597, 960
  %v718 = vadd.s32 %v597, 968
  %v719 = vadd.s32 %v597, 976
  %v720 = vadd.s32 %v597, 984
  %v721 = vadd.s32 %v597, 992
  %v722 = vadd.s32 %v597, 1000
  %v723 = vadd.s32 %v597, 1008
  %v724 = vadd.s32 %v597, 1016
  %v725 = vadd.s32 %v597, 1024
  %v726 = vadd.s32 %v597, 1032
  %v727 = vadd.s32 %v597, 1040
  %v728 = vadd.s32 %v597, 1048
  %v729 = vadd.s32 %v597, 1056
  %v730 = vadd.s32 %v597, 1064
  %v731 = vadd.s32 %v597, 1072
  %v732 = vadd.s32 %v597, 1080
  %v733 = vadd.s32 %v597, 1088
  %v734 = vadd.s32 %v597, 1096
  %v735 = vadd.s32 %v597, 1104
  %v736 = vadd.s32 %v597, 1112
  %v737 = vadd.s32 %v597, 1120
  %v738 = vadd.s32 %v597, 1128
  %v739 = vadd.s32 %v597, 1136
  %v740 = vadd.s32 %v597, 1144
  loop: start=0, step=1, limit=9
  $region62: #{vae_enc_forward.1} parent=0 // loop_pre_header
    _
  $region63: #{vae_enc_forward.1} parent=0 // loop_header
    %s742 = sphi 0, %s746
    %p743 = scmp.ge.s32.totalorder %s742, 9
    %v747 = vphi 0.0, %v2369
    %v748 = vphi 0.0, %v2370
    %v749 = vphi 0.0, %v2371
    %v750 = vphi 0.0, %v2372
    %v751 = vphi 0.0, %v2373
    %v752 = vphi 0.0, %v2374
  $region64: #{vae_enc_forward.1} parent=0 // loop_header_branch
    %745 = sbr.rel (%p743) target = $region68
  $region65: #{vae_enc_forward.1} parent=0 // loop_body
    %s753 = smul.u32 %s742, 3
    %s754 = scalar_lea.vmem %s3, %s753
    %v755 = vld [vmem:[%s754] sm:$0x7]
    %v756 = vlaneseq
    %v757 = vshrl.u32 %v756, 7
    %v758 = vsub.s32 0, %v757
    %v759 = vrot.slane %v755, %v758
    %v760 = vlaneseq
    %v761 = vshrl.u32 %v760, 7
    %v762 = vsub.s32 1, %v761
    %v763 = vrot.slane %v755, %v762
    %v764 = vlaneseq
    %v765 = vshrl.u32 %v764, 7
    %v766 = vsub.s32 2, %v765
    %v767 = vrot.slane %v755, %v766
    %vm768 = vcmp.eq.s32.totalorder %v597, %v759
    %vm769 = vcmp.eq.s32.totalorder %v597, %v763
    %vm770 = vcmp.eq.s32.totalorder %v597, %v767
    %vm771 = vcmp.eq.s32.totalorder %v598, %v759
    %vm772 = vcmp.eq.s32.totalorder %v598, %v763
    %vm773 = vcmp.eq.s32.totalorder %v598, %v767
    %vm774 = vcmp.eq.s32.totalorder %v599, %v759
    %vm775 = vcmp.eq.s32.totalorder %v599, %v763
    %vm776 = vcmp.eq.s32.totalorder %v599, %v767
    %vm777 = vcmp.eq.s32.totalorder %v600, %v759
    %vm778 = vcmp.eq.s32.totalorder %v600, %v763
    %vm779 = vcmp.eq.s32.totalorder %v600, %v767
    %vm780 = vcmp.eq.s32.totalorder %v601, %v759
    %vm781 = vcmp.eq.s32.totalorder %v601, %v763
    %vm782 = vcmp.eq.s32.totalorder %v601, %v767
    %vm783 = vcmp.eq.s32.totalorder %v602, %v759
    %vm784 = vcmp.eq.s32.totalorder %v602, %v763
    %vm785 = vcmp.eq.s32.totalorder %v602, %v767
    %vm786 = vcmp.eq.s32.totalorder %v603, %v759
    %vm787 = vcmp.eq.s32.totalorder %v603, %v763
    %vm788 = vcmp.eq.s32.totalorder %v603, %v767
    %vm789 = vcmp.eq.s32.totalorder %v604, %v759
    %vm790 = vcmp.eq.s32.totalorder %v604, %v763
    %vm791 = vcmp.eq.s32.totalorder %v604, %v767
    %vm792 = vcmp.eq.s32.totalorder %v605, %v759
    %vm793 = vcmp.eq.s32.totalorder %v605, %v763
    %vm794 = vcmp.eq.s32.totalorder %v605, %v767
    %vm795 = vcmp.eq.s32.totalorder %v606, %v759
    %vm796 = vcmp.eq.s32.totalorder %v606, %v763
    %vm797 = vcmp.eq.s32.totalorder %v606, %v767
    %vm798 = vcmp.eq.s32.totalorder %v607, %v759
    %vm799 = vcmp.eq.s32.totalorder %v607, %v763
    %vm800 = vcmp.eq.s32.totalorder %v607, %v767
    %vm801 = vcmp.eq.s32.totalorder %v608, %v759
    %vm802 = vcmp.eq.s32.totalorder %v608, %v763
    %vm803 = vcmp.eq.s32.totalorder %v608, %v767
    %vm804 = vcmp.eq.s32.totalorder %v609, %v759
    %vm805 = vcmp.eq.s32.totalorder %v609, %v763
    %vm806 = vcmp.eq.s32.totalorder %v609, %v767
    %vm807 = vcmp.eq.s32.totalorder %v610, %v759
    %vm808 = vcmp.eq.s32.totalorder %v610, %v763
    %vm809 = vcmp.eq.s32.totalorder %v610, %v767
    %vm810 = vcmp.eq.s32.totalorder %v611, %v759
    %vm811 = vcmp.eq.s32.totalorder %v611, %v763
    %vm812 = vcmp.eq.s32.totalorder %v611, %v767
    %vm813 = vcmp.eq.s32.totalorder %v612, %v759
    %vm814 = vcmp.eq.s32.totalorder %v612, %v763
    %vm815 = vcmp.eq.s32.totalorder %v612, %v767
    %vm816 = vcmp.eq.s32.totalorder %v613, %v759
    %vm817 = vcmp.eq.s32.totalorder %v613, %v763
    %vm818 = vcmp.eq.s32.totalorder %v613, %v767
    %vm819 = vcmp.eq.s32.totalorder %v614, %v759
    %vm820 = vcmp.eq.s32.totalorder %v614, %v763
    %vm821 = vcmp.eq.s32.totalorder %v614, %v767
    %vm822 = vcmp.eq.s32.totalorder %v615, %v759
    %vm823 = vcmp.eq.s32.totalorder %v615, %v763
    %vm824 = vcmp.eq.s32.totalorder %v615, %v767
    %vm825 = vcmp.eq.s32.totalorder %v616, %v759
    %vm826 = vcmp.eq.s32.totalorder %v616, %v763
    %vm827 = vcmp.eq.s32.totalorder %v616, %v767
    %vm828 = vcmp.eq.s32.totalorder %v617, %v759
    %vm829 = vcmp.eq.s32.totalorder %v617, %v763
    %vm830 = vcmp.eq.s32.totalorder %v617, %v767
    %vm831 = vcmp.eq.s32.totalorder %v618, %v759
    %vm832 = vcmp.eq.s32.totalorder %v618, %v763
    %vm833 = vcmp.eq.s32.totalorder %v618, %v767
    %vm834 = vcmp.eq.s32.totalorder %v619, %v759
    %vm835 = vcmp.eq.s32.totalorder %v619, %v763
    %vm836 = vcmp.eq.s32.totalorder %v619, %v767
    %vm837 = vcmp.eq.s32.totalorder %v620, %v759
    %vm838 = vcmp.eq.s32.totalorder %v620, %v763
    %vm839 = vcmp.eq.s32.totalorder %v620, %v767
    %vm840 = vcmp.eq.s32.totalorder %v621, %v759
    %vm841 = vcmp.eq.s32.totalorder %v621, %v763
    %vm842 = vcmp.eq.s32.totalorder %v621, %v767
    %vm843 = vcmp.eq.s32.totalorder %v622, %v759
    %vm844 = vcmp.eq.s32.totalorder %v622, %v763
    %vm845 = vcmp.eq.s32.totalorder %v622, %v767
    %vm846 = vcmp.eq.s32.totalorder %v623, %v759
    %vm847 = vcmp.eq.s32.totalorder %v623, %v763
    %vm848 = vcmp.eq.s32.totalorder %v623, %v767
    %vm849 = vcmp.eq.s32.totalorder %v624, %v759
    %vm850 = vcmp.eq.s32.totalorder %v624, %v763
    %vm851 = vcmp.eq.s32.totalorder %v624, %v767
    %vm852 = vcmp.eq.s32.totalorder %v625, %v759
    %vm853 = vcmp.eq.s32.totalorder %v625, %v763
    %vm854 = vcmp.eq.s32.totalorder %v625, %v767
    %vm855 = vcmp.eq.s32.totalorder %v626, %v759
    %vm856 = vcmp.eq.s32.totalorder %v626, %v763
    %vm857 = vcmp.eq.s32.totalorder %v626, %v767
    %vm858 = vcmp.eq.s32.totalorder %v627, %v759
    %vm859 = vcmp.eq.s32.totalorder %v627, %v763
    %vm860 = vcmp.eq.s32.totalorder %v627, %v767
    %vm861 = vcmp.eq.s32.totalorder %v628, %v759
    %vm862 = vcmp.eq.s32.totalorder %v628, %v763
    %vm863 = vcmp.eq.s32.totalorder %v628, %v767
    %vm864 = vcmp.eq.s32.totalorder %v629, %v759
    %vm865 = vcmp.eq.s32.totalorder %v629, %v763
    %vm866 = vcmp.eq.s32.totalorder %v629, %v767
    %vm867 = vcmp.eq.s32.totalorder %v630, %v759
    %vm868 = vcmp.eq.s32.totalorder %v630, %v763
    %vm869 = vcmp.eq.s32.totalorder %v630, %v767
    %vm870 = vcmp.eq.s32.totalorder %v631, %v759
    %vm871 = vcmp.eq.s32.totalorder %v631, %v763
    %vm872 = vcmp.eq.s32.totalorder %v631, %v767
    %vm873 = vcmp.eq.s32.totalorder %v632, %v759
    %vm874 = vcmp.eq.s32.totalorder %v632, %v763
    %vm875 = vcmp.eq.s32.totalorder %v632, %v767
    %vm876 = vcmp.eq.s32.totalorder %v633, %v759
    %vm877 = vcmp.eq.s32.totalorder %v633, %v763
    %vm878 = vcmp.eq.s32.totalorder %v633, %v767
    %vm879 = vcmp.eq.s32.totalorder %v634, %v759
    %vm880 = vcmp.eq.s32.totalorder %v634, %v763
    %vm881 = vcmp.eq.s32.totalorder %v634, %v767
    %vm882 = vcmp.eq.s32.totalorder %v635, %v759
    %vm883 = vcmp.eq.s32.totalorder %v635, %v763
    %vm884 = vcmp.eq.s32.totalorder %v635, %v767
    %vm885 = vcmp.eq.s32.totalorder %v636, %v759
    %vm886 = vcmp.eq.s32.totalorder %v636, %v763
    %vm887 = vcmp.eq.s32.totalorder %v636, %v767
    %vm888 = vcmp.eq.s32.totalorder %v637, %v759
    %vm889 = vcmp.eq.s32.totalorder %v637, %v763
    %vm890 = vcmp.eq.s32.totalorder %v637, %v767
    %vm891 = vcmp.eq.s32.totalorder %v638, %v759
    %vm892 = vcmp.eq.s32.totalorder %v638, %v763
    %vm893 = vcmp.eq.s32.totalorder %v638, %v767
    %vm894 = vcmp.eq.s32.totalorder %v639, %v759
    %vm895 = vcmp.eq.s32.totalorder %v639, %v763
    %vm896 = vcmp.eq.s32.totalorder %v639, %v767
    %vm897 = vcmp.eq.s32.totalorder %v640, %v759
    %vm898 = vcmp.eq.s32.totalorder %v640, %v763
    %vm899 = vcmp.eq.s32.totalorder %v640, %v767
    %vm900 = vcmp.eq.s32.totalorder %v641, %v759
    %vm901 = vcmp.eq.s32.totalorder %v641, %v763
    %vm902 = vcmp.eq.s32.totalorder %v641, %v767
    %vm903 = vcmp.eq.s32.totalorder %v642, %v759
    %vm904 = vcmp.eq.s32.totalorder %v642, %v763
    %vm905 = vcmp.eq.s32.totalorder %v642, %v767
    %vm906 = vcmp.eq.s32.totalorder %v643, %v759
    %vm907 = vcmp.eq.s32.totalorder %v643, %v763
    %vm908 = vcmp.eq.s32.totalorder %v643, %v767
    %vm909 = vcmp.eq.s32.totalorder %v644, %v759
    %vm910 = vcmp.eq.s32.totalorder %v644, %v763
    %vm911 = vcmp.eq.s32.totalorder %v644, %v767
    %vm912 = vcmp.eq.s32.totalorder %v645, %v759
    %vm913 = vcmp.eq.s32.totalorder %v645, %v763
    %vm914 = vcmp.eq.s32.totalorder %v645, %v767
    %vm915 = vcmp.eq.s32.totalorder %v646, %v759
    %vm916 = vcmp.eq.s32.totalorder %v646, %v763
    %vm917 = vcmp.eq.s32.totalorder %v646, %v767
    %vm918 = vcmp.eq.s32.totalorder %v647, %v759
    %vm919 = vcmp.eq.s32.totalorder %v647, %v763
    %vm920 = vcmp.eq.s32.totalorder %v647, %v767
    %vm921 = vcmp.eq.s32.totalorder %v648, %v759
    %vm922 = vcmp.eq.s32.totalorder %v648, %v763
    %vm923 = vcmp.eq.s32.totalorder %v648, %v767
    %vm924 = vcmp.eq.s32.totalorder %v649, %v759
    %vm925 = vcmp.eq.s32.totalorder %v649, %v763
    %vm926 = vcmp.eq.s32.totalorder %v649, %v767
    %vm927 = vcmp.eq.s32.totalorder %v650, %v759
    %vm928 = vcmp.eq.s32.totalorder %v650, %v763
    %vm929 = vcmp.eq.s32.totalorder %v650, %v767
    %vm930 = vcmp.eq.s32.totalorder %v651, %v759
    %vm931 = vcmp.eq.s32.totalorder %v651, %v763
    %vm932 = vcmp.eq.s32.totalorder %v651, %v767
    %vm933 = vcmp.eq.s32.totalorder %v652, %v759
    %vm934 = vcmp.eq.s32.totalorder %v652, %v763
    %vm935 = vcmp.eq.s32.totalorder %v652, %v767
    %vm936 = vcmp.eq.s32.totalorder %v653, %v759
    %vm937 = vcmp.eq.s32.totalorder %v653, %v763
    %vm938 = vcmp.eq.s32.totalorder %v653, %v767
    %vm939 = vcmp.eq.s32.totalorder %v654, %v759
    %vm940 = vcmp.eq.s32.totalorder %v654, %v763
    %vm941 = vcmp.eq.s32.totalorder %v654, %v767
    %vm942 = vcmp.eq.s32.totalorder %v655, %v759
    %vm943 = vcmp.eq.s32.totalorder %v655, %v763
    %vm944 = vcmp.eq.s32.totalorder %v655, %v767
    %vm945 = vcmp.eq.s32.totalorder %v656, %v759
    %vm946 = vcmp.eq.s32.totalorder %v656, %v763
    %vm947 = vcmp.eq.s32.totalorder %v656, %v767
    %vm948 = vcmp.eq.s32.totalorder %v657, %v759
    %vm949 = vcmp.eq.s32.totalorder %v657, %v763
    %vm950 = vcmp.eq.s32.totalorder %v657, %v767
    %vm951 = vcmp.eq.s32.totalorder %v658, %v759
    %vm952 = vcmp.eq.s32.totalorder %v658, %v763
    %vm953 = vcmp.eq.s32.totalorder %v658, %v767
    %vm954 = vcmp.eq.s32.totalorder %v659, %v759
    %vm955 = vcmp.eq.s32.totalorder %v659, %v763
    %vm956 = vcmp.eq.s32.totalorder %v659, %v767
    %vm957 = vcmp.eq.s32.totalorder %v660, %v759
    %vm958 = vcmp.eq.s32.totalorder %v660, %v763
    %vm959 = vcmp.eq.s32.totalorder %v660, %v767
    %vm960 = vcmp.eq.s32.totalorder %v661, %v759
    %vm961 = vcmp.eq.s32.totalorder %v661, %v763
    %vm962 = vcmp.eq.s32.totalorder %v661, %v767
    %vm963 = vcmp.eq.s32.totalorder %v662, %v759
    %vm964 = vcmp.eq.s32.totalorder %v662, %v763
    %vm965 = vcmp.eq.s32.totalorder %v662, %v767
    %vm966 = vcmp.eq.s32.totalorder %v663, %v759
    %vm967 = vcmp.eq.s32.totalorder %v663, %v763
    %vm968 = vcmp.eq.s32.totalorder %v663, %v767
    %vm969 = vcmp.eq.s32.totalorder %v664, %v759
    %vm970 = vcmp.eq.s32.totalorder %v664, %v763
    %vm971 = vcmp.eq.s32.totalorder %v664, %v767
    %vm972 = vcmp.eq.s32.totalorder %v665, %v759
    %vm973 = vcmp.eq.s32.totalorder %v665, %v763
    %vm974 = vcmp.eq.s32.totalorder %v665, %v767
    %vm975 = vcmp.eq.s32.totalorder %v666, %v759
    %vm976 = vcmp.eq.s32.totalorder %v666, %v763
    %vm977 = vcmp.eq.s32.totalorder %v666, %v767
    %vm978 = vcmp.eq.s32.totalorder %v667, %v759
    %vm979 = vcmp.eq.s32.totalorder %v667, %v763
    %vm980 = vcmp.eq.s32.totalorder %v667, %v767
    %vm981 = vcmp.eq.s32.totalorder %v668, %v759
    %vm982 = vcmp.eq.s32.totalorder %v668, %v763
    %vm983 = vcmp.eq.s32.totalorder %v668, %v767
    %vm984 = vcmp.eq.s32.totalorder %v669, %v759
    %vm985 = vcmp.eq.s32.totalorder %v669, %v763
    %vm986 = vcmp.eq.s32.totalorder %v669, %v767
    %vm987 = vcmp.eq.s32.totalorder %v670, %v759
    %vm988 = vcmp.eq.s32.totalorder %v670, %v763
    %vm989 = vcmp.eq.s32.totalorder %v670, %v767
    %vm990 = vcmp.eq.s32.totalorder %v671, %v759
    %vm991 = vcmp.eq.s32.totalorder %v671, %v763
    %vm992 = vcmp.eq.s32.totalorder %v671, %v767
    %vm993 = vcmp.eq.s32.totalorder %v672, %v759
    %vm994 = vcmp.eq.s32.totalorder %v672, %v763
    %vm995 = vcmp.eq.s32.totalorder %v672, %v767
    %vm996 = vcmp.eq.s32.totalorder %v673, %v759
    %vm997 = vcmp.eq.s32.totalorder %v673, %v763
    %vm998 = vcmp.eq.s32.totalorder %v673, %v767
    %vm999 = vcmp.eq.s32.totalorder %v674, %v759
    %vm1000 = vcmp.eq.s32.totalorder %v674, %v763
    %vm1001 = vcmp.eq.s32.totalorder %v674, %v767
    %vm1002 = vcmp.eq.s32.totalorder %v675, %v759
    %vm1003 = vcmp.eq.s32.totalorder %v675, %v763
    %vm1004 = vcmp.eq.s32.totalorder %v675, %v767
    %vm1005 = vcmp.eq.s32.totalorder %v676, %v759
    %vm1006 = vcmp.eq.s32.totalorder %v676, %v763
    %vm1007 = vcmp.eq.s32.totalorder %v676, %v767
    %vm1008 = vcmp.eq.s32.totalorder %v677, %v759
    %vm1009 = vcmp.eq.s32.totalorder %v677, %v763
    %vm1010 = vcmp.eq.s32.totalorder %v677, %v767
    %vm1011 = vcmp.eq.s32.totalorder %v678, %v759
    %vm1012 = vcmp.eq.s32.totalorder %v678, %v763
    %vm1013 = vcmp.eq.s32.totalorder %v678, %v767
    %vm1014 = vcmp.eq.s32.totalorder %v679, %v759
    %vm1015 = vcmp.eq.s32.totalorder %v679, %v763
    %vm1016 = vcmp.eq.s32.totalorder %v679, %v767
    %vm1017 = vcmp.eq.s32.totalorder %v680, %v759
    %vm1018 = vcmp.eq.s32.totalorder %v680, %v763
    %vm1019 = vcmp.eq.s32.totalorder %v680, %v767
    %vm1020 = vcmp.eq.s32.totalorder %v681, %v759
    %vm1021 = vcmp.eq.s32.totalorder %v681, %v763
    %vm1022 = vcmp.eq.s32.totalorder %v681, %v767
    %vm1023 = vcmp.eq.s32.totalorder %v682, %v759
    %vm1024 = vcmp.eq.s32.totalorder %v682, %v763
    %vm1025 = vcmp.eq.s32.totalorder %v682, %v767
    %vm1026 = vcmp.eq.s32.totalorder %v683, %v759
    %vm1027 = vcmp.eq.s32.totalorder %v683, %v763
    %vm1028 = vcmp.eq.s32.totalorder %v683, %v767
    %vm1029 = vcmp.eq.s32.totalorder %v684, %v759
    %vm1030 = vcmp.eq.s32.totalorder %v684, %v763
    %vm1031 = vcmp.eq.s32.totalorder %v684, %v767
    %vm1032 = vcmp.eq.s32.totalorder %v685, %v759
    %vm1033 = vcmp.eq.s32.totalorder %v685, %v763
    %vm1034 = vcmp.eq.s32.totalorder %v685, %v767
    %vm1035 = vcmp.eq.s32.totalorder %v686, %v759
    %vm1036 = vcmp.eq.s32.totalorder %v686, %v763
    %vm1037 = vcmp.eq.s32.totalorder %v686, %v767
    %vm1038 = vcmp.eq.s32.totalorder %v687, %v759
    %vm1039 = vcmp.eq.s32.totalorder %v687, %v763
    %vm1040 = vcmp.eq.s32.totalorder %v687, %v767
    %vm1041 = vcmp.eq.s32.totalorder %v688, %v759
    %vm1042 = vcmp.eq.s32.totalorder %v688, %v763
    %vm1043 = vcmp.eq.s32.totalorder %v688, %v767
    %vm1044 = vcmp.eq.s32.totalorder %v689, %v759
    %vm1045 = vcmp.eq.s32.totalorder %v689, %v763
    %vm1046 = vcmp.eq.s32.totalorder %v689, %v767
    %vm1047 = vcmp.eq.s32.totalorder %v690, %v759
    %vm1048 = vcmp.eq.s32.totalorder %v690, %v763
    %vm1049 = vcmp.eq.s32.totalorder %v690, %v767
    %vm1050 = vcmp.eq.s32.totalorder %v691, %v759
    %vm1051 = vcmp.eq.s32.totalorder %v691, %v763
    %vm1052 = vcmp.eq.s32.totalorder %v691, %v767
    %vm1053 = vcmp.eq.s32.totalorder %v692, %v759
    %vm1054 = vcmp.eq.s32.totalorder %v692, %v763
    %vm1055 = vcmp.eq.s32.totalorder %v692, %v767
    %vm1056 = vcmp.eq.s32.totalorder %v693, %v759
    %vm1057 = vcmp.eq.s32.totalorder %v693, %v763
    %vm1058 = vcmp.eq.s32.totalorder %v693, %v767
    %vm1059 = vcmp.eq.s32.totalorder %v694, %v759
    %vm1060 = vcmp.eq.s32.totalorder %v694, %v763
    %vm1061 = vcmp.eq.s32.totalorder %v694, %v767
    %vm1062 = vcmp.eq.s32.totalorder %v695, %v759
    %vm1063 = vcmp.eq.s32.totalorder %v695, %v763
    %vm1064 = vcmp.eq.s32.totalorder %v695, %v767
    %vm1065 = vcmp.eq.s32.totalorder %v696, %v759
    %vm1066 = vcmp.eq.s32.totalorder %v696, %v763
    %vm1067 = vcmp.eq.s32.totalorder %v696, %v767
    %vm1068 = vcmp.eq.s32.totalorder %v697, %v759
    %vm1069 = vcmp.eq.s32.totalorder %v697, %v763
    %vm1070 = vcmp.eq.s32.totalorder %v697, %v767
    %vm1071 = vcmp.eq.s32.totalorder %v698, %v759
    %vm1072 = vcmp.eq.s32.totalorder %v698, %v763
    %vm1073 = vcmp.eq.s32.totalorder %v698, %v767
    %vm1074 = vcmp.eq.s32.totalorder %v699, %v759
    %vm1075 = vcmp.eq.s32.totalorder %v699, %v763
    %vm1076 = vcmp.eq.s32.totalorder %v699, %v767
    %vm1077 = vcmp.eq.s32.totalorder %v700, %v759
    %vm1078 = vcmp.eq.s32.totalorder %v700, %v763
    %vm1079 = vcmp.eq.s32.totalorder %v700, %v767
    %vm1080 = vcmp.eq.s32.totalorder %v701, %v759
    %vm1081 = vcmp.eq.s32.totalorder %v701, %v763
    %vm1082 = vcmp.eq.s32.totalorder %v701, %v767
    %vm1083 = vcmp.eq.s32.totalorder %v702, %v759
    %vm1084 = vcmp.eq.s32.totalorder %v702, %v763
    %vm1085 = vcmp.eq.s32.totalorder %v702, %v767
    %vm1086 = vcmp.eq.s32.totalorder %v703, %v759
    %vm1087 = vcmp.eq.s32.totalorder %v703, %v763
    %vm1088 = vcmp.eq.s32.totalorder %v703, %v767
    %vm1089 = vcmp.eq.s32.totalorder %v704, %v759
    %vm1090 = vcmp.eq.s32.totalorder %v704, %v763
    %vm1091 = vcmp.eq.s32.totalorder %v704, %v767
    %vm1092 = vcmp.eq.s32.totalorder %v705, %v759
    %vm1093 = vcmp.eq.s32.totalorder %v705, %v763
    %vm1094 = vcmp.eq.s32.totalorder %v705, %v767
    %vm1095 = vcmp.eq.s32.totalorder %v706, %v759
    %vm1096 = vcmp.eq.s32.totalorder %v706, %v763
    %vm1097 = vcmp.eq.s32.totalorder %v706, %v767
    %vm1098 = vcmp.eq.s32.totalorder %v707, %v759
    %vm1099 = vcmp.eq.s32.totalorder %v707, %v763
    %vm1100 = vcmp.eq.s32.totalorder %v707, %v767
    %vm1101 = vcmp.eq.s32.totalorder %v708, %v759
    %vm1102 = vcmp.eq.s32.totalorder %v708, %v763
    %vm1103 = vcmp.eq.s32.totalorder %v708, %v767
    %vm1104 = vcmp.eq.s32.totalorder %v709, %v759
    %vm1105 = vcmp.eq.s32.totalorder %v709, %v763
    %vm1106 = vcmp.eq.s32.totalorder %v709, %v767
    %vm1107 = vcmp.eq.s32.totalorder %v710, %v759
    %vm1108 = vcmp.eq.s32.totalorder %v710, %v763
    %vm1109 = vcmp.eq.s32.totalorder %v710, %v767
    %vm1110 = vcmp.eq.s32.totalorder %v711, %v759
    %vm1111 = vcmp.eq.s32.totalorder %v711, %v763
    %vm1112 = vcmp.eq.s32.totalorder %v711, %v767
    %vm1113 = vcmp.eq.s32.totalorder %v712, %v759
    %vm1114 = vcmp.eq.s32.totalorder %v712, %v763
    %vm1115 = vcmp.eq.s32.totalorder %v712, %v767
    %vm1116 = vcmp.eq.s32.totalorder %v713, %v759
    %vm1117 = vcmp.eq.s32.totalorder %v713, %v763
    %vm1118 = vcmp.eq.s32.totalorder %v713, %v767
    %vm1119 = vcmp.eq.s32.totalorder %v714, %v759
    %vm1120 = vcmp.eq.s32.totalorder %v714, %v763
    %vm1121 = vcmp.eq.s32.totalorder %v714, %v767
    %vm1122 = vcmp.eq.s32.totalorder %v715, %v759
    %vm1123 = vcmp.eq.s32.totalorder %v715, %v763
    %vm1124 = vcmp.eq.s32.totalorder %v715, %v767
    %vm1125 = vcmp.eq.s32.totalorder %v716, %v759
    %vm1126 = vcmp.eq.s32.totalorder %v716, %v763
    %vm1127 = vcmp.eq.s32.totalorder %v716, %v767
    %vm1128 = vcmp.eq.s32.totalorder %v717, %v759
    %vm1129 = vcmp.eq.s32.totalorder %v717, %v763
    %vm1130 = vcmp.eq.s32.totalorder %v717, %v767
    %vm1131 = vcmp.eq.s32.totalorder %v718, %v759
    %vm1132 = vcmp.eq.s32.totalorder %v718, %v763
    %vm1133 = vcmp.eq.s32.totalorder %v718, %v767
    %vm1134 = vcmp.eq.s32.totalorder %v719, %v759
    %vm1135 = vcmp.eq.s32.totalorder %v719, %v763
    %vm1136 = vcmp.eq.s32.totalorder %v719, %v767
    %vm1137 = vcmp.eq.s32.totalorder %v720, %v759
    %vm1138 = vcmp.eq.s32.totalorder %v720, %v763
    %vm1139 = vcmp.eq.s32.totalorder %v720, %v767
    %vm1140 = vcmp.eq.s32.totalorder %v721, %v759
    %vm1141 = vcmp.eq.s32.totalorder %v721, %v763
    %vm1142 = vcmp.eq.s32.totalorder %v721, %v767
    %vm1143 = vcmp.eq.s32.totalorder %v722, %v759
    %vm1144 = vcmp.eq.s32.totalorder %v722, %v763
    %vm1145 = vcmp.eq.s32.totalorder %v722, %v767
    %vm1146 = vcmp.eq.s32.totalorder %v723, %v759
    %vm1147 = vcmp.eq.s32.totalorder %v723, %v763
    %vm1148 = vcmp.eq.s32.totalorder %v723, %v767
    %vm1149 = vcmp.eq.s32.totalorder %v724, %v759
    %vm1150 = vcmp.eq.s32.totalorder %v724, %v763
    %vm1151 = vcmp.eq.s32.totalorder %v724, %v767
    %vm1152 = vcmp.eq.s32.totalorder %v725, %v759
    %vm1153 = vcmp.eq.s32.totalorder %v725, %v763
    %vm1154 = vcmp.eq.s32.totalorder %v725, %v767
    %vm1155 = vcmp.eq.s32.totalorder %v726, %v759
    %vm1156 = vcmp.eq.s32.totalorder %v726, %v763
    %vm1157 = vcmp.eq.s32.totalorder %v726, %v767
    %vm1158 = vcmp.eq.s32.totalorder %v727, %v759
    %vm1159 = vcmp.eq.s32.totalorder %v727, %v763
    %vm1160 = vcmp.eq.s32.totalorder %v727, %v767
    %vm1161 = vcmp.eq.s32.totalorder %v728, %v759
    %vm1162 = vcmp.eq.s32.totalorder %v728, %v763
    %vm1163 = vcmp.eq.s32.totalorder %v728, %v767
    %vm1164 = vcmp.eq.s32.totalorder %v729, %v759
    %vm1165 = vcmp.eq.s32.totalorder %v729, %v763
    %vm1166 = vcmp.eq.s32.totalorder %v729, %v767
    %vm1167 = vcmp.eq.s32.totalorder %v730, %v759
    %vm1168 = vcmp.eq.s32.totalorder %v730, %v763
    %vm1169 = vcmp.eq.s32.totalorder %v730, %v767
    %vm1170 = vcmp.eq.s32.totalorder %v731, %v759
    %vm1171 = vcmp.eq.s32.totalorder %v731, %v763
    %vm1172 = vcmp.eq.s32.totalorder %v731, %v767
    %vm1173 = vcmp.eq.s32.totalorder %v732, %v759
    %vm1174 = vcmp.eq.s32.totalorder %v732, %v763
    %vm1175 = vcmp.eq.s32.totalorder %v732, %v767
    %vm1176 = vcmp.eq.s32.totalorder %v733, %v759
    %vm1177 = vcmp.eq.s32.totalorder %v733, %v763
    %vm1178 = vcmp.eq.s32.totalorder %v733, %v767
    %vm1179 = vcmp.eq.s32.totalorder %v734, %v759
    %vm1180 = vcmp.eq.s32.totalorder %v734, %v763
    %vm1181 = vcmp.eq.s32.totalorder %v734, %v767
    %vm1182 = vcmp.eq.s32.totalorder %v735, %v759
    %vm1183 = vcmp.eq.s32.totalorder %v735, %v763
    %vm1184 = vcmp.eq.s32.totalorder %v735, %v767
    %vm1185 = vcmp.eq.s32.totalorder %v736, %v759
    %vm1186 = vcmp.eq.s32.totalorder %v736, %v763
    %vm1187 = vcmp.eq.s32.totalorder %v736, %v767
    %vm1188 = vcmp.eq.s32.totalorder %v737, %v759
    %vm1189 = vcmp.eq.s32.totalorder %v737, %v763
    %vm1190 = vcmp.eq.s32.totalorder %v737, %v767
    %vm1191 = vcmp.eq.s32.totalorder %v738, %v759
    %vm1192 = vcmp.eq.s32.totalorder %v738, %v763
    %vm1193 = vcmp.eq.s32.totalorder %v738, %v767
    %vm1194 = vcmp.eq.s32.totalorder %v739, %v759
    %vm1195 = vcmp.eq.s32.totalorder %v739, %v763
    %vm1196 = vcmp.eq.s32.totalorder %v739, %v767
    %vm1197 = vcmp.eq.s32.totalorder %v740, %v759
    %vm1198 = vcmp.eq.s32.totalorder %v740, %v763
    %vm1199 = vcmp.eq.s32.totalorder %v740, %v767
    %v1200 = vsel %vm768, 1.0, 0.0
    %v1201 = vsel %vm769, 1.0, 0.0
    %v1202 = vsel %vm770, 1.0, 0.0
    %v1203 = vsel %vm771, 1.0, 0.0
    %v1204 = vsel %vm772, 1.0, 0.0
    %v1205 = vsel %vm773, 1.0, 0.0
    %v1206 = vsel %vm774, 1.0, 0.0
    %v1207 = vsel %vm775, 1.0, 0.0
    %v1208 = vsel %vm776, 1.0, 0.0
    %v1209 = vsel %vm777, 1.0, 0.0
    %v1210 = vsel %vm778, 1.0, 0.0
    %v1211 = vsel %vm779, 1.0, 0.0
    %v1212 = vsel %vm780, 1.0, 0.0
    %v1213 = vsel %vm781, 1.0, 0.0
    %v1214 = vsel %vm782, 1.0, 0.0
    %v1215 = vsel %vm783, 1.0, 0.0
    %v1216 = vsel %vm784, 1.0, 0.0
    %v1217 = vsel %vm785, 1.0, 0.0
    %v1218 = vsel %vm786, 1.0, 0.0
    %v1219 = vsel %vm787, 1.0, 0.0
    %v1220 = vsel %vm788, 1.0, 0.0
    %v1221 = vsel %vm789, 1.0, 0.0
    %v1222 = vsel %vm790, 1.0, 0.0
    %v1223 = vsel %vm791, 1.0, 0.0
    %v1224 = vsel %vm792, 1.0, 0.0
    %v1225 = vsel %vm793, 1.0, 0.0
    %v1226 = vsel %vm794, 1.0, 0.0
    %v1227 = vsel %vm795, 1.0, 0.0
    %v1228 = vsel %vm796, 1.0, 0.0
    %v1229 = vsel %vm797, 1.0, 0.0
    %v1230 = vsel %vm798, 1.0, 0.0
    %v1231 = vsel %vm799, 1.0, 0.0
    %v1232 = vsel %vm800, 1.0, 0.0
    %v1233 = vsel %vm801, 1.0, 0.0
    %v1234 = vsel %vm802, 1.0, 0.0
    %v1235 = vsel %vm803, 1.0, 0.0
    %v1236 = vsel %vm804, 1.0, 0.0
    %v1237 = vsel %vm805, 1.0, 0.0
    %v1238 = vsel %vm806, 1.0, 0.0
    %v1239 = vsel %vm807, 1.0, 0.0
    %v1240 = vsel %vm808, 1.0, 0.0
    %v1241 = vsel %vm809, 1.0, 0.0
    %v1242 = vsel %vm810, 1.0, 0.0
    %v1243 = vsel %vm811, 1.0, 0.0
    %v1244 = vsel %vm812, 1.0, 0.0
    %v1245 = vsel %vm813, 1.0, 0.0
    %v1246 = vsel %vm814, 1.0, 0.0
    %v1247 = vsel %vm815, 1.0, 0.0
    %v1248 = vsel %vm816, 1.0, 0.0
    %v1249 = vsel %vm817, 1.0, 0.0
    %v1250 = vsel %vm818, 1.0, 0.0
    %v1251 = vsel %vm819, 1.0, 0.0
    %v1252 = vsel %vm820, 1.0, 0.0
    %v1253 = vsel %vm821, 1.0, 0.0
    %v1254 = vsel %vm822, 1.0, 0.0
    %v1255 = vsel %vm823, 1.0, 0.0
    %v1256 = vsel %vm824, 1.0, 0.0
    %v1257 = vsel %vm825, 1.0, 0.0
    %v1258 = vsel %vm826, 1.0, 0.0
    %v1259 = vsel %vm827, 1.0, 0.0
    %v1260 = vsel %vm828, 1.0, 0.0
    %v1261 = vsel %vm829, 1.0, 0.0
    %v1262 = vsel %vm830, 1.0, 0.0
    %v1263 = vsel %vm831, 1.0, 0.0
    %v1264 = vsel %vm832, 1.0, 0.0
    %v1265 = vsel %vm833, 1.0, 0.0
    %v1266 = vsel %vm834, 1.0, 0.0
    %v1267 = vsel %vm835, 1.0, 0.0
    %v1268 = vsel %vm836, 1.0, 0.0
    %v1269 = vsel %vm837, 1.0, 0.0
    %v1270 = vsel %vm838, 1.0, 0.0
    %v1271 = vsel %vm839, 1.0, 0.0
    %v1272 = vsel %vm840, 1.0, 0.0
    %v1273 = vsel %vm841, 1.0, 0.0
    %v1274 = vsel %vm842, 1.0, 0.0
    %v1275 = vsel %vm843, 1.0, 0.0
    %v1276 = vsel %vm844, 1.0, 0.0
    %v1277 = vsel %vm845, 1.0, 0.0
    %v1278 = vsel %vm846, 1.0, 0.0
    %v1279 = vsel %vm847, 1.0, 0.0
    %v1280 = vsel %vm848, 1.0, 0.0
    %v1281 = vsel %vm849, 1.0, 0.0
    %v1282 = vsel %vm850, 1.0, 0.0
    %v1283 = vsel %vm851, 1.0, 0.0
    %v1284 = vsel %vm852, 1.0, 0.0
    %v1285 = vsel %vm853, 1.0, 0.0
    %v1286 = vsel %vm854, 1.0, 0.0
    %v1287 = vsel %vm855, 1.0, 0.0
    %v1288 = vsel %vm856, 1.0, 0.0
    %v1289 = vsel %vm857, 1.0, 0.0
    %v1290 = vsel %vm858, 1.0, 0.0
    %v1291 = vsel %vm859, 1.0, 0.0
    %v1292 = vsel %vm860, 1.0, 0.0
    %v1293 = vsel %vm861, 1.0, 0.0
    %v1294 = vsel %vm862, 1.0, 0.0
    %v1295 = vsel %vm863, 1.0, 0.0
    %v1296 = vsel %vm864, 1.0, 0.0
    %v1297 = vsel %vm865, 1.0, 0.0
    %v1298 = vsel %vm866, 1.0, 0.0
    %v1299 = vsel %vm867, 1.0, 0.0
    %v1300 = vsel %vm868, 1.0, 0.0
    %v1301 = vsel %vm869, 1.0, 0.0
    %v1302 = vsel %vm870, 1.0, 0.0
    %v1303 = vsel %vm871, 1.0, 0.0
    %v1304 = vsel %vm872, 1.0, 0.0
    %v1305 = vsel %vm873, 1.0, 0.0
    %v1306 = vsel %vm874, 1.0, 0.0
    %v1307 = vsel %vm875, 1.0, 0.0
    %v1308 = vsel %vm876, 1.0, 0.0
    %v1309 = vsel %vm877, 1.0, 0.0
    %v1310 = vsel %vm878, 1.0, 0.0
    %v1311 = vsel %vm879, 1.0, 0.0
    %v1312 = vsel %vm880, 1.0, 0.0
    %v1313 = vsel %vm881, 1.0, 0.0
    %v1314 = vsel %vm882, 1.0, 0.0
    %v1315 = vsel %vm883, 1.0, 0.0
    %v1316 = vsel %vm884, 1.0, 0.0
    %v1317 = vsel %vm885, 1.0, 0.0
    %v1318 = vsel %vm886, 1.0, 0.0
    %v1319 = vsel %vm887, 1.0, 0.0
    %v1320 = vsel %vm888, 1.0, 0.0
    %v1321 = vsel %vm889, 1.0, 0.0
    %v1322 = vsel %vm890, 1.0, 0.0
    %v1323 = vsel %vm891, 1.0, 0.0
    %v1324 = vsel %vm892, 1.0, 0.0
    %v1325 = vsel %vm893, 1.0, 0.0
    %v1326 = vsel %vm894, 1.0, 0.0
    %v1327 = vsel %vm895, 1.0, 0.0
    %v1328 = vsel %vm896, 1.0, 0.0
    %v1329 = vsel %vm897, 1.0, 0.0
    %v1330 = vsel %vm898, 1.0, 0.0
    %v1331 = vsel %vm899, 1.0, 0.0
    %v1332 = vsel %vm900, 1.0, 0.0
    %v1333 = vsel %vm901, 1.0, 0.0
    %v1334 = vsel %vm902, 1.0, 0.0
    %v1335 = vsel %vm903, 1.0, 0.0
    %v1336 = vsel %vm904, 1.0, 0.0
    %v1337 = vsel %vm905, 1.0, 0.0
    %v1338 = vsel %vm906, 1.0, 0.0
    %v1339 = vsel %vm907, 1.0, 0.0
    %v1340 = vsel %vm908, 1.0, 0.0
    %v1341 = vsel %vm909, 1.0, 0.0
    %v1342 = vsel %vm910, 1.0, 0.0
    %v1343 = vsel %vm911, 1.0, 0.0
    %v1344 = vsel %vm912, 1.0, 0.0
    %v1345 = vsel %vm913, 1.0, 0.0
    %v1346 = vsel %vm914, 1.0, 0.0
    %v1347 = vsel %vm915, 1.0, 0.0
    %v1348 = vsel %vm916, 1.0, 0.0
    %v1349 = vsel %vm917, 1.0, 0.0
    %v1350 = vsel %vm918, 1.0, 0.0
    %v1351 = vsel %vm919, 1.0, 0.0
    %v1352 = vsel %vm920, 1.0, 0.0
    %v1353 = vsel %vm921, 1.0, 0.0
    %v1354 = vsel %vm922, 1.0, 0.0
    %v1355 = vsel %vm923, 1.0, 0.0
    %v1356 = vsel %vm924, 1.0, 0.0
    %v1357 = vsel %vm925, 1.0, 0.0
    %v1358 = vsel %vm926, 1.0, 0.0
    %v1359 = vsel %vm927, 1.0, 0.0
    %v1360 = vsel %vm928, 1.0, 0.0
    %v1361 = vsel %vm929, 1.0, 0.0
    %v1362 = vsel %vm930, 1.0, 0.0
    %v1363 = vsel %vm931, 1.0, 0.0
    %v1364 = vsel %vm932, 1.0, 0.0
    %v1365 = vsel %vm933, 1.0, 0.0
    %v1366 = vsel %vm934, 1.0, 0.0
    %v1367 = vsel %vm935, 1.0, 0.0
    %v1368 = vsel %vm936, 1.0, 0.0
    %v1369 = vsel %vm937, 1.0, 0.0
    %v1370 = vsel %vm938, 1.0, 0.0
    %v1371 = vsel %vm939, 1.0, 0.0
    %v1372 = vsel %vm940, 1.0, 0.0
    %v1373 = vsel %vm941, 1.0, 0.0
    %v1374 = vsel %vm942, 1.0, 0.0
    %v1375 = vsel %vm943, 1.0, 0.0
    %v1376 = vsel %vm944, 1.0, 0.0
    %v1377 = vsel %vm945, 1.0, 0.0
    %v1378 = vsel %vm946, 1.0, 0.0
    %v1379 = vsel %vm947, 1.0, 0.0
    %v1380 = vsel %vm948, 1.0, 0.0
    %v1381 = vsel %vm949, 1.0, 0.0
    %v1382 = vsel %vm950, 1.0, 0.0
    %v1383 = vsel %vm951, 1.0, 0.0
    %v1384 = vsel %vm952, 1.0, 0.0
    %v1385 = vsel %vm953, 1.0, 0.0
    %v1386 = vsel %vm954, 1.0, 0.0
    %v1387 = vsel %vm955, 1.0, 0.0
    %v1388 = vsel %vm956, 1.0, 0.0
    %v1389 = vsel %vm957, 1.0, 0.0
    %v1390 = vsel %vm958, 1.0, 0.0
    %v1391 = vsel %vm959, 1.0, 0.0
    %v1392 = vsel %vm960, 1.0, 0.0
    %v1393 = vsel %vm961, 1.0, 0.0
    %v1394 = vsel %vm962, 1.0, 0.0
    %v1395 = vsel %vm963, 1.0, 0.0
    %v1396 = vsel %vm964, 1.0, 0.0
    %v1397 = vsel %vm965, 1.0, 0.0
    %v1398 = vsel %vm966, 1.0, 0.0
    %v1399 = vsel %vm967, 1.0, 0.0
    %v1400 = vsel %vm968, 1.0, 0.0
    %v1401 = vsel %vm969, 1.0, 0.0
    %v1402 = vsel %vm970, 1.0, 0.0
    %v1403 = vsel %vm971, 1.0, 0.0
    %v1404 = vsel %vm972, 1.0, 0.0
    %v1405 = vsel %vm973, 1.0, 0.0
    %v1406 = vsel %vm974, 1.0, 0.0
    %v1407 = vsel %vm975, 1.0, 0.0
    %v1408 = vsel %vm976, 1.0, 0.0
    %v1409 = vsel %vm977, 1.0, 0.0
    %v1410 = vsel %vm978, 1.0, 0.0
    %v1411 = vsel %vm979, 1.0, 0.0
    %v1412 = vsel %vm980, 1.0, 0.0
    %v1413 = vsel %vm981, 1.0, 0.0
    %v1414 = vsel %vm982, 1.0, 0.0
    %v1415 = vsel %vm983, 1.0, 0.0
    %v1416 = vsel %vm984, 1.0, 0.0
    %v1417 = vsel %vm985, 1.0, 0.0
    %v1418 = vsel %vm986, 1.0, 0.0
    %v1419 = vsel %vm987, 1.0, 0.0
    %v1420 = vsel %vm988, 1.0, 0.0
    %v1421 = vsel %vm989, 1.0, 0.0
    %v1422 = vsel %vm990, 1.0, 0.0
    %v1423 = vsel %vm991, 1.0, 0.0
    %v1424 = vsel %vm992, 1.0, 0.0
    %v1425 = vsel %vm993, 1.0, 0.0
    %v1426 = vsel %vm994, 1.0, 0.0
    %v1427 = vsel %vm995, 1.0, 0.0
    %v1428 = vsel %vm996, 1.0, 0.0
    %v1429 = vsel %vm997, 1.0, 0.0
    %v1430 = vsel %vm998, 1.0, 0.0
    %v1431 = vsel %vm999, 1.0, 0.0
    %v1432 = vsel %vm1000, 1.0, 0.0
    %v1433 = vsel %vm1001, 1.0, 0.0
    %v1434 = vsel %vm1002, 1.0, 0.0
    %v1435 = vsel %vm1003, 1.0, 0.0
    %v1436 = vsel %vm1004, 1.0, 0.0
    %v1437 = vsel %vm1005, 1.0, 0.0
    %v1438 = vsel %vm1006, 1.0, 0.0
    %v1439 = vsel %vm1007, 1.0, 0.0
    %v1440 = vsel %vm1008, 1.0, 0.0
    %v1441 = vsel %vm1009, 1.0, 0.0
    %v1442 = vsel %vm1010, 1.0, 0.0
    %v1443 = vsel %vm1011, 1.0, 0.0
    %v1444 = vsel %vm1012, 1.0, 0.0
    %v1445 = vsel %vm1013, 1.0, 0.0
    %v1446 = vsel %vm1014, 1.0, 0.0
    %v1447 = vsel %vm1015, 1.0, 0.0
    %v1448 = vsel %vm1016, 1.0, 0.0
    %v1449 = vsel %vm1017, 1.0, 0.0
    %v1450 = vsel %vm1018, 1.0, 0.0
    %v1451 = vsel %vm1019, 1.0, 0.0
    %v1452 = vsel %vm1020, 1.0, 0.0
    %v1453 = vsel %vm1021, 1.0, 0.0
    %v1454 = vsel %vm1022, 1.0, 0.0
    %v1455 = vsel %vm1023, 1.0, 0.0
    %v1456 = vsel %vm1024, 1.0, 0.0
    %v1457 = vsel %vm1025, 1.0, 0.0
    %v1458 = vsel %vm1026, 1.0, 0.0
    %v1459 = vsel %vm1027, 1.0, 0.0
    %v1460 = vsel %vm1028, 1.0, 0.0
    %v1461 = vsel %vm1029, 1.0, 0.0
    %v1462 = vsel %vm1030, 1.0, 0.0
    %v1463 = vsel %vm1031, 1.0, 0.0
    %v1464 = vsel %vm1032, 1.0, 0.0
    %v1465 = vsel %vm1033, 1.0, 0.0
    %v1466 = vsel %vm1034, 1.0, 0.0
    %v1467 = vsel %vm1035, 1.0, 0.0
    %v1468 = vsel %vm1036, 1.0, 0.0
    %v1469 = vsel %vm1037, 1.0, 0.0
    %v1470 = vsel %vm1038, 1.0, 0.0
    %v1471 = vsel %vm1039, 1.0, 0.0
    %v1472 = vsel %vm1040, 1.0, 0.0
    %v1473 = vsel %vm1041, 1.0, 0.0
    %v1474 = vsel %vm1042, 1.0, 0.0
    %v1475 = vsel %vm1043, 1.0, 0.0
    %v1476 = vsel %vm1044, 1.0, 0.0
    %v1477 = vsel %vm1045, 1.0, 0.0
    %v1478 = vsel %vm1046, 1.0, 0.0
    %v1479 = vsel %vm1047, 1.0, 0.0
    %v1480 = vsel %vm1048, 1.0, 0.0
    %v1481 = vsel %vm1049, 1.0, 0.0
    %v1482 = vsel %vm1050, 1.0, 0.0
    %v1483 = vsel %vm1051, 1.0, 0.0
    %v1484 = vsel %vm1052, 1.0, 0.0
    %v1485 = vsel %vm1053, 1.0, 0.0
    %v1486 = vsel %vm1054, 1.0, 0.0
    %v1487 = vsel %vm1055, 1.0, 0.0
    %v1488 = vsel %vm1056, 1.0, 0.0
    %v1489 = vsel %vm1057, 1.0, 0.0
    %v1490 = vsel %vm1058, 1.0, 0.0
    %v1491 = vsel %vm1059, 1.0, 0.0
    %v1492 = vsel %vm1060, 1.0, 0.0
    %v1493 = vsel %vm1061, 1.0, 0.0
    %v1494 = vsel %vm1062, 1.0, 0.0
    %v1495 = vsel %vm1063, 1.0, 0.0
    %v1496 = vsel %vm1064, 1.0, 0.0
    %v1497 = vsel %vm1065, 1.0, 0.0
    %v1498 = vsel %vm1066, 1.0, 0.0
    %v1499 = vsel %vm1067, 1.0, 0.0
    %v1500 = vsel %vm1068, 1.0, 0.0
    %v1501 = vsel %vm1069, 1.0, 0.0
    %v1502 = vsel %vm1070, 1.0, 0.0
    %v1503 = vsel %vm1071, 1.0, 0.0
    %v1504 = vsel %vm1072, 1.0, 0.0
    %v1505 = vsel %vm1073, 1.0, 0.0
    %v1506 = vsel %vm1074, 1.0, 0.0
    %v1507 = vsel %vm1075, 1.0, 0.0
    %v1508 = vsel %vm1076, 1.0, 0.0
    %v1509 = vsel %vm1077, 1.0, 0.0
    %v1510 = vsel %vm1078, 1.0, 0.0
    %v1511 = vsel %vm1079, 1.0, 0.0
    %v1512 = vsel %vm1080, 1.0, 0.0
    %v1513 = vsel %vm1081, 1.0, 0.0
    %v1514 = vsel %vm1082, 1.0, 0.0
    %v1515 = vsel %vm1083, 1.0, 0.0
    %v1516 = vsel %vm1084, 1.0, 0.0
    %v1517 = vsel %vm1085, 1.0, 0.0
    %v1518 = vsel %vm1086, 1.0, 0.0
    %v1519 = vsel %vm1087, 1.0, 0.0
    %v1520 = vsel %vm1088, 1.0, 0.0
    %v1521 = vsel %vm1089, 1.0, 0.0
    %v1522 = vsel %vm1090, 1.0, 0.0
    %v1523 = vsel %vm1091, 1.0, 0.0
    %v1524 = vsel %vm1092, 1.0, 0.0
    %v1525 = vsel %vm1093, 1.0, 0.0
    %v1526 = vsel %vm1094, 1.0, 0.0
    %v1527 = vsel %vm1095, 1.0, 0.0
    %v1528 = vsel %vm1096, 1.0, 0.0
    %v1529 = vsel %vm1097, 1.0, 0.0
    %v1530 = vsel %vm1098, 1.0, 0.0
    %v1531 = vsel %vm1099, 1.0, 0.0
    %v1532 = vsel %vm1100, 1.0, 0.0
    %v1533 = vsel %vm1101, 1.0, 0.0
    %v1534 = vsel %vm1102, 1.0, 0.0
    %v1535 = vsel %vm1103, 1.0, 0.0
    %v1536 = vsel %vm1104, 1.0, 0.0
    %v1537 = vsel %vm1105, 1.0, 0.0
    %v1538 = vsel %vm1106, 1.0, 0.0
    %v1539 = vsel %vm1107, 1.0, 0.0
    %v1540 = vsel %vm1108, 1.0, 0.0
    %v1541 = vsel %vm1109, 1.0, 0.0
    %v1542 = vsel %vm1110, 1.0, 0.0
    %v1543 = vsel %vm1111, 1.0, 0.0
    %v1544 = vsel %vm1112, 1.0, 0.0
    %v1545 = vsel %vm1113, 1.0, 0.0
    %v1546 = vsel %vm1114, 1.0, 0.0
    %v1547 = vsel %vm1115, 1.0, 0.0
    %v1548 = vsel %vm1116, 1.0, 0.0
    %v1549 = vsel %vm1117, 1.0, 0.0
    %v1550 = vsel %vm1118, 1.0, 0.0
    %v1551 = vsel %vm1119, 1.0, 0.0
    %v1552 = vsel %vm1120, 1.0, 0.0
    %v1553 = vsel %vm1121, 1.0, 0.0
    %v1554 = vsel %vm1122, 1.0, 0.0
    %v1555 = vsel %vm1123, 1.0, 0.0
    %v1556 = vsel %vm1124, 1.0, 0.0
    %v1557 = vsel %vm1125, 1.0, 0.0
    %v1558 = vsel %vm1126, 1.0, 0.0
    %v1559 = vsel %vm1127, 1.0, 0.0
    %v1560 = vsel %vm1128, 1.0, 0.0
    %v1561 = vsel %vm1129, 1.0, 0.0
    %v1562 = vsel %vm1130, 1.0, 0.0
    %v1563 = vsel %vm1131, 1.0, 0.0
    %v1564 = vsel %vm1132, 1.0, 0.0
    %v1565 = vsel %vm1133, 1.0, 0.0
    %v1566 = vsel %vm1134, 1.0, 0.0
    %v1567 = vsel %vm1135, 1.0, 0.0
    %v1568 = vsel %vm1136, 1.0, 0.0
    %v1569 = vsel %vm1137, 1.0, 0.0
    %v1570 = vsel %vm1138, 1.0, 0.0
    %v1571 = vsel %vm1139, 1.0, 0.0
    %v1572 = vsel %vm1140, 1.0, 0.0
    %v1573 = vsel %vm1141, 1.0, 0.0
    %v1574 = vsel %vm1142, 1.0, 0.0
    %v1575 = vsel %vm1143, 1.0, 0.0
    %v1576 = vsel %vm1144, 1.0, 0.0
    %v1577 = vsel %vm1145, 1.0, 0.0
    %v1578 = vsel %vm1146, 1.0, 0.0
    %v1579 = vsel %vm1147, 1.0, 0.0
    %v1580 = vsel %vm1148, 1.0, 0.0
    %v1581 = vsel %vm1149, 1.0, 0.0
    %v1582 = vsel %vm1150, 1.0, 0.0
    %v1583 = vsel %vm1151, 1.0, 0.0
    %v1584 = vsel %vm1152, 1.0, 0.0
    %v1585 = vsel %vm1153, 1.0, 0.0
    %v1586 = vsel %vm1154, 1.0, 0.0
    %v1587 = vsel %vm1155, 1.0, 0.0
    %v1588 = vsel %vm1156, 1.0, 0.0
    %v1589 = vsel %vm1157, 1.0, 0.0
    %v1590 = vsel %vm1158, 1.0, 0.0
    %v1591 = vsel %vm1159, 1.0, 0.0
    %v1592 = vsel %vm1160, 1.0, 0.0
    %v1593 = vsel %vm1161, 1.0, 0.0
    %v1594 = vsel %vm1162, 1.0, 0.0
    %v1595 = vsel %vm1163, 1.0, 0.0
    %v1596 = vsel %vm1164, 1.0, 0.0
    %v1597 = vsel %vm1165, 1.0, 0.0
    %v1598 = vsel %vm1166, 1.0, 0.0
    %v1599 = vsel %vm1167, 1.0, 0.0
    %v1600 = vsel %vm1168, 1.0, 0.0
    %v1601 = vsel %vm1169, 1.0, 0.0
    %v1602 = vsel %vm1170, 1.0, 0.0
    %v1603 = vsel %vm1171, 1.0, 0.0
    %v1604 = vsel %vm1172, 1.0, 0.0
    %v1605 = vsel %vm1173, 1.0, 0.0
    %v1606 = vsel %vm1174, 1.0, 0.0
    %v1607 = vsel %vm1175, 1.0, 0.0
    %v1608 = vsel %vm1176, 1.0, 0.0
    %v1609 = vsel %vm1177, 1.0, 0.0
    %v1610 = vsel %vm1178, 1.0, 0.0
    %v1611 = vsel %vm1179, 1.0, 0.0
    %v1612 = vsel %vm1180, 1.0, 0.0
    %v1613 = vsel %vm1181, 1.0, 0.0
    %v1614 = vsel %vm1182, 1.0, 0.0
    %v1615 = vsel %vm1183, 1.0, 0.0
    %v1616 = vsel %vm1184, 1.0, 0.0
    %v1617 = vsel %vm1185, 1.0, 0.0
    %v1618 = vsel %vm1186, 1.0, 0.0
    %v1619 = vsel %vm1187, 1.0, 0.0
    %v1620 = vsel %vm1188, 1.0, 0.0
    %v1621 = vsel %vm1189, 1.0, 0.0
    %v1622 = vsel %vm1190, 1.0, 0.0
    %v1623 = vsel %vm1191, 1.0, 0.0
    %v1624 = vsel %vm1192, 1.0, 0.0
    %v1625 = vsel %vm1193, 1.0, 0.0
    %v1626 = vsel %vm1194, 1.0, 0.0
    %v1627 = vsel %vm1195, 1.0, 0.0
    %v1628 = vsel %vm1196, 1.0, 0.0
    %v1629 = vsel %vm1197, 1.0, 0.0
    %v1630 = vsel %vm1198, 1.0, 0.0
    %v1631 = vsel %vm1199, 1.0, 0.0
    %v1632 = vpack.c.bf16 %v1203, %v1200
    %v1633 = vpack.c.bf16 %v1204, %v1201
    %v1634 = vpack.c.bf16 %v1205, %v1202
    %v1635 = vpack.c.bf16 %v1209, %v1206
    %v1636 = vpack.c.bf16 %v1210, %v1207
    %v1637 = vpack.c.bf16 %v1211, %v1208
    %v1638 = vpack.c.bf16 %v1215, %v1212
    %v1639 = vpack.c.bf16 %v1216, %v1213
    %v1640 = vpack.c.bf16 %v1217, %v1214
    %v1641 = vpack.c.bf16 %v1221, %v1218
    %v1642 = vpack.c.bf16 %v1222, %v1219
    %v1643 = vpack.c.bf16 %v1223, %v1220
    %v1644 = vpack.c.bf16 %v1227, %v1224
    %v1645 = vpack.c.bf16 %v1228, %v1225
    %v1646 = vpack.c.bf16 %v1229, %v1226
    %v1647 = vpack.c.bf16 %v1233, %v1230
    %v1648 = vpack.c.bf16 %v1234, %v1231
    %v1649 = vpack.c.bf16 %v1235, %v1232
    %v1650 = vpack.c.bf16 %v1239, %v1236
    %v1651 = vpack.c.bf16 %v1240, %v1237
    %v1652 = vpack.c.bf16 %v1241, %v1238
    %v1653 = vpack.c.bf16 %v1245, %v1242
    %v1654 = vpack.c.bf16 %v1246, %v1243
    %v1655 = vpack.c.bf16 %v1247, %v1244
    %v1656 = vpack.c.bf16 %v1251, %v1248
    %v1657 = vpack.c.bf16 %v1252, %v1249
    %v1658 = vpack.c.bf16 %v1253, %v1250
    %v1659 = vpack.c.bf16 %v1257, %v1254
    %v1660 = vpack.c.bf16 %v1258, %v1255
    %v1661 = vpack.c.bf16 %v1259, %v1256
    %v1662 = vpack.c.bf16 %v1263, %v1260
    %v1663 = vpack.c.bf16 %v1264, %v1261
    %v1664 = vpack.c.bf16 %v1265, %v1262
    %v1665 = vpack.c.bf16 %v1269, %v1266
    %v1666 = vpack.c.bf16 %v1270, %v1267
    %v1667 = vpack.c.bf16 %v1271, %v1268
    %v1668 = vpack.c.bf16 %v1275, %v1272
    %v1669 = vpack.c.bf16 %v1276, %v1273
    %v1670 = vpack.c.bf16 %v1277, %v1274
    %v1671 = vpack.c.bf16 %v1281, %v1278
    %v1672 = vpack.c.bf16 %v1282, %v1279
    %v1673 = vpack.c.bf16 %v1283, %v1280
    %v1674 = vpack.c.bf16 %v1287, %v1284
    %v1675 = vpack.c.bf16 %v1288, %v1285
    %v1676 = vpack.c.bf16 %v1289, %v1286
    %v1677 = vpack.c.bf16 %v1293, %v1290
    %v1678 = vpack.c.bf16 %v1294, %v1291
    %v1679 = vpack.c.bf16 %v1295, %v1292
    %v1680 = vpack.c.bf16 %v1299, %v1296
    %v1681 = vpack.c.bf16 %v1300, %v1297
    %v1682 = vpack.c.bf16 %v1301, %v1298
    %v1683 = vpack.c.bf16 %v1305, %v1302
    %v1684 = vpack.c.bf16 %v1306, %v1303
    %v1685 = vpack.c.bf16 %v1307, %v1304
    %v1686 = vpack.c.bf16 %v1311, %v1308
    %v1687 = vpack.c.bf16 %v1312, %v1309
    %v1688 = vpack.c.bf16 %v1313, %v1310
    %v1689 = vpack.c.bf16 %v1317, %v1314
    %v1690 = vpack.c.bf16 %v1318, %v1315
    %v1691 = vpack.c.bf16 %v1319, %v1316
    %v1692 = vpack.c.bf16 %v1323, %v1320
    %v1693 = vpack.c.bf16 %v1324, %v1321
    %v1694 = vpack.c.bf16 %v1325, %v1322
    %v1695 = vpack.c.bf16 %v1329, %v1326
    %v1696 = vpack.c.bf16 %v1330, %v1327
    %v1697 = vpack.c.bf16 %v1331, %v1328
    %v1698 = vpack.c.bf16 %v1335, %v1332
    %v1699 = vpack.c.bf16 %v1336, %v1333
    %v1700 = vpack.c.bf16 %v1337, %v1334
    %v1701 = vpack.c.bf16 %v1341, %v1338
    %v1702 = vpack.c.bf16 %v1342, %v1339
    %v1703 = vpack.c.bf16 %v1343, %v1340
    %v1704 = vpack.c.bf16 %v1347, %v1344
    %v1705 = vpack.c.bf16 %v1348, %v1345
    %v1706 = vpack.c.bf16 %v1349, %v1346
    %v1707 = vpack.c.bf16 %v1353, %v1350
    %v1708 = vpack.c.bf16 %v1354, %v1351
    %v1709 = vpack.c.bf16 %v1355, %v1352
    %v1710 = vpack.c.bf16 %v1359, %v1356
    %v1711 = vpack.c.bf16 %v1360, %v1357
    %v1712 = vpack.c.bf16 %v1361, %v1358
    %v1713 = vpack.c.bf16 %v1365, %v1362
    %v1714 = vpack.c.bf16 %v1366, %v1363
    %v1715 = vpack.c.bf16 %v1367, %v1364
    %v1716 = vpack.c.bf16 %v1371, %v1368
    %v1717 = vpack.c.bf16 %v1372, %v1369
    %v1718 = vpack.c.bf16 %v1373, %v1370
    %v1719 = vpack.c.bf16 %v1377, %v1374
    %v1720 = vpack.c.bf16 %v1378, %v1375
    %v1721 = vpack.c.bf16 %v1379, %v1376
    %v1722 = vpack.c.bf16 %v1383, %v1380
    %v1723 = vpack.c.bf16 %v1384, %v1381
    %v1724 = vpack.c.bf16 %v1385, %v1382
    %v1725 = vpack.c.bf16 %v1389, %v1386
    %v1726 = vpack.c.bf16 %v1390, %v1387
    %v1727 = vpack.c.bf16 %v1391, %v1388
    %v1728 = vpack.c.bf16 %v1395, %v1392
    %v1729 = vpack.c.bf16 %v1396, %v1393
    %v1730 = vpack.c.bf16 %v1397, %v1394
    %v1731 = vpack.c.bf16 %v1401, %v1398
    %v1732 = vpack.c.bf16 %v1402, %v1399
    %v1733 = vpack.c.bf16 %v1403, %v1400
    %v1734 = vpack.c.bf16 %v1407, %v1404
    %v1735 = vpack.c.bf16 %v1408, %v1405
    %v1736 = vpack.c.bf16 %v1409, %v1406
    %v1737 = vpack.c.bf16 %v1413, %v1410
    %v1738 = vpack.c.bf16 %v1414, %v1411
    %v1739 = vpack.c.bf16 %v1415, %v1412
    %v1740 = vpack.c.bf16 %v1419, %v1416
    %v1741 = vpack.c.bf16 %v1420, %v1417
    %v1742 = vpack.c.bf16 %v1421, %v1418
    %v1743 = vpack.c.bf16 %v1425, %v1422
    %v1744 = vpack.c.bf16 %v1426, %v1423
    %v1745 = vpack.c.bf16 %v1427, %v1424
    %v1746 = vpack.c.bf16 %v1431, %v1428
    %v1747 = vpack.c.bf16 %v1432, %v1429
    %v1748 = vpack.c.bf16 %v1433, %v1430
    %v1749 = vpack.c.bf16 %v1437, %v1434
    %v1750 = vpack.c.bf16 %v1438, %v1435
    %v1751 = vpack.c.bf16 %v1439, %v1436
    %v1752 = vpack.c.bf16 %v1443, %v1440
    %v1753 = vpack.c.bf16 %v1444, %v1441
    %v1754 = vpack.c.bf16 %v1445, %v1442
    %v1755 = vpack.c.bf16 %v1449, %v1446
    %v1756 = vpack.c.bf16 %v1450, %v1447
    %v1757 = vpack.c.bf16 %v1451, %v1448
    %v1758 = vpack.c.bf16 %v1455, %v1452
    %v1759 = vpack.c.bf16 %v1456, %v1453
    %v1760 = vpack.c.bf16 %v1457, %v1454
    %v1761 = vpack.c.bf16 %v1461, %v1458
    %v1762 = vpack.c.bf16 %v1462, %v1459
    %v1763 = vpack.c.bf16 %v1463, %v1460
    %v1764 = vpack.c.bf16 %v1467, %v1464
    %v1765 = vpack.c.bf16 %v1468, %v1465
    %v1766 = vpack.c.bf16 %v1469, %v1466
    %v1767 = vpack.c.bf16 %v1473, %v1470
    %v1768 = vpack.c.bf16 %v1474, %v1471
    %v1769 = vpack.c.bf16 %v1475, %v1472
    %v1770 = vpack.c.bf16 %v1479, %v1476
    %v1771 = vpack.c.bf16 %v1480, %v1477
    %v1772 = vpack.c.bf16 %v1481, %v1478
    %v1773 = vpack.c.bf16 %v1485, %v1482
    %v1774 = vpack.c.bf16 %v1486, %v1483
    %v1775 = vpack.c.bf16 %v1487, %v1484
    %v1776 = vpack.c.bf16 %v1491, %v1488
    %v1777 = vpack.c.bf16 %v1492, %v1489
    %v1778 = vpack.c.bf16 %v1493, %v1490
    %v1779 = vpack.c.bf16 %v1497, %v1494
    %v1780 = vpack.c.bf16 %v1498, %v1495
    %v1781 = vpack.c.bf16 %v1499, %v1496
    %v1782 = vpack.c.bf16 %v1503, %v1500
    %v1783 = vpack.c.bf16 %v1504, %v1501
    %v1784 = vpack.c.bf16 %v1505, %v1502
    %v1785 = vpack.c.bf16 %v1509, %v1506
    %v1786 = vpack.c.bf16 %v1510, %v1507
    %v1787 = vpack.c.bf16 %v1511, %v1508
    %v1788 = vpack.c.bf16 %v1515, %v1512
    %v1789 = vpack.c.bf16 %v1516, %v1513
    %v1790 = vpack.c.bf16 %v1517, %v1514
    %v1791 = vpack.c.bf16 %v1521, %v1518
    %v1792 = vpack.c.bf16 %v1522, %v1519
    %v1793 = vpack.c.bf16 %v1523, %v1520
    %v1794 = vpack.c.bf16 %v1527, %v1524
    %v1795 = vpack.c.bf16 %v1528, %v1525
    %v1796 = vpack.c.bf16 %v1529, %v1526
    %v1797 = vpack.c.bf16 %v1533, %v1530
    %v1798 = vpack.c.bf16 %v1534, %v1531
    %v1799 = vpack.c.bf16 %v1535, %v1532
    %v1800 = vpack.c.bf16 %v1539, %v1536
    %v1801 = vpack.c.bf16 %v1540, %v1537
    %v1802 = vpack.c.bf16 %v1541, %v1538
    %v1803 = vpack.c.bf16 %v1545, %v1542
    %v1804 = vpack.c.bf16 %v1546, %v1543
    %v1805 = vpack.c.bf16 %v1547, %v1544
    %v1806 = vpack.c.bf16 %v1551, %v1548
    %v1807 = vpack.c.bf16 %v1552, %v1549
    %v1808 = vpack.c.bf16 %v1553, %v1550
    %v1809 = vpack.c.bf16 %v1557, %v1554
    %v1810 = vpack.c.bf16 %v1558, %v1555
    %v1811 = vpack.c.bf16 %v1559, %v1556
    %v1812 = vpack.c.bf16 %v1563, %v1560
    %v1813 = vpack.c.bf16 %v1564, %v1561
    %v1814 = vpack.c.bf16 %v1565, %v1562
    %v1815 = vpack.c.bf16 %v1569, %v1566
    %v1816 = vpack.c.bf16 %v1570, %v1567
    %v1817 = vpack.c.bf16 %v1571, %v1568
    %v1818 = vpack.c.bf16 %v1575, %v1572
    %v1819 = vpack.c.bf16 %v1576, %v1573
    %v1820 = vpack.c.bf16 %v1577, %v1574
    %v1821 = vpack.c.bf16 %v1581, %v1578
    %v1822 = vpack.c.bf16 %v1582, %v1579
    %v1823 = vpack.c.bf16 %v1583, %v1580
    %v1824 = vpack.c.bf16 %v1587, %v1584
    %v1825 = vpack.c.bf16 %v1588, %v1585
    %v1826 = vpack.c.bf16 %v1589, %v1586
    %v1827 = vpack.c.bf16 %v1593, %v1590
    %v1828 = vpack.c.bf16 %v1594, %v1591
    %v1829 = vpack.c.bf16 %v1595, %v1592
    %v1830 = vpack.c.bf16 %v1599, %v1596
    %v1831 = vpack.c.bf16 %v1600, %v1597
    %v1832 = vpack.c.bf16 %v1601, %v1598
    %v1833 = vpack.c.bf16 %v1605, %v1602
    %v1834 = vpack.c.bf16 %v1606, %v1603
    %v1835 = vpack.c.bf16 %v1607, %v1604
    %v1836 = vpack.c.bf16 %v1611, %v1608
    %v1837 = vpack.c.bf16 %v1612, %v1609
    %v1838 = vpack.c.bf16 %v1613, %v1610
    %v1839 = vpack.c.bf16 %v1617, %v1614
    %v1840 = vpack.c.bf16 %v1618, %v1615
    %v1841 = vpack.c.bf16 %v1619, %v1616
    %v1842 = vpack.c.bf16 %v1623, %v1620
    %v1843 = vpack.c.bf16 %v1624, %v1621
    %v1844 = vpack.c.bf16 %v1625, %v1622
    %v1845 = vpack.c.bf16 %v1629, %v1626
    %v1846 = vpack.c.bf16 %v1630, %v1627
    %v1847 = vpack.c.bf16 %v1631, %v1628
    %1848 = vmatprep.subr.bf16.mxu0 %v1654
    %1849 = vmatpush1.bf16.msra.mxu0 %v1653
    %1850 = vmatprep.subr.bf16.mxu0 %v1651
    %1851 = vmatpush1.bf16.msra.mxu0 %v1650
    %1852 = vmatprep.subr.bf16.mxu0 %v1648
    %1853 = vmatpush1.bf16.msra.mxu0 %v1647
    %1854 = vmatprep.subr.bf16.mxu0 %v1645
    %1855 = vmatpush1.bf16.msra.mxu0 %v1644
    %1856 = vmatprep.subr.bf16.mxu0 %v1642
    %1857 = vmatpush1.bf16.msra.mxu0 %v1641
    %1858 = vmatprep.subr.bf16.mxu0 %v1639
    %1859 = vmatpush1.bf16.msra.mxu0 %v1638
    %1860 = vmatprep.subr.bf16.mxu0 %v1636
    %1861 = vmatpush1.bf16.msra.mxu0 %v1635
    %1862 = vmatprep.subr.bf16.mxu0 %v1633
    %1863 = vmatpush1.bf16.msra.mxu0 %v1632
    %1864 = vmatprep.subr.bf16.mxu0 %v1678
    %1865 = vmatpush2.bf16.msra.mxu0 %v1677
    %1866 = vmatprep.subr.bf16.mxu0 %v1675
    %1867 = vmatpush2.bf16.msra.mxu0 %v1674
    %1868 = vmatprep.subr.bf16.mxu0 %v1672
    %1869 = vmatpush2.bf16.msra.mxu0 %v1671
    %1870 = vmatprep.subr.bf16.mxu0 %v1669
    %1871 = vmatpush2.bf16.msra.mxu0 %v1668
    %1872 = vmatprep.subr.bf16.mxu0 %v1666
    %1873 = vmatpush2.bf16.msra.mxu0 %v1665
    %1874 = vmatprep.subr.bf16.mxu0 %v1663
    %1875 = vmatpush2.bf16.msra.mxu0 %v1662
    %1876 = vmatprep.subr.bf16.mxu0 %v1660
    %1877 = vmatpush2.bf16.msra.mxu0 %v1659
    %1878 = vmatprep.subr.bf16.mxu0 %v1657
    %1879 = vmatpush2.bf16.msra.mxu0 %v1656
    %1880 = vmatprep.mubr.bf16.mxu0 %v586
    %1881 = vmatmul.mubr.bf16.gmra.mxu0 %v585
    %v1882 = vpop.f32.mrf.mxu0
    %v1883 = vadd.f32 0.0, %v1882
    %v1884 = vpop.f32.mrf.mxu0
    %v1885 = vadd.f32 0.0, %v1884
    %v1886 = vpop.f32.mrf.mxu0
    %v1887 = vadd.f32 0.0, %v1886
    %v1888 = vpop.f32.mrf.mxu0
    %v1889 = vadd.f32 0.0, %v1888
    %1890 = vdwg.mxu0
    %1891 = vmatprep.subr.bf16.mxu0 %v1702
    %1892 = vmatpush1.bf16.msra.mxu0 %v1701
    %1893 = vmatprep.subr.bf16.mxu0 %v1699
    %1894 = vmatpush1.bf16.msra.mxu0 %v1698
    %1895 = vmatprep.subr.bf16.mxu0 %v1696
    %1896 = vmatpush1.bf16.msra.mxu0 %v1695
    %1897 = vmatprep.subr.bf16.mxu0 %v1693
    %1898 = vmatpush1.bf16.msra.mxu0 %v1692
    %1899 = vmatprep.subr.bf16.mxu0 %v1690
    %1900 = vmatpush1.bf16.msra.mxu0 %v1689
    %1901 = vmatprep.subr.bf16.mxu0 %v1687
    %1902 = vmatpush1.bf16.msra.mxu0 %v1686
    %1903 = vmatprep.subr.bf16.mxu0 %v1684
    %1904 = vmatpush1.bf16.msra.mxu0 %v1683
    %1905 = vmatprep.subr.bf16.mxu0 %v1681
    %1906 = vmatpush1.bf16.msra.mxu0 %v1680
    %1907 = vmatprep.subr.bf16.mxu0 %v1726
    %1908 = vmatpush2.bf16.msra.mxu0 %v1725
    %1909 = vmatprep.subr.bf16.mxu0 %v1723
    %1910 = vmatpush2.bf16.msra.mxu0 %v1722
    %1911 = vmatprep.subr.bf16.mxu0 %v1720
    %1912 = vmatpush2.bf16.msra.mxu0 %v1719
    %1913 = vmatprep.subr.bf16.mxu0 %v1717
    %1914 = vmatpush2.bf16.msra.mxu0 %v1716
    %1915 = vmatprep.subr.bf16.mxu0 %v1714
    %1916 = vmatpush2.bf16.msra.mxu0 %v1713
    %1917 = vmatprep.subr.bf16.mxu0 %v1711
    %1918 = vmatpush2.bf16.msra.mxu0 %v1710
    %1919 = vmatprep.subr.bf16.mxu0 %v1708
    %1920 = vmatpush2.bf16.msra.mxu0 %v1707
    %1921 = vmatprep.subr.bf16.mxu0 %v1705
    %1922 = vmatpush2.bf16.msra.mxu0 %v1704
    %1923 = vmatprep.mubr.bf16.mxu0 %v588
    %1924 = vmatmul.mubr.bf16.gmra.mxu0 %v587
    %v1925 = vpop.f32.mrf.mxu0
    %v1926 = vadd.f32 %v1883, %v1925
    %v1927 = vpop.f32.mrf.mxu0
    %v1928 = vadd.f32 %v1885, %v1927
    %v1929 = vpop.f32.mrf.mxu0
    %v1930 = vadd.f32 %v1887, %v1929
    %v1931 = vpop.f32.mrf.mxu0
    %v1932 = vadd.f32 %v1889, %v1931
    %1933 = vdwg.mxu0
    %1934 = vmatprep.subr.bf16.mxu0 %v1750
    %1935 = vmatpush1.bf16.msra.mxu0 %v1749
    %1936 = vmatprep.subr.bf16.mxu0 %v1747
    %1937 = vmatpush1.bf16.msra.mxu0 %v1746
    %1938 = vmatprep.subr.bf16.mxu0 %v1744
    %1939 = vmatpush1.bf16.msra.mxu0 %v1743
    %1940 = vmatprep.subr.bf16.mxu0 %v1741
    %1941 = vmatpush1.bf16.msra.mxu0 %v1740
    %1942 = vmatprep.subr.bf16.mxu0 %v1738
    %1943 = vmatpush1.bf16.msra.mxu0 %v1737
    %1944 = vmatprep.subr.bf16.mxu0 %v1735
    %1945 = vmatpush1.bf16.msra.mxu0 %v1734
    %1946 = vmatprep.subr.bf16.mxu0 %v1732
    %1947 = vmatpush1.bf16.msra.mxu0 %v1731
    %1948 = vmatprep.subr.bf16.mxu0 %v1729
    %1949 = vmatpush1.bf16.msra.mxu0 %v1728
    %1950 = vmatprep.subr.bf16.mxu0 %v1774
    %1951 = vmatpush2.bf16.msra.mxu0 %v1773
    %1952 = vmatprep.subr.bf16.mxu0 %v1771
    %1953 = vmatpush2.bf16.msra.mxu0 %v1770
    %1954 = vmatprep.subr.bf16.mxu0 %v1768
    %1955 = vmatpush2.bf16.msra.mxu0 %v1767
    %1956 = vmatprep.subr.bf16.mxu0 %v1765
    %1957 = vmatpush2.bf16.msra.mxu0 %v1764
    %1958 = vmatprep.subr.bf16.mxu0 %v1762
    %1959 = vmatpush2.bf16.msra.mxu0 %v1761
    %1960 = vmatprep.subr.bf16.mxu0 %v1759
    %1961 = vmatpush2.bf16.msra.mxu0 %v1758
    %1962 = vmatprep.subr.bf16.mxu0 %v1756
    %1963 = vmatpush2.bf16.msra.mxu0 %v1755
    %1964 = vmatprep.subr.bf16.mxu0 %v1753
    %1965 = vmatpush2.bf16.msra.mxu0 %v1752
    %1966 = vmatprep.mubr.bf16.mxu0 %v590
    %1967 = vmatmul.mubr.bf16.gmra.mxu0 %v589
    %v1968 = vpop.f32.mrf.mxu0
    %v1969 = vadd.f32 %v1926, %v1968
    %v1970 = vpop.f32.mrf.mxu0
    %v1971 = vadd.f32 %v1928, %v1970
    %v1972 = vpop.f32.mrf.mxu0
    %v1973 = vadd.f32 %v1930, %v1972
    %v1974 = vpop.f32.mrf.mxu0
    %v1975 = vadd.f32 %v1932, %v1974
    %1976 = vdwg.mxu0
    %1977 = vmatprep.subr.bf16.mxu0 %v1798
    %1978 = vmatpush1.bf16.msra.mxu0 %v1797
    %1979 = vmatprep.subr.bf16.mxu0 %v1795
    %1980 = vmatpush1.bf16.msra.mxu0 %v1794
    %1981 = vmatprep.subr.bf16.mxu0 %v1792
    %1982 = vmatpush1.bf16.msra.mxu0 %v1791
    %1983 = vmatprep.subr.bf16.mxu0 %v1789
    %1984 = vmatpush1.bf16.msra.mxu0 %v1788
    %1985 = vmatprep.subr.bf16.mxu0 %v1786
    %1986 = vmatpush1.bf16.msra.mxu0 %v1785
    %1987 = vmatprep.subr.bf16.mxu0 %v1783
    %1988 = vmatpush1.bf16.msra.mxu0 %v1782
    %1989 = vmatprep.subr.bf16.mxu0 %v1780
    %1990 = vmatpush1.bf16.msra.mxu0 %v1779
    %1991 = vmatprep.subr.bf16.mxu0 %v1777
    %1992 = vmatpush1.bf16.msra.mxu0 %v1776
    %1993 = vmatprep.subr.bf16.mxu0 %v1822
    %1994 = vmatpush2.bf16.msra.mxu0 %v1821
    %1995 = vmatprep.subr.bf16.mxu0 %v1819
    %1996 = vmatpush2.bf16.msra.mxu0 %v1818
    %1997 = vmatprep.subr.bf16.mxu0 %v1816
    %1998 = vmatpush2.bf16.msra.mxu0 %v1815
    %1999 = vmatprep.subr.bf16.mxu0 %v1813
    %2000 = vmatpush2.bf16.msra.mxu0 %v1812
    %2001 = vmatprep.subr.bf16.mxu0 %v1810
    %2002 = vmatpush2.bf16.msra.mxu0 %v1809
    %2003 = vmatprep.subr.bf16.mxu0 %v1807
    %2004 = vmatpush2.bf16.msra.mxu0 %v1806
    %2005 = vmatprep.subr.bf16.mxu0 %v1804
    %2006 = vmatpush2.bf16.msra.mxu0 %v1803
    %2007 = vmatprep.subr.bf16.mxu0 %v1801
    %2008 = vmatpush2.bf16.msra.mxu0 %v1800
    %2009 = vmatprep.mubr.bf16.mxu0 %v592
    %2010 = vmatmul.mubr.bf16.gmra.mxu0 %v591
    %v2011 = vpop.f32.mrf.mxu0
    %v2012 = vadd.f32 %v1969, %v2011
    %v2013 = vpop.f32.mrf.mxu0
    %v2014 = vadd.f32 %v1971, %v2013
    %v2015 = vpop.f32.mrf.mxu0
    %v2016 = vadd.f32 %v1973, %v2015
    %v2017 = vpop.f32.mrf.mxu0
    %v2018 = vadd.f32 %v1975, %v2017
    %2019 = vdwg.mxu0
    %2020 = vmatprep.subr.bf16.mxu0 %v1846
    %2021 = vmatpush1.bf16.msra.mxu0 %v1845
    %2022 = vmatprep.subr.bf16.mxu0 %v1843
    %2023 = vmatpush1.bf16.msra.mxu0 %v1842
    %2024 = vmatprep.subr.bf16.mxu0 %v1840
    %2025 = vmatpush1.bf16.msra.mxu0 %v1839
    %2026 = vmatprep.subr.bf16.mxu0 %v1837
    %2027 = vmatpush1.bf16.msra.mxu0 %v1836
    %2028 = vmatprep.subr.bf16.mxu0 %v1834
    %2029 = vmatpush1.bf16.msra.mxu0 %v1833
    %2030 = vmatprep.subr.bf16.mxu0 %v1831
    %2031 = vmatpush1.bf16.msra.mxu0 %v1830
    %2032 = vmatprep.subr.bf16.mxu0 %v1828
    %2033 = vmatpush1.bf16.msra.mxu0 %v1827
    %2034 = vmatprep.subr.bf16.mxu0 %v1825
    %2035 = vmatpush1.bf16.msra.mxu0 %v1824
    %2036 = vmatprep.subr.bf16.mxu0 0
    %2037 = vmatpush2.bf16.msra.mxu0 0
    %2038 = vmatprep.subr.bf16.mxu0 0
    %2039 = vmatpush2.bf16.msra.mxu0 0
    %2040 = vmatprep.subr.bf16.mxu0 0
    %2041 = vmatpush2.bf16.msra.mxu0 0
    %2042 = vmatprep.subr.bf16.mxu0 0
    %2043 = vmatpush2.bf16.msra.mxu0 0
    %2044 = vmatprep.subr.bf16.mxu0 0
    %2045 = vmatpush2.bf16.msra.mxu0 0
    %2046 = vmatprep.subr.bf16.mxu0 0
    %2047 = vmatpush2.bf16.msra.mxu0 0
    %2048 = vmatprep.subr.bf16.mxu0 0
    %2049 = vmatpush2.bf16.msra.mxu0 0
    %2050 = vmatprep.subr.bf16.mxu0 0
    %2051 = vmatpush2.bf16.msra.mxu0 0
    %2052 = vmatprep.mubr.bf16.mxu0 0
    %2053 = vmatmul.mubr.bf16.gmra.mxu0 %v593
    %v2054 = vpop.f32.mrf.mxu0
    %v2055 = vadd.f32 %v2012, %v2054
    %v2056 = vpop.f32.mrf.mxu0
    %v2057 = vadd.f32 %v2014, %v2056
    %v2058 = vpop.f32.mrf.mxu0
    %v2059 = vadd.f32 %v2016, %v2058
    %v2060 = vpop.f32.mrf.mxu0
    %v2061 = vadd.f32 %v2018, %v2060
    %2062 = vdwg.mxu0
    %2063 = vmatprep.subr.bf16.mxu0 0
    %2064 = vmatpush1.bf16.msra.mxu0 %v1655
    %2065 = vmatprep.subr.bf16.mxu0 0
    %2066 = vmatpush1.bf16.msra.mxu0 %v1652
    %2067 = vmatprep.subr.bf16.mxu0 0
    %2068 = vmatpush1.bf16.msra.mxu0 %v1649
    %2069 = vmatprep.subr.bf16.mxu0 0
    %2070 = vmatpush1.bf16.msra.mxu0 %v1646
    %2071 = vmatprep.subr.bf16.mxu0 0
    %2072 = vmatpush1.bf16.msra.mxu0 %v1643
    %2073 = vmatprep.subr.bf16.mxu0 0
    %2074 = vmatpush1.bf16.msra.mxu0 %v1640
    %2075 = vmatprep.subr.bf16.mxu0 0
    %2076 = vmatpush1.bf16.msra.mxu0 %v1637
    %2077 = vmatprep.subr.bf16.mxu0 0
    %2078 = vmatpush1.bf16.msra.mxu0 %v1634
    %2079 = vmatprep.subr.bf16.mxu0 0
    %2080 = vmatpush2.bf16.msra.mxu0 %v1679
    %2081 = vmatprep.subr.bf16.mxu0 0
    %2082 = vmatpush2.bf16.msra.mxu0 %v1676
    %2083 = vmatprep.subr.bf16.mxu0 0
    %2084 = vmatpush2.bf16.msra.mxu0 %v1673
    %2085 = vmatprep.subr.bf16.mxu0 0
    %2086 = vmatpush2.bf16.msra.mxu0 %v1670
    %2087 = vmatprep.subr.bf16.mxu0 0
    %2088 = vmatpush2.bf16.msra.mxu0 %v1667
    %2089 = vmatprep.subr.bf16.mxu0 0
    %2090 = vmatpush2.bf16.msra.mxu0 %v1664
    %2091 = vmatprep.subr.bf16.mxu0 0
    %2092 = vmatpush2.bf16.msra.mxu0 %v1661
    %2093 = vmatprep.subr.bf16.mxu0 0
    %2094 = vmatpush2.bf16.msra.mxu0 %v1658
    %2095 = vmatprep.mubr.bf16.mxu0 %v586
    %2096 = vmatmul.mubr.bf16.gmra.mxu0 %v585
    %v2097 = vpop.f32.mrf.mxu0
    %v2098 = vadd.f32 0.0, %v2097
    %v2099 = vpop.f32.mrf.mxu0
    %v2100 = vpop.f32.mrf.mxu0
    %v2101 = vadd.f32 0.0, %v2100
    %v2102 = vpop.f32.mrf.mxu0
    %2103 = vdwg.mxu0
    %2104 = vmatprep.subr.bf16.mxu0 0
    %2105 = vmatpush1.bf16.msra.mxu0 %v1703
    %2106 = vmatprep.subr.bf16.mxu0 0
    %2107 = vmatpush1.bf16.msra.mxu0 %v1700
    %2108 = vmatprep.subr.bf16.mxu0 0
    %2109 = vmatpush1.bf16.msra.mxu0 %v1697
    %2110 = vmatprep.subr.bf16.mxu0 0
    %2111 = vmatpush1.bf16.msra.mxu0 %v1694
    %2112 = vmatprep.subr.bf16.mxu0 0
    %2113 = vmatpush1.bf16.msra.mxu0 %v1691
    %2114 = vmatprep.subr.bf16.mxu0 0
    %2115 = vmatpush1.bf16.msra.mxu0 %v1688
    %2116 = vmatprep.subr.bf16.mxu0 0
    %2117 = vmatpush1.bf16.msra.mxu0 %v1685
    %2118 = vmatprep.subr.bf16.mxu0 0
    %2119 = vmatpush1.bf16.msra.mxu0 %v1682
    %2120 = vmatprep.subr.bf16.mxu0 0
    %2121 = vmatpush2.bf16.msra.mxu0 %v1727
    %2122 = vmatprep.subr.bf16.mxu0 0
    %2123 = vmatpush2.bf16.msra.mxu0 %v1724
    %2124 = vmatprep.subr.bf16.mxu0 0
    %2125 = vmatpush2.bf16.msra.mxu0 %v1721
    %2126 = vmatprep.subr.bf16.mxu0 0
    %2127 = vmatpush2.bf16.msra.mxu0 %v1718
    %2128 = vmatprep.subr.bf16.mxu0 0
    %2129 = vmatpush2.bf16.msra.mxu0 %v1715
    %2130 = vmatprep.subr.bf16.mxu0 0
    %2131 = vmatpush2.bf16.msra.mxu0 %v1712
    %2132 = vmatprep.subr.bf16.mxu0 0
    %2133 = vmatpush2.bf16.msra.mxu0 %v1709
    %2134 = vmatprep.subr.bf16.mxu0 0
    %2135 = vmatpush2.bf16.msra.mxu0 %v1706
    %2136 = vmatprep.mubr.bf16.mxu0 %v588
    %2137 = vmatmul.mubr.bf16.gmra.mxu0 %v587
    %v2138 = vpop.f32.mrf.mxu0
    %v2139 = vadd.f32 %v2098, %v2138
    %v2140 = vpop.f32.mrf.mxu0
    %v2141 = vpop.f32.mrf.mxu0
    %v2142 = vadd.f32 %v2101, %v2141
    %v2143 = vpop.f32.mrf.mxu0
    %2144 = vdwg.mxu0
    %2145 = vmatprep.subr.bf16.mxu0 0
    %2146 = vmatpush1.bf16.msra.mxu0 %v1751
    %2147 = vmatprep.subr.bf16.mxu0 0
    %2148 = vmatpush1.bf16.msra.mxu0 %v1748
    %2149 = vmatprep.subr.bf16.mxu0 0
    %2150 = vmatpush1.bf16.msra.mxu0 %v1745
    %2151 = vmatprep.subr.bf16.mxu0 0
    %2152 = vmatpush1.bf16.msra.mxu0 %v1742
    %2153 = vmatprep.subr.bf16.mxu0 0
    %2154 = vmatpush1.bf16.msra.mxu0 %v1739
    %2155 = vmatprep.subr.bf16.mxu0 0
    %2156 = vmatpush1.bf16.msra.mxu0 %v1736
    %2157 = vmatprep.subr.bf16.mxu0 0
    %2158 = vmatpush1.bf16.msra.mxu0 %v1733
    %2159 = vmatprep.subr.bf16.mxu0 0
    %2160 = vmatpush1.bf16.msra.mxu0 %v1730
    %2161 = vmatprep.subr.bf16.mxu0 0
    %2162 = vmatpush2.bf16.msra.mxu0 %v1775
    %2163 = vmatprep.subr.bf16.mxu0 0
    %2164 = vmatpush2.bf16.msra.mxu0 %v1772
    %2165 = vmatprep.subr.bf16.mxu0 0
    %2166 = vmatpush2.bf16.msra.mxu0 %v1769
    %2167 = vmatprep.subr.bf16.mxu0 0
    %2168 = vmatpush2.bf16.msra.mxu0 %v1766
    %2169 = vmatprep.subr.bf16.mxu0 0
    %2170 = vmatpush2.bf16.msra.mxu0 %v1763
    %2171 = vmatprep.subr.bf16.mxu0 0
    %2172 = vmatpush2.bf16.msra.mxu0 %v1760
    %2173 = vmatprep.subr.bf16.mxu0 0
    %2174 = vmatpush2.bf16.msra.mxu0 %v1757
    %2175 = vmatprep.subr.bf16.mxu0 0
    %2176 = vmatpush2.bf16.msra.mxu0 %v1754
    %2177 = vmatprep.mubr.bf16.mxu0 %v590
    %2178 = vmatmul.mubr.bf16.gmra.mxu0 %v589
    %v2179 = vpop.f32.mrf.mxu0
    %v2180 = vadd.f32 %v2139, %v2179
    %v2181 = vpop.f32.mrf.mxu0
    %v2182 = vpop.f32.mrf.mxu0
    %v2183 = vadd.f32 %v2142, %v2182
    %v2184 = vpop.f32.mrf.mxu0
    %2185 = vdwg.mxu0
    %2186 = vmatprep.subr.bf16.mxu0 0
    %2187 = vmatpush1.bf16.msra.mxu0 %v1799
    %2188 = vmatprep.subr.bf16.mxu0 0
    %2189 = vmatpush1.bf16.msra.mxu0 %v1796
    %2190 = vmatprep.subr.bf16.mxu0 0
    %2191 = vmatpush1.bf16.msra.mxu0 %v1793
    %2192 = vmatprep.subr.bf16.mxu0 0
    %2193 = vmatpush1.bf16.msra.mxu0 %v1790
    %2194 = vmatprep.subr.bf16.mxu0 0
    %2195 = vmatpush1.bf16.msra.mxu0 %v1787
    %2196 = vmatprep.subr.bf16.mxu0 0
    %2197 = vmatpush1.bf16.msra.mxu0 %v1784
    %2198 = vmatprep.subr.bf16.mxu0 0
    %2199 = vmatpush1.bf16.msra.mxu0 %v1781
    %2200 = vmatprep.subr.bf16.mxu0 0
    %2201 = vmatpush1.bf16.msra.mxu0 %v1778
    %2202 = vmatprep.subr.bf16.mxu0 0
    %2203 = vmatpush2.bf16.msra.mxu0 %v1823
    %2204 = vmatprep.subr.bf16.mxu0 0
    %2205 = vmatpush2.bf16.msra.mxu0 %v1820
    %2206 = vmatprep.subr.bf16.mxu0 0
    %2207 = vmatpush2.bf16.msra.mxu0 %v1817
    %2208 = vmatprep.subr.bf16.mxu0 0
    %2209 = vmatpush2.bf16.msra.mxu0 %v1814
    %2210 = vmatprep.subr.bf16.mxu0 0
    %2211 = vmatpush2.bf16.msra.mxu0 %v1811
    %2212 = vmatprep.subr.bf16.mxu0 0
    %2213 = vmatpush2.bf16.msra.mxu0 %v1808
    %2214 = vmatprep.subr.bf16.mxu0 0
    %2215 = vmatpush2.bf16.msra.mxu0 %v1805
    %2216 = vmatprep.subr.bf16.mxu0 0
    %2217 = vmatpush2.bf16.msra.mxu0 %v1802
    %2218 = vmatprep.mubr.bf16.mxu0 %v592
    %2219 = vmatmul.mubr.bf16.gmra.mxu0 %v591
    %v2220 = vpop.f32.mrf.mxu0
    %v2221 = vadd.f32 %v2180, %v2220
    %v2222 = vpop.f32.mrf.mxu0
    %v2223 = vpop.f32.mrf.mxu0
    %v2224 = vadd.f32 %v2183, %v2223
    %v2225 = vpop.f32.mrf.mxu0
    %2226 = vdwg.mxu0
    %2227 = vmatprep.subr.bf16.mxu0 0
    %2228 = vmatpush1.bf16.msra.mxu0 %v1847
    %2229 = vmatprep.subr.bf16.mxu0 0
    %2230 = vmatpush1.bf16.msra.mxu0 %v1844
    %2231 = vmatprep.subr.bf16.mxu0 0
    %2232 = vmatpush1.bf16.msra.mxu0 %v1841
    %2233 = vmatprep.subr.bf16.mxu0 0
    %2234 = vmatpush1.bf16.msra.mxu0 %v1838
    %2235 = vmatprep.subr.bf16.mxu0 0
    %2236 = vmatpush1.bf16.msra.mxu0 %v1835
    %2237 = vmatprep.subr.bf16.mxu0 0
    %2238 = vmatpush1.bf16.msra.mxu0 %v1832
    %2239 = vmatprep.subr.bf16.mxu0 0
    %2240 = vmatpush1.bf16.msra.mxu0 %v1829
    %2241 = vmatprep.subr.bf16.mxu0 0
    %2242 = vmatpush1.bf16.msra.mxu0 %v1826
    %2243 = vmatprep.subr.bf16.mxu0 0
    %2244 = vmatpush2.bf16.msra.mxu0 0
    %2245 = vmatprep.subr.bf16.mxu0 0
    %2246 = vmatpush2.bf16.msra.mxu0 0
    %2247 = vmatprep.subr.bf16.mxu0 0
    %2248 = vmatpush2.bf16.msra.mxu0 0
    %2249 = vmatprep.subr.bf16.mxu0 0
    %2250 = vmatpush2.bf16.msra.mxu0 0
    %2251 = vmatprep.subr.bf16.mxu0 0
    %2252 = vmatpush2.bf16.msra.mxu0 0
    %2253 = vmatprep.subr.bf16.mxu0 0
    %2254 = vmatpush2.bf16.msra.mxu0 0
    %2255 = vmatprep.subr.bf16.mxu0 0
    %2256 = vmatpush2.bf16.msra.mxu0 0
    %2257 = vmatprep.subr.bf16.mxu0 0
    %2258 = vmatpush2.bf16.msra.mxu0 0
    %2259 = vmatprep.mubr.bf16.mxu0 0
    %2260 = vmatmul.mubr.bf16.gmra.mxu0 %v593
    %v2261 = vpop.f32.mrf.mxu0
    %v2262 = vadd.f32 %v2221, %v2261
    %v2263 = vpop.f32.mrf.mxu0
    %v2264 = vpop.f32.mrf.mxu0
    %v2265 = vadd.f32 %v2224, %v2264
    %v2266 = vpop.f32.mrf.mxu0
    %2267 = vdwg.mxu0
    %s2268 = smul.u32 %s742, 2
    %s2269 = smul.addr %s2268, 4
    %s2270 = scalar_lea.vmem %s4, %s2269
    %v2271 = vld [vmem:[%s2270] sm:$0xf]
    %v2272 = vld [vmem:[%s2270 + $0x4] sm:$0xf]
    %v2273 = vpack.c.bf16 %v2059, %v2055
    %v2274 = vpack.c.bf16 %v2061, %v2057
    %v2275 = vpack.c.bf16 %v2265, %v2262
    %v2278 = vunpack.c.l.b16 %v2271
    %v2279 = vunpack.c.l.b16 %v2272
    %v2280 = vpack.c.b16 %v2279, %v2278
    %vm2281 = vcmask 130048
    %v2283 = vsel %vm2281, %v2280, 0
    %2285 = vmatprep.subr.bf16.mxu0 0
    %2286 = vmatpush1.bf16.msra.mxu0 0
    %2287 = vmatprep.subr.bf16.mxu0 0
    %2288 = vmatpush1.bf16.msra.mxu0 0
    %2289 = vmatprep.subr.bf16.mxu0 0
    %2290 = vmatpush1.bf16.msra.mxu0 0
    %2291 = vmatprep.subr.bf16.mxu0 0
    %2292 = vmatpush1.bf16.msra.mxu0 0
    %2293 = vmatprep.subr.bf16.mxu0 0
    %2294 = vmatpush1.bf16.msra.mxu0 0
    %2295 = vmatprep.subr.bf16.mxu0 0
    %2296 = vmatpush1.bf16.msra.mxu0 0
    %2297 = vmatprep.subr.bf16.mxu0 0
    %2298 = vmatpush1.bf16.msra.mxu0 0
    %2299 = vmatprep.subr.bf16.mxu0 %v2274
    %2300 = vmatpush1.bf16.msra.mxu0 %v2273
    %2301 = vmatprep.subr.bf16.mxu0 0
    %2302 = vmatpush2.bf16.msra.mxu0 0
    %2303 = vmatprep.subr.bf16.mxu0 0
    %2304 = vmatpush2.bf16.msra.mxu0 0
    %2305 = vmatprep.subr.bf16.mxu0 0
    %2306 = vmatpush2.bf16.msra.mxu0 0
    %2307 = vmatprep.subr.bf16.mxu0 0
    %2308 = vmatpush2.bf16.msra.mxu0 0
    %2309 = vmatprep.subr.bf16.mxu0 0
    %2310 = vmatpush2.bf16.msra.mxu0 0
    %2311 = vmatprep.subr.bf16.mxu0 0
    %2312 = vmatpush2.bf16.msra.mxu0 0
    %2313 = vmatprep.subr.bf16.mxu0 0
    %2314 = vmatpush2.bf16.msra.mxu0 0
    %2315 = vmatprep.subr.bf16.mxu0 0
    %2316 = vmatpush2.bf16.msra.mxu0 0
    %2317 = vmatprep.mubr.bf16.mxu0 0
    %2318 = vmatmul.mubr.bf16.gmra.mxu0 %v2283
    %v2319 = vpop.f32.mrf.mxu0
    %v2320 = vadd.f32 0.0, %v2319
    %v2321 = vpop.f32.mrf.mxu0
    %v2322 = vadd.f32 0.0, %v2321
    %v2323 = vpop.f32.mrf.mxu0
    %v2324 = vadd.f32 0.0, %v2323
    %v2325 = vpop.f32.mrf.mxu0
    %v2326 = vadd.f32 0.0, %v2325
    %2327 = vdwg.mxu0
    %2328 = vmatprep.subr.bf16.mxu0 0
    %2329 = vmatpush1.bf16.msra.mxu0 0
    %2330 = vmatprep.subr.bf16.mxu0 0
    %2331 = vmatpush1.bf16.msra.mxu0 0
    %2332 = vmatprep.subr.bf16.mxu0 0
    %2333 = vmatpush1.bf16.msra.mxu0 0
    %2334 = vmatprep.subr.bf16.mxu0 0
    %2335 = vmatpush1.bf16.msra.mxu0 0
    %2336 = vmatprep.subr.bf16.mxu0 0
    %2337 = vmatpush1.bf16.msra.mxu0 0
    %2338 = vmatprep.subr.bf16.mxu0 0
    %2339 = vmatpush1.bf16.msra.mxu0 0
    %2340 = vmatprep.subr.bf16.mxu0 0
    %2341 = vmatpush1.bf16.msra.mxu0 0
    %2342 = vmatprep.subr.bf16.mxu0 0
    %2343 = vmatpush1.bf16.msra.mxu0 %v2275
    %2344 = vmatprep.subr.bf16.mxu0 0
    %2345 = vmatpush2.bf16.msra.mxu0 0
    %2346 = vmatprep.subr.bf16.mxu0 0
    %2347 = vmatpush2.bf16.msra.mxu0 0
    %2348 = vmatprep.subr.bf16.mxu0 0
    %2349 = vmatpush2.bf16.msra.mxu0 0
    %2350 = vmatprep.subr.bf16.mxu0 0
    %2351 = vmatpush2.bf16.msra.mxu0 0
    %2352 = vmatprep.subr.bf16.mxu0 0
    %2353 = vmatpush2.bf16.msra.mxu0 0
    %2354 = vmatprep.subr.bf16.mxu0 0
    %2355 = vmatpush2.bf16.msra.mxu0 0
    %2356 = vmatprep.subr.bf16.mxu0 0
    %2357 = vmatpush2.bf16.msra.mxu0 0
    %2358 = vmatprep.subr.bf16.mxu0 0
    %2359 = vmatpush2.bf16.msra.mxu0 0
    %2360 = vmatprep.mubr.bf16.mxu0 0
    %2361 = vmatmul.mubr.bf16.gmra.mxu0 %v2283
    %v2362 = vpop.f32.mrf.mxu0
    %v2363 = vadd.f32 0.0, %v2362
    %v2364 = vpop.f32.mrf.mxu0
    %v2365 = vpop.f32.mrf.mxu0
    %v2366 = vadd.f32 0.0, %v2365
    %v2367 = vpop.f32.mrf.mxu0
    %2368 = vdwg.mxu0
    %v2369 = vadd.f32 %v747, %v2320
    %v2370 = vadd.f32 %v748, %v2322
    %v2371 = vadd.f32 %v749, %v2363
    %v2372 = vadd.f32 %v750, %v2324
    %v2373 = vadd.f32 %v751, %v2326
    %v2374 = vadd.f32 %v752, %v2366
  $region66: #{vae_enc_forward.1} parent=0 // loop_footer
    %s746 = sadd.s32 1, %s742
  $region67: #{vae_enc_forward.1} parent=0 // loop_footer_branch
    %741 = sbr.rel target = $region63
  $region68: #{vae_enc_forward.1} parent=0 // loop_exit
    _
  %2376 = vset.pattern.permute.xlu0 0
  %2377 = vperm.xlu0 %2376, %v594
  %v2378 = vpop.permute.xlu0 %2377
  %2381 = vset.pattern.permute.xlu0 0
  %2382 = vperm.xlu0 %2381, %v595
  %v2383 = vpop.permute.xlu0 %2382
  %v2385 = vadd.f32 %v747, %v2378
  %v2386 = vadd.f32 %v748, %v2378
  %v2387 = vadd.f32 %v749, %v2378
  %v2388 = vadd.f32 %v750, %v2383
  %v2389 = vadd.f32 %v751, %v2383
  %v2390 = vadd.f32 %v752, %v2383
  %v2391 = vmax.f32 %v2385, 0.0
  %v2392 = vmax.f32 %v2386, 0.0
  %v2393 = vmax.f32 %v2387, 0.0
  %v2394 = vmax.f32 %v2388, 0.0
  %v2395 = vmax.f32 %v2389, 0.0
  %v2396 = vmax.f32 %v2390, 0.0
  %v2397 = vpack.c.bf16 %v2394, %v2391
  %v2398 = vpack.c.bf16 %v2395, %v2392
  %v2399 = vpack.c.bf16 %v2396, %v2393
  %v2400 = vld [vmem:[%s8] sm:$0xff]
  %v2401 = vld [vmem:[%s8 + $0x8] sm:$0xff]
  %v2402 = vld [vmem:[%s8 + $0x10] sm:$0xff]
  %v2403 = vld [vmem:[%s8 + $0x18] sm:$0xff]
  loop: start=0, step=1, limit=9
  $region69: #{vae_enc_forward.1} parent=0 // loop_pre_header
    _
  $region70: #{vae_enc_forward.1} parent=0 // loop_header
    %s2405 = sphi 0, %s2409
    %p2406 = scmp.ge.s32.totalorder %s2405, 9
    %v2410 = vphi 0.0, %v2670
    %v2411 = vphi 0.0, %v2671
    %v2412 = vphi 0.0, %v2672
    %v2413 = vphi 0.0, %v2673
  $region71: #{vae_enc_forward.1} parent=0 // loop_header_branch
    %2408 = sbr.rel (%p2406) target = $region75
  $region72: #{vae_enc_forward.1} parent=0 // loop_body
    %s2414 = scalar_lea.vmem %s6, %s2405
    %v2415 = vld [vmem:[%s2414] sm:$0x1]
    %v2416 = vlaneseq
    %v2417 = vshrl.u32 %v2416, 7
    %v2418 = vsub.s32 0, %v2417
    %v2419 = vrot.slane %v2415, %v2418
    %vm2420 = vcmp.eq.s32.totalorder %v597, %v2419
    %vm2421 = vcmp.eq.s32.totalorder %v598, %v2419
    %vm2422 = vcmp.eq.s32.totalorder %v599, %v2419
    %vm2423 = vcmp.eq.s32.totalorder %v600, %v2419
    %vm2424 = vcmp.eq.s32.totalorder %v601, %v2419
    %vm2425 = vcmp.eq.s32.totalorder %v602, %v2419
    %vm2426 = vcmp.eq.s32.totalorder %v603, %v2419
    %vm2427 = vcmp.eq.s32.totalorder %v604, %v2419
    %vm2428 = vcmp.eq.s32.totalorder %v605, %v2419
    %vm2429 = vcmp.eq.s32.totalorder %v606, %v2419
    %vm2430 = vcmp.eq.s32.totalorder %v607, %v2419
    %vm2431 = vcmp.eq.s32.totalorder %v608, %v2419
    %vm2432 = vcmp.eq.s32.totalorder %v609, %v2419
    %vm2433 = vcmp.eq.s32.totalorder %v610, %v2419
    %vm2434 = vcmp.eq.s32.totalorder %v611, %v2419
    %vm2435 = vcmp.eq.s32.totalorder %v612, %v2419
    %vm2436 = vcmp.eq.s32.totalorder %v613, %v2419
    %vm2437 = vcmp.eq.s32.totalorder %v614, %v2419
    %vm2438 = vcmp.eq.s32.totalorder %v615, %v2419
    %vm2439 = vcmp.eq.s32.totalorder %v616, %v2419
    %vm2440 = vcmp.eq.s32.totalorder %v617, %v2419
    %vm2441 = vcmp.eq.s32.totalorder %v618, %v2419
    %vm2442 = vcmp.eq.s32.totalorder %v619, %v2419
    %vm2443 = vcmp.eq.s32.totalorder %v620, %v2419
    %vm2444 = vcmp.eq.s32.totalorder %v621, %v2419
    %vm2445 = vcmp.eq.s32.totalorder %v622, %v2419
    %vm2446 = vcmp.eq.s32.totalorder %v623, %v2419
    %vm2447 = vcmp.eq.s32.totalorder %v624, %v2419
    %vm2448 = vcmp.eq.s32.totalorder %v625, %v2419
    %vm2449 = vcmp.eq.s32.totalorder %v626, %v2419
    %vm2450 = vcmp.eq.s32.totalorder %v627, %v2419
    %vm2451 = vcmp.eq.s32.totalorder %v628, %v2419
    %vm2452 = vcmp.eq.s32.totalorder %v629, %v2419
    %vm2453 = vcmp.eq.s32.totalorder %v630, %v2419
    %vm2454 = vcmp.eq.s32.totalorder %v631, %v2419
    %vm2455 = vcmp.eq.s32.totalorder %v632, %v2419
    %v2456 = vsel %vm2420, 1.0, 0.0
    %v2457 = vsel %vm2421, 1.0, 0.0
    %v2458 = vsel %vm2422, 1.0, 0.0
    %v2459 = vsel %vm2423, 1.0, 0.0
    %v2460 = vsel %vm2424, 1.0, 0.0
    %v2461 = vsel %vm2425, 1.0, 0.0
    %v2462 = vsel %vm2426, 1.0, 0.0
    %v2463 = vsel %vm2427, 1.0, 0.0
    %v2464 = vsel %vm2428, 1.0, 0.0
    %v2465 = vsel %vm2429, 1.0, 0.0
    %v2466 = vsel %vm2430, 1.0, 0.0
    %v2467 = vsel %vm2431, 1.0, 0.0
    %v2468 = vsel %vm2432, 1.0, 0.0
    %v2469 = vsel %vm2433, 1.0, 0.0
    %v2470 = vsel %vm2434, 1.0, 0.0
    %v2471 = vsel %vm2435, 1.0, 0.0
    %v2472 = vsel %vm2436, 1.0, 0.0
    %v2473 = vsel %vm2437, 1.0, 0.0
    %v2474 = vsel %vm2438, 1.0, 0.0
    %v2475 = vsel %vm2439, 1.0, 0.0
    %v2476 = vsel %vm2440, 1.0, 0.0
    %v2477 = vsel %vm2441, 1.0, 0.0
    %v2478 = vsel %vm2442, 1.0, 0.0
    %v2479 = vsel %vm2443, 1.0, 0.0
    %v2480 = vsel %vm2444, 1.0, 0.0
    %v2481 = vsel %vm2445, 1.0, 0.0
    %v2482 = vsel %vm2446, 1.0, 0.0
    %v2483 = vsel %vm2447, 1.0, 0.0
    %v2484 = vsel %vm2448, 1.0, 0.0
    %v2485 = vsel %vm2449, 1.0, 0.0
    %v2486 = vsel %vm2450, 1.0, 0.0
    %v2487 = vsel %vm2451, 1.0, 0.0
    %v2488 = vsel %vm2452, 1.0, 0.0
    %v2489 = vsel %vm2453, 1.0, 0.0
    %v2490 = vsel %vm2454, 1.0, 0.0
    %v2491 = vsel %vm2455, 1.0, 0.0
    %v2492 = vpack.c.bf16 %v2457, %v2456
    %v2493 = vpack.c.bf16 %v2459, %v2458
    %v2494 = vpack.c.bf16 %v2461, %v2460
    %v2495 = vpack.c.bf16 %v2463, %v2462
    %v2496 = vpack.c.bf16 %v2465, %v2464
    %v2497 = vpack.c.bf16 %v2467, %v2466
    %v2498 = vpack.c.bf16 %v2469, %v2468
    %v2499 = vpack.c.bf16 %v2471, %v2470
    %v2500 = vpack.c.bf16 %v2473, %v2472
    %v2501 = vpack.c.bf16 %v2475, %v2474
    %v2502 = vpack.c.bf16 %v2477, %v2476
    %v2503 = vpack.c.bf16 %v2479, %v2478
    %v2504 = vpack.c.bf16 %v2481, %v2480
    %v2505 = vpack.c.bf16 %v2483, %v2482
    %v2506 = vpack.c.bf16 %v2485, %v2484
    %v2507 = vpack.c.bf16 %v2487, %v2486
    %v2508 = vpack.c.bf16 %v2489, %v2488
    %v2509 = vpack.c.bf16 %v2491, %v2490
    %vm2510 = vcmask 261120
    %v2512 = vsel %vm2510, %v2399, 0
    %2514 = vmatprep.subr.bf16.mxu0 0
    %2515 = vmatpush1.bf16.msra.mxu0 %v2499
    %2516 = vmatprep.subr.bf16.mxu0 0
    %2517 = vmatpush1.bf16.msra.mxu0 %v2498
    %2518 = vmatprep.subr.bf16.mxu0 0
    %2519 = vmatpush1.bf16.msra.mxu0 %v2497
    %2520 = vmatprep.subr.bf16.mxu0 0
    %2521 = vmatpush1.bf16.msra.mxu0 %v2496
    %2522 = vmatprep.subr.bf16.mxu0 0
    %2523 = vmatpush1.bf16.msra.mxu0 %v2495
    %2524 = vmatprep.subr.bf16.mxu0 0
    %2525 = vmatpush1.bf16.msra.mxu0 %v2494
    %2526 = vmatprep.subr.bf16.mxu0 0
    %2527 = vmatpush1.bf16.msra.mxu0 %v2493
    %2528 = vmatprep.subr.bf16.mxu0 0
    %2529 = vmatpush1.bf16.msra.mxu0 %v2492
    %2530 = vmatprep.subr.bf16.mxu0 0
    %2531 = vmatpush2.bf16.msra.mxu0 %v2507
    %2532 = vmatprep.subr.bf16.mxu0 0
    %2533 = vmatpush2.bf16.msra.mxu0 %v2506
    %2534 = vmatprep.subr.bf16.mxu0 0
    %2535 = vmatpush2.bf16.msra.mxu0 %v2505
    %2536 = vmatprep.subr.bf16.mxu0 0
    %2537 = vmatpush2.bf16.msra.mxu0 %v2504
    %2538 = vmatprep.subr.bf16.mxu0 0
    %2539 = vmatpush2.bf16.msra.mxu0 %v2503
    %2540 = vmatprep.subr.bf16.mxu0 0
    %2541 = vmatpush2.bf16.msra.mxu0 %v2502
    %2542 = vmatprep.subr.bf16.mxu0 0
    %2543 = vmatpush2.bf16.msra.mxu0 %v2501
    %2544 = vmatprep.subr.bf16.mxu0 0
    %2545 = vmatpush2.bf16.msra.mxu0 %v2500
    %2546 = vmatprep.mubr.bf16.mxu0 %v2398
    %2547 = vmatmul.mubr.bf16.gmra.mxu0 %v2397
    %v2548 = vpop.f32.mrf.mxu0
    %v2549 = vadd.f32 0.0, %v2548
    %v2550 = vpop.f32.mrf.mxu0
    %v2551 = vpop.f32.mrf.mxu0
    %v2552 = vadd.f32 0.0, %v2551
    %v2553 = vpop.f32.mrf.mxu0
    %2554 = vdwg.mxu0
    %2555 = vmatprep.subr.bf16.mxu0 0
    %2556 = vmatpush1.bf16.msra.mxu0 0
    %2557 = vmatprep.subr.bf16.mxu0 0
    %2558 = vmatpush1.bf16.msra.mxu0 0
    %2559 = vmatprep.subr.bf16.mxu0 0
    %2560 = vmatpush1.bf16.msra.mxu0 0
    %2561 = vmatprep.subr.bf16.mxu0 0
    %2562 = vmatpush1.bf16.msra.mxu0 0
    %2563 = vmatprep.subr.bf16.mxu0 0
    %2564 = vmatpush1.bf16.msra.mxu0 0
    %2565 = vmatprep.subr.bf16.mxu0 0
    %2566 = vmatpush1.bf16.msra.mxu0 0
    %2567 = vmatprep.subr.bf16.mxu0 0
    %2568 = vmatpush1.bf16.msra.mxu0 %v2509
    %2569 = vmatprep.subr.bf16.mxu0 0
    %2570 = vmatpush1.bf16.msra.mxu0 %v2508
    %2571 = vmatprep.subr.bf16.mxu0 0
    %2572 = vmatpush2.bf16.msra.mxu0 0
    %2573 = vmatprep.subr.bf16.mxu0 0
    %2574 = vmatpush2.bf16.msra.mxu0 0
    %2575 = vmatprep.subr.bf16.mxu0 0
    %2576 = vmatpush2.bf16.msra.mxu0 0
    %2577 = vmatprep.subr.bf16.mxu0 0
    %2578 = vmatpush2.bf16.msra.mxu0 0
    %2579 = vmatprep.subr.bf16.mxu0 0
    %2580 = vmatpush2.bf16.msra.mxu0 0
    %2581 = vmatprep.subr.bf16.mxu0 0
    %2582 = vmatpush2.bf16.msra.mxu0 0
    %2583 = vmatprep.subr.bf16.mxu0 0
    %2584 = vmatpush2.bf16.msra.mxu0 0
    %2585 = vmatprep.subr.bf16.mxu0 0
    %2586 = vmatpush2.bf16.msra.mxu0 0
    %2587 = vmatprep.mubr.bf16.mxu0 0
    %2588 = vmatmul.mubr.bf16.gmra.mxu0 %v2512
    %v2589 = vpop.f32.mrf.mxu0
    %v2590 = vadd.f32 %v2549, %v2589
    %v2591 = vpop.f32.mrf.mxu0
    %v2592 = vpop.f32.mrf.mxu0
    %v2593 = vadd.f32 %v2552, %v2592
    %v2594 = vpop.f32.mrf.mxu0
    %2595 = vdwg.mxu0
    %s2596 = smul.u32 %s2405, 4
    %s2597 = smul.addr %s2596, 4
    %s2598 = scalar_lea.vmem %s7, %s2597
    %v2599 = vld [vmem:[%s2598] sm:$0xf]
    %v2600 = vld [vmem:[%s2598 + $0x4] sm:$0xf]
    %v2601 = vld [vmem:[%s2598 + $0x8] sm:$0xf]
    %v2602 = vld [vmem:[%s2598 + $0xc] sm:$0xf]
    %v2603 = vpack.c.bf16 %v2593, %v2590
    %v2608 = vunpack.c.l.b16 %v2599
    %v2609 = vunpack.c.l.b16 %v2600
    %v2610 = vunpack.c.l.b16 %v2601
    %v2611 = vunpack.c.l.b16 %v2602
    %v2612 = vpack.c.b16 %v2609, %v2608
    %v2613 = vpack.c.b16 %v2611, %v2610
    %vm2614 = vcmask 130048
    %v2616 = vsel %vm2614, %v2612, 0
    %v2619 = vsel %vm2614, %v2613, 0
    %2621 = vmatprep.subr.bf16.mxu0 0
    %2622 = vmatpush1.bf16.msra.mxu0 0
    %2623 = vmatprep.subr.bf16.mxu0 0
    %2624 = vmatpush1.bf16.msra.mxu0 0
    %2625 = vmatprep.subr.bf16.mxu0 0
    %2626 = vmatpush1.bf16.msra.mxu0 0
    %2627 = vmatprep.subr.bf16.mxu0 0
    %2628 = vmatpush1.bf16.msra.mxu0 0
    %2629 = vmatprep.subr.bf16.mxu0 0
    %2630 = vmatpush1.bf16.msra.mxu0 0
    %2631 = vmatprep.subr.bf16.mxu0 0
    %2632 = vmatpush1.bf16.msra.mxu0 0
    %2633 = vmatprep.subr.bf16.mxu0 0
    %2634 = vmatpush1.bf16.msra.mxu0 0
    %2635 = vmatprep.subr.bf16.mxu0 0
    %2636 = vmatpush1.bf16.msra.mxu0 %v2603
    %2637 = vmatprep.subr.bf16.mxu0 0
    %2638 = vmatpush2.bf16.msra.mxu0 0
    %2639 = vmatprep.subr.bf16.mxu0 0
    %2640 = vmatpush2.bf16.msra.mxu0 0
    %2641 = vmatprep.subr.bf16.mxu0 0
    %2642 = vmatpush2.bf16.msra.mxu0 0
    %2643 = vmatprep.subr.bf16.mxu0 0
    %2644 = vmatpush2.bf16.msra.mxu0 0
    %2645 = vmatprep.subr.bf16.mxu0 0
    %2646 = vmatpush2.bf16.msra.mxu0 0
    %2647 = vmatprep.subr.bf16.mxu0 0
    %2648 = vmatpush2.bf16.msra.mxu0 0
    %2649 = vmatprep.subr.bf16.mxu0 0
    %2650 = vmatpush2.bf16.msra.mxu0 0
    %2651 = vmatprep.subr.bf16.mxu0 0
    %2652 = vmatpush2.bf16.msra.mxu0 0
    %2653 = vmatprep.mubr.bf16.mxu0 0
    %2654 = vmatmul.mubr.bf16.gmra.mxu0 %v2616
    %v2655 = vpop.f32.mrf.mxu0
    %v2656 = vadd.f32 0.0, %v2655
    %v2657 = vpop.f32.mrf.mxu0
    %v2658 = vpop.f32.mrf.mxu0
    %v2659 = vadd.f32 0.0, %v2658
    %v2660 = vpop.f32.mrf.mxu0
    %2661 = vmatprep.mubr.bf16.mxu0 0
    %2662 = vmatmul.mubr.bf16.gmra.mxu0 %v2619
    %v2663 = vpop.f32.mrf.mxu0
    %v2664 = vadd.f32 0.0, %v2663
    %v2665 = vpop.f32.mrf.mxu0
    %v2666 = vpop.f32.mrf.mxu0
    %v2667 = vadd.f32 0.0, %v2666
    %v2668 = vpop.f32.mrf.mxu0
    %2669 = vdwg.mxu0
    %v2670 = vadd.f32 %v2410, %v2656
    %v2671 = vadd.f32 %v2411, %v2659
    %v2672 = vadd.f32 %v2412, %v2664
    %v2673 = vadd.f32 %v2413, %v2667
  $region73: #{vae_enc_forward.1} parent=0 // loop_footer
    %s2409 = sadd.s32 1, %s2405
  $region74: #{vae_enc_forward.1} parent=0 // loop_footer_branch
    %2404 = sbr.rel target = $region70
  $region75: #{vae_enc_forward.1} parent=0 // loop_exit
    _
  %2675 = vset.pattern.permute.xlu0 0
  %2676 = vperm.xlu0 %2675, %v2400
  %v2677 = vpop.permute.xlu0 %2676
  %2680 = vset.pattern.permute.xlu0 0
  %2681 = vperm.xlu0 %2680, %v2401
  %v2682 = vpop.permute.xlu0 %2681
  %2685 = vset.pattern.permute.xlu0 0
  %2686 = vperm.xlu0 %2685, %v2402
  %v2687 = vpop.permute.xlu0 %2686
  %2690 = vset.pattern.permute.xlu0 0
  %2691 = vperm.xlu0 %2690, %v2403
  %v2692 = vpop.permute.xlu0 %2691
  %v2694 = vadd.f32 %v2410, %v2677
  %v2695 = vadd.f32 %v2411, %v2682
  %v2696 = vadd.f32 %v2412, %v2687
  %v2697 = vadd.f32 %v2413, %v2692
  %v2698 = vmax.f32 %v2694, 0.0
  %v2699 = vmax.f32 %v2695, 0.0
  %v2700 = vmax.f32 %v2696, 0.0
  %v2701 = vmax.f32 %v2697, 0.0
  %v2702 = vld [vmem:[%s11] sm:$0xff]
  %v2703 = vld [vmem:[%s11 + $0x8] sm:$0xff]
  %v2704 = vld [vmem:[%s11 + $0x10] sm:$0xff]
  %v2705 = vld [vmem:[%s11 + $0x18] sm:$0xff]
  %v2706 = vld [vmem:[%s11 + $0x20] sm:$0xff]
  %v2707 = vld [vmem:[%s11 + $0x28] sm:$0xff]
  %v2708 = vld [vmem:[%s11 + $0x30] sm:$0xff]
  %v2709 = vld [vmem:[%s11 + $0x38] sm:$0xff]
  loop: start=0, step=1, limit=9
  $region76: #{vae_enc_forward.1} parent=0 // loop_pre_header
    _
  $region77: #{vae_enc_forward.1} parent=0 // loop_header
    %s2711 = sphi 0, %s2715
    %p2712 = scmp.ge.s32.totalorder %s2711, 9
    %v2716 = vphi 0.0, %v2986
    %v2717 = vphi 0.0, %v2987
    %v2718 = vphi 0.0, %v2988
    %v2719 = vphi 0.0, %v2989
    %v2720 = vphi 0.0, %v2990
    %v2721 = vphi 0.0, %v2991
    %v2722 = vphi 0.0, %v2992
    %v2723 = vphi 0.0, %v2993
  $region78: #{vae_enc_forward.1} parent=0 // loop_header_branch
    %2714 = sbr.rel (%p2712) target = $region82
  $region79: #{vae_enc_forward.1} parent=0 // loop_body
    %s2724 = scalar_lea.vmem %s9, %s2711
    %v2725 = vld [vmem:[%s2724] sm:$0x1]
    %v2726 = vlaneseq
    %v2727 = vshrl.u32 %v2726, 7
    %v2728 = vsub.s32 0, %v2727
    %v2729 = vrot.slane %v2725, %v2728
    %vm2730 = vcmp.eq.s32.totalorder %v597, %v2729
    %vm2731 = vcmp.eq.s32.totalorder %v598, %v2729
    %vm2732 = vcmp.eq.s32.totalorder %v599, %v2729
    %vm2733 = vcmp.eq.s32.totalorder %v600, %v2729
    %vm2734 = vcmp.eq.s32.totalorder %v601, %v2729
    %vm2735 = vcmp.eq.s32.totalorder %v602, %v2729
    %vm2736 = vcmp.eq.s32.totalorder %v603, %v2729
    %vm2737 = vcmp.eq.s32.totalorder %v604, %v2729
    %vm2738 = vcmp.eq.s32.totalorder %v605, %v2729
    %v2739 = vsel %vm2730, 1.0, 0.0
    %v2740 = vsel %vm2731, 1.0, 0.0
    %v2741 = vsel %vm2732, 1.0, 0.0
    %v2742 = vsel %vm2733, 1.0, 0.0
    %v2743 = vsel %vm2734, 1.0, 0.0
    %v2744 = vsel %vm2735, 1.0, 0.0
    %v2745 = vsel %vm2736, 1.0, 0.0
    %v2746 = vsel %vm2737, 1.0, 0.0
    %v2747 = vsel %vm2738, 1.0, 0.0
    %vm2748 = vcmask 588800
    %v2750 = vsel %vm2748, %v2698, 0
    %v2753 = vsel %vm2748, %v2699, 0
    %v2756 = vsel %vm2748, %v2700, 0
    %v2759 = vsel %vm2748, %v2701, 0
    %2761 = vmatprep.subr.mxu0 0.0
    %2762 = vmatpush1.msra.mxu0 0.0
    %2763 = vmatprep.subr.mxu0 0.0
    %2764 = vmatpush1.msra.mxu0 0.0
    %2765 = vmatprep.subr.mxu0 0.0
    %2766 = vmatpush1.msra.mxu0 0.0
    %2767 = vmatprep.subr.mxu0 0.0
    %2768 = vmatpush1.msra.mxu0 0.0
    %2769 = vmatprep.subr.mxu0 0.0
    %2770 = vmatpush1.msra.mxu0 0.0
    %2771 = vmatprep.subr.mxu0 0.0
    %2772 = vmatpush1.msra.mxu0 0.0
    %2773 = vmatprep.subr.mxu0 0.0
    %2774 = vmatpush1.msra.mxu0 0.0
    %2775 = vmatprep.subr.mxu0 0.0
    %2776 = vmatpush1.msra.mxu0 %v2747
    %2777 = vmatprep.subr.mxu0 0.0
    %2778 = vmatpush1.msra.mxu0 %v2746
    %2779 = vmatprep.subr.mxu0 0.0
    %2780 = vmatpush1.msra.mxu0 %v2745
    %2781 = vmatprep.subr.mxu0 0.0
    %2782 = vmatpush1.msra.mxu0 %v2744
    %2783 = vmatprep.subr.mxu0 0.0
    %2784 = vmatpush1.msra.mxu0 %v2743
    %2785 = vmatprep.subr.mxu0 0.0
    %2786 = vmatpush1.msra.mxu0 %v2742
    %2787 = vmatprep.subr.mxu0 0.0
    %2788 = vmatpush1.msra.mxu0 %v2741
    %2789 = vmatprep.subr.mxu0 0.0
    %2790 = vmatpush1.msra.mxu0 %v2740
    %2791 = vmatprep.subr.mxu0 0.0
    %2792 = vmatpush1.msra.mxu0 %v2739
    %2793 = vmatprep.subr.mxu0 0.0
    %2794 = vmatpush2.msra.mxu0 0.0
    %2795 = vmatprep.subr.mxu0 0.0
    %2796 = vmatpush2.msra.mxu0 0.0
    %2797 = vmatprep.subr.mxu0 0.0
    %2798 = vmatpush2.msra.mxu0 0.0
    %2799 = vmatprep.subr.mxu0 0.0
    %2800 = vmatpush2.msra.mxu0 0.0
    %2801 = vmatprep.subr.mxu0 0.0
    %2802 = vmatpush2.msra.mxu0 0.0
    %2803 = vmatprep.subr.mxu0 0.0
    %2804 = vmatpush2.msra.mxu0 0.0
    %2805 = vmatprep.subr.mxu0 0.0
    %2806 = vmatpush2.msra.mxu0 0.0
    %2807 = vmatprep.subr.mxu0 0.0
    %2808 = vmatpush2.msra.mxu0 0.0
    %2809 = vmatprep.subr.mxu0 0.0
    %2810 = vmatpush2.msra.mxu0 0.0
    %2811 = vmatprep.subr.mxu0 0.0
    %2812 = vmatpush2.msra.mxu0 0.0
    %2813 = vmatprep.subr.mxu0 0.0
    %2814 = vmatpush2.msra.mxu0 0.0
    %2815 = vmatprep.subr.mxu0 0.0
    %2816 = vmatpush2.msra.mxu0 0.0
    %2817 = vmatprep.subr.mxu0 0.0
    %2818 = vmatpush2.msra.mxu0 0.0
    %2819 = vmatprep.subr.mxu0 0.0
    %2820 = vmatpush2.msra.mxu0 0.0
    %2821 = vmatprep.subr.mxu0 0.0
    %2822 = vmatpush2.msra.mxu0 0.0
    %2823 = vmatprep.subr.mxu0 0.0
    %2824 = vmatpush2.msra.mxu0 0.0
    %2825 = vmatprep.mubr.f32.mxu0 0.0
    %2826 = vmatmul.mubr.f32.gmra.mxu0 %v2750
    %v2827 = vpop.f32.mrf.mxu0
    %v2828 = vadd.f32 0.0, %v2827
    %v2829 = vpop.f32.mrf.mxu0
    %2830 = vmatprep.mubr.f32.mxu0 0.0
    %2831 = vmatmul.mubr.f32.gmra.mxu0 %v2753
    %v2832 = vpop.f32.mrf.mxu0
    %v2833 = vadd.f32 0.0, %v2832
    %v2834 = vpop.f32.mrf.mxu0
    %2835 = vmatprep.mubr.f32.mxu0 0.0
    %2836 = vmatmul.mubr.f32.gmra.mxu0 %v2756
    %v2837 = vpop.f32.mrf.mxu0
    %v2838 = vadd.f32 0.0, %v2837
    %v2839 = vpop.f32.mrf.mxu0
    %2840 = vmatprep.mubr.f32.mxu0 0.0
    %2841 = vmatmul.mubr.f32.gmra.mxu0 %v2759
    %v2842 = vpop.f32.mrf.mxu0
    %v2843 = vadd.f32 0.0, %v2842
    %v2844 = vpop.f32.mrf.mxu0
    %2845 = vdwg.mxu0
    %s2846 = smul.u32 %s2711, 64
    %s2847 = scalar_lea.vmem %s10, %s2846
    %v2848 = vld [vmem:[%s2847] sm:$0xff]
    %v2849 = vld [vmem:[%s2847 + $0x8] sm:$0xff]
    %v2850 = vld [vmem:[%s2847 + $0x10] sm:$0xff]
    %v2851 = vld [vmem:[%s2847 + $0x18] sm:$0xff]
    %v2852 = vld [vmem:[%s2847 + $0x20] sm:$0xff]
    %v2853 = vld [vmem:[%s2847 + $0x28] sm:$0xff]
    %v2854 = vld [vmem:[%s2847 + $0x30] sm:$0xff]
    %v2855 = vld [vmem:[%s2847 + $0x38] sm:$0xff]
    %vm2856 = vcmask 261120
    %v2858 = vsel %vm2856, %v2848, 0
    %v2861 = vsel %vm2856, %v2849, 0
    %v2864 = vsel %vm2856, %v2850, 0
    %v2867 = vsel %vm2856, %v2851, 0
    %v2870 = vsel %vm2856, %v2852, 0
    %v2873 = vsel %vm2856, %v2853, 0
    %v2876 = vsel %vm2856, %v2854, 0
    %v2879 = vsel %vm2856, %v2855, 0
    %2881 = vmatprep.subr.mxu0 0.0
    %2882 = vmatpush1.msra.mxu0 0.0
    %2883 = vmatprep.subr.mxu0 0.0
    %2884 = vmatpush1.msra.mxu0 0.0
    %2885 = vmatprep.subr.mxu0 0.0
    %2886 = vmatpush1.msra.mxu0 0.0
    %2887 = vmatprep.subr.mxu0 0.0
    %2888 = vmatpush1.msra.mxu0 0.0
    %2889 = vmatprep.subr.mxu0 0.0
    %2890 = vmatpush1.msra.mxu0 0.0
    %2891 = vmatprep.subr.mxu0 0.0
    %2892 = vmatpush1.msra.mxu0 0.0
    %2893 = vmatprep.subr.mxu0 0.0
    %2894 = vmatpush1.msra.mxu0 0.0
    %2895 = vmatprep.subr.mxu0 0.0
    %2896 = vmatpush1.msra.mxu0 0.0
    %2897 = vmatprep.subr.mxu0 0.0
    %2898 = vmatpush1.msra.mxu0 0.0
    %2899 = vmatprep.subr.mxu0 0.0
    %2900 = vmatpush1.msra.mxu0 0.0
    %2901 = vmatprep.subr.mxu0 0.0
    %2902 = vmatpush1.msra.mxu0 0.0
    %2903 = vmatprep.subr.mxu0 0.0
    %2904 = vmatpush1.msra.mxu0 0.0
    %2905 = vmatprep.subr.mxu0 0.0
    %2906 = vmatpush1.msra.mxu0 %v2843
    %2907 = vmatprep.subr.mxu0 0.0
    %2908 = vmatpush1.msra.mxu0 %v2838
    %2909 = vmatprep.subr.mxu0 0.0
    %2910 = vmatpush1.msra.mxu0 %v2833
    %2911 = vmatprep.subr.mxu0 0.0
    %2912 = vmatpush1.msra.mxu0 %v2828
    %2913 = vmatprep.subr.mxu0 0.0
    %2914 = vmatpush2.msra.mxu0 0.0
    %2915 = vmatprep.subr.mxu0 0.0
    %2916 = vmatpush2.msra.mxu0 0.0
    %2917 = vmatprep.subr.mxu0 0.0
    %2918 = vmatpush2.msra.mxu0 0.0
    %2919 = vmatprep.subr.mxu0 0.0
    %2920 = vmatpush2.msra.mxu0 0.0
    %2921 = vmatprep.subr.mxu0 0.0
    %2922 = vmatpush2.msra.mxu0 0.0
    %2923 = vmatprep.subr.mxu0 0.0
    %2924 = vmatpush2.msra.mxu0 0.0
    %2925 = vmatprep.subr.mxu0 0.0
    %2926 = vmatpush2.msra.mxu0 0.0
    %2927 = vmatprep.subr.mxu0 0.0
    %2928 = vmatpush2.msra.mxu0 0.0
    %2929 = vmatprep.subr.mxu0 0.0
    %2930 = vmatpush2.msra.mxu0 0.0
    %2931 = vmatprep.subr.mxu0 0.0
    %2932 = vmatpush2.msra.mxu0 0.0
    %2933 = vmatprep.subr.mxu0 0.0
    %2934 = vmatpush2.msra.mxu0 0.0
    %2935 = vmatprep.subr.mxu0 0.0
    %2936 = vmatpush2.msra.mxu0 0.0
    %2937 = vmatprep.subr.mxu0 0.0
    %2938 = vmatpush2.msra.mxu0 0.0
    %2939 = vmatprep.subr.mxu0 0.0
    %2940 = vmatpush2.msra.mxu0 0.0
    %2941 = vmatprep.subr.mxu0 0.0
    %2942 = vmatpush2.msra.mxu0 0.0
    %2943 = vmatprep.subr.mxu0 0.0
    %2944 = vmatpush2.msra.mxu0 0.0
    %2945 = vmatprep.mubr.f32.mxu0 0.0
    %2946 = vmatmul.mubr.f32.gmra.mxu0 %v2858
    %v2947 = vpop.f32.mrf.mxu0
    %v2948 = vadd.f32 0.0, %v2947
    %v2949 = vpop.f32.mrf.mxu0
    %2950 = vmatprep.mubr.f32.mxu0 0.0
    %2951 = vmatmul.mubr.f32.gmra.mxu0 %v2861
    %v2952 = vpop.f32.mrf.mxu0
    %v2953 = vadd.f32 0.0, %v2952
    %v2954 = vpop.f32.mrf.mxu0
    %2955 = vmatprep.mubr.f32.mxu0 0.0
    %2956 = vmatmul.mubr.f32.gmra.mxu0 %v2864
    %v2957 = vpop.f32.mrf.mxu0
    %v2958 = vadd.f32 0.0, %v2957
    %v2959 = vpop.f32.mrf.mxu0
    %2960 = vmatprep.mubr.f32.mxu0 0.0
    %2961 = vmatmul.mubr.f32.gmra.mxu0 %v2867
    %v2962 = vpop.f32.mrf.mxu0
    %v2963 = vadd.f32 0.0, %v2962
    %v2964 = vpop.f32.mrf.mxu0
    %2965 = vmatprep.mubr.f32.mxu0 0.0
    %2966 = vmatmul.mubr.f32.gmra.mxu0 %v2870
    %v2967 = vpop.f32.mrf.mxu0
    %v2968 = vadd.f32 0.0, %v2967
    %v2969 = vpop.f32.mrf.mxu0
    %2970 = vmatprep.mubr.f32.mxu0 0.0
    %2971 = vmatmul.mubr.f32.gmra.mxu0 %v2873
    %v2972 = vpop.f32.mrf.mxu0
    %v2973 = vadd.f32 0.0, %v2972
    %v2974 = vpop.f32.mrf.mxu0
    %2975 = vmatprep.mubr.f32.mxu0 0.0
    %2976 = vmatmul.mubr.f32.gmra.mxu0 %v2876
    %v2977 = vpop.f32.mrf.mxu0
    %v2978 = vadd.f32 0.0, %v2977
    %v2979 = vpop.f32.mrf.mxu0
    %2980 = vmatprep.mubr.f32.mxu0 0.0
    %2981 = vmatmul.mubr.f32.gmra.mxu0 %v2879
    %v2982 = vpop.f32.mrf.mxu0
    %v2983 = vadd.f32 0.0, %v2982
    %v2984 = vpop.f32.mrf.mxu0
    %2985 = vdwg.mxu0
    %v2986 = vadd.f32 %v2716, %v2948
    %v2987 = vadd.f32 %v2717, %v2953
    %v2988 = vadd.f32 %v2718, %v2958
    %v2989 = vadd.f32 %v2719, %v2963
    %v2990 = vadd.f32 %v2720, %v2968
    %v2991 = vadd.f32 %v2721, %v2973
    %v2992 = vadd.f32 %v2722, %v2978
    %v2993 = vadd.f32 %v2723, %v2983
  $region80: #{vae_enc_forward.1} parent=0 // loop_footer
    %s2715 = sadd.s32 1, %s2711
  $region81: #{vae_enc_forward.1} parent=0 // loop_footer_branch
    %2710 = sbr.rel target = $region77
  $region82: #{vae_enc_forward.1} parent=0 // loop_exit
    _
  %2995 = vset.pattern.permute.xlu0 0
  %2996 = vperm.xlu0 %2995, %v2702
  %v2997 = vpop.permute.xlu0 %2996
  %3000 = vset.pattern.permute.xlu0 0
  %3001 = vperm.xlu0 %3000, %v2703
  %v3002 = vpop.permute.xlu0 %3001
  %3005 = vset.pattern.permute.xlu0 0
  %3006 = vperm.xlu0 %3005, %v2704
  %v3007 = vpop.permute.xlu0 %3006
  %3010 = vset.pattern.permute.xlu0 0
  %3011 = vperm.xlu0 %3010, %v2705
  %v3012 = vpop.permute.xlu0 %3011
  %3015 = vset.pattern.permute.xlu0 0
  %3016 = vperm.xlu0 %3015, %v2706
  %v3017 = vpop.permute.xlu0 %3016
  %3020 = vset.pattern.permute.xlu0 0
  %3021 = vperm.xlu0 %3020, %v2707
  %v3022 = vpop.permute.xlu0 %3021
  %3025 = vset.pattern.permute.xlu0 0
  %3026 = vperm.xlu0 %3025, %v2708
  %v3027 = vpop.permute.xlu0 %3026
  %3030 = vset.pattern.permute.xlu0 0
  %3031 = vperm.xlu0 %3030, %v2709
  %v3032 = vpop.permute.xlu0 %3031
  %v3034 = vadd.f32 %v2716, %v2997
  %v3035 = vadd.f32 %v2717, %v3002
  %v3036 = vadd.f32 %v2718, %v3007
  %v3037 = vadd.f32 %v2719, %v3012
  %v3038 = vadd.f32 %v2720, %v3017
  %v3039 = vadd.f32 %v2721, %v3022
  %v3040 = vadd.f32 %v2722, %v3027
  %v3041 = vadd.f32 %v2723, %v3032
  %3042 = vxpose.xlu0.b32.start [1/16] %v3034, 128
  %3043 = vxpose.xlu0.b32.cont [2/16] %v3035, 128
  %3044 = vxpose.xlu0.b32.cont [3/16] %v3036, 128
  %3045 = vxpose.xlu0.b32.cont [4/16] %v3037, 128
  %3046 = vxpose.xlu0.b32.cont [5/16] %v3038, 128
  %3047 = vxpose.xlu0.b32.cont [6/16] %v3039, 128
  %3048 = vxpose.xlu0.b32.cont [7/16] %v3040, 128
  %3049 = vxpose.xlu0.b32.cont [8/16] %v3041, 128
  %3050 = vxpose.xlu0.b32.cont [9/16] 0.0, 128
  %3051 = vxpose.xlu0.b32.cont [10/16] 0.0, 128
  %3052 = vxpose.xlu0.b32.cont [11/16] 0.0, 128
  %3053 = vxpose.xlu0.b32.cont [12/16] 0.0, 128
  %3054 = vxpose.xlu0.b32.cont [13/16] 0.0, 128
  %3055 = vxpose.xlu0.b32.cont [14/16] 0.0, 128
  %3056 = vxpose.xlu0.b32.cont [15/16] 0.0, 128
  %3057 = vxpose.xlu0.b32.end [16/16] 0.0, 128
  %v3058 = vpop.trf.xlu0
  %v3059 = vpop.trf.xlu0
  %v3060 = vpop.trf.xlu0
  %v3061 = vpop.trf.xlu0
  %v3062 = vpop.trf.xlu0
  %v3063 = vpop.trf.xlu0
  %v3064 = vpop.trf.xlu0
  %v3065 = vpop.trf.xlu0
  %v3066 = vpop.trf.xlu0
  %v3067 = vpop.trf.xlu0
  %v3068 = vpop.trf.xlu0
  %v3069 = vpop.trf.xlu0
  %v3070 = vpop.trf.xlu0
  %v3071 = vpop.trf.xlu0
  %v3072 = vpop.trf.xlu0
  %v3073 = vpop.trf.xlu0
  %v3074 = vld [vmem:[%s12] sm:$0xff]
  %v3075 = vld [vmem:[%s12 + $0x8] sm:$0xff]
  %v3076 = vld [vmem:[%s12 + $0x10] sm:$0xff]
  %v3077 = vld [vmem:[%s12 + $0x18] sm:$0xff]
  %v3078 = vld [vmem:[%s12 + $0x20] sm:$0xff]
  %v3079 = vld [vmem:[%s12 + $0x28] sm:$0xff]
  %v3080 = vld [vmem:[%s12 + $0x30] sm:$0xff]
  %v3081 = vld [vmem:[%s12 + $0x38] sm:$0xff]
  %v3082 = vld [vmem:[%s12 + $0x40] sm:$0xff]
  %v3083 = vld [vmem:[%s12 + $0x48] sm:$0xff]
  %v3084 = vld [vmem:[%s12 + $0x50] sm:$0xff]
  %v3085 = vld [vmem:[%s12 + $0x58] sm:$0xff]
  %v3086 = vld [vmem:[%s12 + $0x60] sm:$0xff]
  %v3087 = vld [vmem:[%s12 + $0x68] sm:$0xff]
  %v3088 = vld [vmem:[%s12 + $0x70] sm:$0xff]
  %v3089 = vld [vmem:[%s12 + $0x78] sm:$0xff]
  %s3090 = scalar_lea.vmem %s12, 128
  %v3091 = vld [vmem:[%s3090] sm:$0xff]
  %v3092 = vld [vmem:[%s3090 + $0x8] sm:$0xff]
  %v3093 = vld [vmem:[%s3090 + $0x10] sm:$0xff]
  %v3094 = vld [vmem:[%s3090 + $0x18] sm:$0xff]
  %v3095 = vld [vmem:[%s3090 + $0x20] sm:$0xff]
  %v3096 = vld [vmem:[%s3090 + $0x28] sm:$0xff]
  %v3097 = vld [vmem:[%s3090 + $0x30] sm:$0xff]
  %v3098 = vld [vmem:[%s3090 + $0x38] sm:$0xff]
  %v3099 = vld [vmem:[%s3090 + $0x40] sm:$0xff]
  %v3100 = vld [vmem:[%s3090 + $0x48] sm:$0xff]
  %v3101 = vld [vmem:[%s3090 + $0x50] sm:$0xff]
  %v3102 = vld [vmem:[%s3090 + $0x58] sm:$0xff]
  %v3103 = vld [vmem:[%s3090 + $0x60] sm:$0xff]
  %v3104 = vld [vmem:[%s3090 + $0x68] sm:$0xff]
  %v3105 = vld [vmem:[%s3090 + $0x70] sm:$0xff]
  %v3106 = vld [vmem:[%s3090 + $0x78] sm:$0xff]
  %v3108 = vrot.slane %v3058, 2
  %vm3109 = vcmask 523264
  %v3110 = vsel %vm3109, %v3108, 0
  %3112 = vmatprep.subr.mxu0 0.0
  %3113 = vmatpush1.msra.mxu0 0.0
  %3114 = vmatprep.subr.mxu0 0.0
  %3115 = vmatpush1.msra.mxu0 0.0
  %3116 = vmatprep.subr.mxu0 0.0
  %3117 = vmatpush1.msra.mxu0 0.0
  %3118 = vmatprep.subr.mxu0 0.0
  %3119 = vmatpush1.msra.mxu0 0.0
  %3120 = vmatprep.subr.mxu0 0.0
  %3121 = vmatpush1.msra.mxu0 0.0
  %3122 = vmatprep.subr.mxu0 0.0
  %3123 = vmatpush1.msra.mxu0 0.0
  %3124 = vmatprep.subr.mxu0 0.0
  %3125 = vmatpush1.msra.mxu0 0.0
  %3126 = vmatprep.subr.mxu0 0.0
  %3127 = vmatpush1.msra.mxu0 0.0
  %3128 = vmatprep.subr.mxu0 %v3106
  %3129 = vmatpush1.msra.mxu0 %v3105
  %3130 = vmatprep.subr.mxu0 %v3104
  %3131 = vmatpush1.msra.mxu0 %v3103
  %3132 = vmatprep.subr.mxu0 %v3102
  %3133 = vmatpush1.msra.mxu0 %v3101
  %3134 = vmatprep.subr.mxu0 %v3100
  %3135 = vmatpush1.msra.mxu0 %v3099
  %3136 = vmatprep.subr.mxu0 %v3098
  %3137 = vmatpush1.msra.mxu0 %v3097
  %3138 = vmatprep.subr.mxu0 %v3096
  %3139 = vmatpush1.msra.mxu0 %v3095
  %3140 = vmatprep.subr.mxu0 %v3094
  %3141 = vmatpush1.msra.mxu0 %v3093
  %3142 = vmatprep.subr.mxu0 %v3092
  %3143 = vmatpush1.msra.mxu0 %v3091
  %3144 = vmatprep.subr.mxu0 0.0
  %3145 = vmatpush2.msra.mxu0 0.0
  %3146 = vmatprep.subr.mxu0 0.0
  %3147 = vmatpush2.msra.mxu0 0.0
  %3148 = vmatprep.subr.mxu0 0.0
  %3149 = vmatpush2.msra.mxu0 0.0
  %3150 = vmatprep.subr.mxu0 0.0
  %3151 = vmatpush2.msra.mxu0 0.0
  %3152 = vmatprep.subr.mxu0 0.0
  %3153 = vmatpush2.msra.mxu0 0.0
  %3154 = vmatprep.subr.mxu0 0.0
  %3155 = vmatpush2.msra.mxu0 0.0
  %3156 = vmatprep.subr.mxu0 0.0
  %3157 = vmatpush2.msra.mxu0 0.0
  %3158 = vmatprep.subr.mxu0 0.0
  %3159 = vmatpush2.msra.mxu0 0.0
  %3160 = vmatprep.subr.mxu0 0.0
  %3161 = vmatpush2.msra.mxu0 0.0
  %3162 = vmatprep.subr.mxu0 0.0
  %3163 = vmatpush2.msra.mxu0 0.0
  %3164 = vmatprep.subr.mxu0 0.0
  %3165 = vmatpush2.msra.mxu0 0.0
  %3166 = vmatprep.subr.mxu0 0.0
  %3167 = vmatpush2.msra.mxu0 0.0
  %3168 = vmatprep.subr.mxu0 0.0
  %3169 = vmatpush2.msra.mxu0 0.0
  %3170 = vmatprep.subr.mxu0 0.0
  %3171 = vmatpush2.msra.mxu0 0.0
  %3172 = vmatprep.subr.mxu0 0.0
  %3173 = vmatpush2.msra.mxu0 0.0
  %3174 = vmatprep.subr.mxu0 0.0
  %3175 = vmatpush2.msra.mxu0 0.0
  %3176 = vmatprep.mubr.f32.mxu0 0.0
  %3177 = vmatmul.mubr.f32.gmra.mxu0 %v3110
  %v3178 = vpop.f32.mrf.mxu0
  %v3179 = vadd.f32 0.0, %v3178
  %v3180 = vpop.f32.mrf.mxu0
  %v3181 = vadd.f32 0.0, %v3180
  %3182 = vdwg.mxu0
  %v3183 = vsel %vm3109, %v3058, 0
  %3185 = vmatprep.subr.mxu0 0.0
  %3186 = vmatpush1.msra.mxu0 0.0
  %3187 = vmatprep.subr.mxu0 0.0
  %3188 = vmatpush1.msra.mxu0 0.0
  %3189 = vmatprep.subr.mxu0 0.0
  %3190 = vmatpush1.msra.mxu0 0.0
  %3191 = vmatprep.subr.mxu0 0.0
  %3192 = vmatpush1.msra.mxu0 0.0
  %3193 = vmatprep.subr.mxu0 0.0
  %3194 = vmatpush1.msra.mxu0 0.0
  %3195 = vmatprep.subr.mxu0 0.0
  %3196 = vmatpush1.msra.mxu0 0.0
  %3197 = vmatprep.subr.mxu0 0.0
  %3198 = vmatpush1.msra.mxu0 0.0
  %3199 = vmatprep.subr.mxu0 0.0
  %3200 = vmatpush1.msra.mxu0 0.0
  %3201 = vmatprep.subr.mxu0 %v3089
  %3202 = vmatpush1.msra.mxu0 %v3088
  %3203 = vmatprep.subr.mxu0 %v3087
  %3204 = vmatpush1.msra.mxu0 %v3086
  %3205 = vmatprep.subr.mxu0 %v3085
  %3206 = vmatpush1.msra.mxu0 %v3084
  %3207 = vmatprep.subr.mxu0 %v3083
  %3208 = vmatpush1.msra.mxu0 %v3082
  %3209 = vmatprep.subr.mxu0 %v3081
  %3210 = vmatpush1.msra.mxu0 %v3080
  %3211 = vmatprep.subr.mxu0 %v3079
  %3212 = vmatpush1.msra.mxu0 %v3078
  %3213 = vmatprep.subr.mxu0 %v3077
  %3214 = vmatpush1.msra.mxu0 %v3076
  %3215 = vmatprep.subr.mxu0 %v3075
  %3216 = vmatpush1.msra.mxu0 %v3074
  %3217 = vmatprep.subr.mxu0 0.0
  %3218 = vmatpush2.msra.mxu0 0.0
  %3219 = vmatprep.subr.mxu0 0.0
  %3220 = vmatpush2.msra.mxu0 0.0
  %3221 = vmatprep.subr.mxu0 0.0
  %3222 = vmatpush2.msra.mxu0 0.0
  %3223 = vmatprep.subr.mxu0 0.0
  %3224 = vmatpush2.msra.mxu0 0.0
  %3225 = vmatprep.subr.mxu0 0.0
  %3226 = vmatpush2.msra.mxu0 0.0
  %3227 = vmatprep.subr.mxu0 0.0
  %3228 = vmatpush2.msra.mxu0 0.0
  %3229 = vmatprep.subr.mxu0 0.0
  %3230 = vmatpush2.msra.mxu0 0.0
  %3231 = vmatprep.subr.mxu0 0.0
  %3232 = vmatpush2.msra.mxu0 0.0
  %3233 = vmatprep.subr.mxu0 0.0
  %3234 = vmatpush2.msra.mxu0 0.0
  %3235 = vmatprep.subr.mxu0 0.0
  %3236 = vmatpush2.msra.mxu0 0.0
  %3237 = vmatprep.subr.mxu0 0.0
  %3238 = vmatpush2.msra.mxu0 0.0
  %3239 = vmatprep.subr.mxu0 0.0
  %3240 = vmatpush2.msra.mxu0 0.0
  %3241 = vmatprep.subr.mxu0 0.0
  %3242 = vmatpush2.msra.mxu0 0.0
  %3243 = vmatprep.subr.mxu0 0.0
  %3244 = vmatpush2.msra.mxu0 0.0
  %3245 = vmatprep.subr.mxu0 0.0
  %3246 = vmatpush2.msra.mxu0 0.0
  %3247 = vmatprep.subr.mxu0 0.0
  %3248 = vmatpush2.msra.mxu0 0.0
  %3249 = vmatprep.mubr.f32.mxu0 0.0
  %3250 = vmatmul.mubr.f32.gmra.mxu0 %v3183
  %v3251 = vpop.f32.mrf.mxu0
  %v3252 = vadd.f32 %v3179, %v3251
  %v3253 = vpop.f32.mrf.mxu0
  %v3254 = vadd.f32 %v3181, %v3253
  %3255 = vdwg.mxu0
  %s3256 = scalar_lea.vmem %s12, 256
  %v3257 = vld [vmem:[%s3256] sm:$0xff]
  %v3258 = vld [vmem:[%s3256 + $0x8] sm:$0xff]
  %v3259 = vld [vmem:[%s3256 + $0x10] sm:$0xff]
  %v3260 = vld [vmem:[%s3256 + $0x18] sm:$0xff]
  %v3261 = vld [vmem:[%s3256 + $0x20] sm:$0xff]
  %v3262 = vld [vmem:[%s3256 + $0x28] sm:$0xff]
  %v3263 = vld [vmem:[%s3256 + $0x30] sm:$0xff]
  %v3264 = vld [vmem:[%s3256 + $0x38] sm:$0xff]
  %v3265 = vld [vmem:[%s3256 + $0x40] sm:$0xff]
  %v3266 = vld [vmem:[%s3256 + $0x48] sm:$0xff]
  %v3267 = vld [vmem:[%s3256 + $0x50] sm:$0xff]
  %v3268 = vld [vmem:[%s3256 + $0x58] sm:$0xff]
  %v3269 = vld [vmem:[%s3256 + $0x60] sm:$0xff]
  %v3270 = vld [vmem:[%s3256 + $0x68] sm:$0xff]
  %v3271 = vld [vmem:[%s3256 + $0x70] sm:$0xff]
  %v3272 = vld [vmem:[%s3256 + $0x78] sm:$0xff]
  %v3273 = vrot.slane %v3058, 4
  %v3274 = vsel %vm3109, %v3273, 0
  %3276 = vmatprep.subr.mxu0 0.0
  %3277 = vmatpush1.msra.mxu0 0.0
  %3278 = vmatprep.subr.mxu0 0.0
  %3279 = vmatpush1.msra.mxu0 0.0
  %3280 = vmatprep.subr.mxu0 0.0
  %3281 = vmatpush1.msra.mxu0 0.0
  %3282 = vmatprep.subr.mxu0 0.0
  %3283 = vmatpush1.msra.mxu0 0.0
  %3284 = vmatprep.subr.mxu0 0.0
  %3285 = vmatpush1.msra.mxu0 0.0
  %3286 = vmatprep.subr.mxu0 0.0
  %3287 = vmatpush1.msra.mxu0 0.0
  %3288 = vmatprep.subr.mxu0 0.0
  %3289 = vmatpush1.msra.mxu0 0.0
  %3290 = vmatprep.subr.mxu0 0.0
  %3291 = vmatpush1.msra.mxu0 0.0
  %3292 = vmatprep.subr.mxu0 %v3272
  %3293 = vmatpush1.msra.mxu0 %v3271
  %3294 = vmatprep.subr.mxu0 %v3270
  %3295 = vmatpush1.msra.mxu0 %v3269
  %3296 = vmatprep.subr.mxu0 %v3268
  %3297 = vmatpush1.msra.mxu0 %v3267
  %3298 = vmatprep.subr.mxu0 %v3266
  %3299 = vmatpush1.msra.mxu0 %v3265
  %3300 = vmatprep.subr.mxu0 %v3264
  %3301 = vmatpush1.msra.mxu0 %v3263
  %3302 = vmatprep.subr.mxu0 %v3262
  %3303 = vmatpush1.msra.mxu0 %v3261
  %3304 = vmatprep.subr.mxu0 %v3260
  %3305 = vmatpush1.msra.mxu0 %v3259
  %3306 = vmatprep.subr.mxu0 %v3258
  %3307 = vmatpush1.msra.mxu0 %v3257
  %3308 = vmatprep.subr.mxu0 0.0
  %3309 = vmatpush2.msra.mxu0 0.0
  %3310 = vmatprep.subr.mxu0 0.0
  %3311 = vmatpush2.msra.mxu0 0.0
  %3312 = vmatprep.subr.mxu0 0.0
  %3313 = vmatpush2.msra.mxu0 0.0
  %3314 = vmatprep.subr.mxu0 0.0
  %3315 = vmatpush2.msra.mxu0 0.0
  %3316 = vmatprep.subr.mxu0 0.0
  %3317 = vmatpush2.msra.mxu0 0.0
  %3318 = vmatprep.subr.mxu0 0.0
  %3319 = vmatpush2.msra.mxu0 0.0
  %3320 = vmatprep.subr.mxu0 0.0
  %3321 = vmatpush2.msra.mxu0 0.0
  %3322 = vmatprep.subr.mxu0 0.0
  %3323 = vmatpush2.msra.mxu0 0.0
  %3324 = vmatprep.subr.mxu0 0.0
  %3325 = vmatpush2.msra.mxu0 0.0
  %3326 = vmatprep.subr.mxu0 0.0
  %3327 = vmatpush2.msra.mxu0 0.0
  %3328 = vmatprep.subr.mxu0 0.0
  %3329 = vmatpush2.msra.mxu0 0.0
  %3330 = vmatprep.subr.mxu0 0.0
  %3331 = vmatpush2.msra.mxu0 0.0
  %3332 = vmatprep.subr.mxu0 0.0
  %3333 = vmatpush2.msra.mxu0 0.0
  %3334 = vmatprep.subr.mxu0 0.0
  %3335 = vmatpush2.msra.mxu0 0.0
  %3336 = vmatprep.subr.mxu0 0.0
  %3337 = vmatpush2.msra.mxu0 0.0
  %3338 = vmatprep.subr.mxu0 0.0
  %3339 = vmatpush2.msra.mxu0 0.0
  %3340 = vmatprep.mubr.f32.mxu0 0.0
  %3341 = vmatmul.mubr.f32.gmra.mxu0 %v3274
  %v3342 = vpop.f32.mrf.mxu0
  %v3343 = vadd.f32 0.0, %v3342
  %v3344 = vpop.f32.mrf.mxu0
  %v3345 = vadd.f32 0.0, %v3344
  %3346 = vdwg.mxu0
  %v3347 = vadd.f32 %v3252, %v3343
  %v3348 = vadd.f32 %v3254, %v3345
  %s3349 = scalar_lea.vmem %s12, 384
  %v3350 = vld [vmem:[%s3349] sm:$0xff]
  %v3351 = vld [vmem:[%s3349 + $0x8] sm:$0xff]
  %v3352 = vld [vmem:[%s3349 + $0x10] sm:$0xff]
  %v3353 = vld [vmem:[%s3349 + $0x18] sm:$0xff]
  %v3354 = vld [vmem:[%s3349 + $0x20] sm:$0xff]
  %v3355 = vld [vmem:[%s3349 + $0x28] sm:$0xff]
  %v3356 = vld [vmem:[%s3349 + $0x30] sm:$0xff]
  %v3357 = vld [vmem:[%s3349 + $0x38] sm:$0xff]
  %v3358 = vld [vmem:[%s3349 + $0x40] sm:$0xff]
  %v3359 = vld [vmem:[%s3349 + $0x48] sm:$0xff]
  %v3360 = vld [vmem:[%s3349 + $0x50] sm:$0xff]
  %v3361 = vld [vmem:[%s3349 + $0x58] sm:$0xff]
  %v3362 = vld [vmem:[%s3349 + $0x60] sm:$0xff]
  %v3363 = vld [vmem:[%s3349 + $0x68] sm:$0xff]
  %v3364 = vld [vmem:[%s3349 + $0x70] sm:$0xff]
  %v3365 = vld [vmem:[%s3349 + $0x78] sm:$0xff]
  %v3366 = vrot.slane %v3058, 6
  %v3367 = vsel %vm3109, %v3366, 0
  %3369 = vmatprep.subr.mxu0 0.0
  %3370 = vmatpush1.msra.mxu0 0.0
  %3371 = vmatprep.subr.mxu0 0.0
  %3372 = vmatpush1.msra.mxu0 0.0
  %3373 = vmatprep.subr.mxu0 0.0
  %3374 = vmatpush1.msra.mxu0 0.0
  %3375 = vmatprep.subr.mxu0 0.0
  %3376 = vmatpush1.msra.mxu0 0.0
  %3377 = vmatprep.subr.mxu0 0.0
  %3378 = vmatpush1.msra.mxu0 0.0
  %3379 = vmatprep.subr.mxu0 0.0
  %3380 = vmatpush1.msra.mxu0 0.0
  %3381 = vmatprep.subr.mxu0 0.0
  %3382 = vmatpush1.msra.mxu0 0.0
  %3383 = vmatprep.subr.mxu0 0.0
  %3384 = vmatpush1.msra.mxu0 0.0
  %3385 = vmatprep.subr.mxu0 %v3365
  %3386 = vmatpush1.msra.mxu0 %v3364
  %3387 = vmatprep.subr.mxu0 %v3363
  %3388 = vmatpush1.msra.mxu0 %v3362
  %3389 = vmatprep.subr.mxu0 %v3361
  %3390 = vmatpush1.msra.mxu0 %v3360
  %3391 = vmatprep.subr.mxu0 %v3359
  %3392 = vmatpush1.msra.mxu0 %v3358
  %3393 = vmatprep.subr.mxu0 %v3357
  %3394 = vmatpush1.msra.mxu0 %v3356
  %3395 = vmatprep.subr.mxu0 %v3355
  %3396 = vmatpush1.msra.mxu0 %v3354
  %3397 = vmatprep.subr.mxu0 %v3353
  %3398 = vmatpush1.msra.mxu0 %v3352
  %3399 = vmatprep.subr.mxu0 %v3351
  %3400 = vmatpush1.msra.mxu0 %v3350
  %3401 = vmatprep.subr.mxu0 0.0
  %3402 = vmatpush2.msra.mxu0 0.0
  %3403 = vmatprep.subr.mxu0 0.0
  %3404 = vmatpush2.msra.mxu0 0.0
  %3405 = vmatprep.subr.mxu0 0.0
  %3406 = vmatpush2.msra.mxu0 0.0
  %3407 = vmatprep.subr.mxu0 0.0
  %3408 = vmatpush2.msra.mxu0 0.0
  %3409 = vmatprep.subr.mxu0 0.0
  %3410 = vmatpush2.msra.mxu0 0.0
  %3411 = vmatprep.subr.mxu0 0.0
  %3412 = vmatpush2.msra.mxu0 0.0
  %3413 = vmatprep.subr.mxu0 0.0
  %3414 = vmatpush2.msra.mxu0 0.0
  %3415 = vmatprep.subr.mxu0 0.0
  %3416 = vmatpush2.msra.mxu0 0.0
  %3417 = vmatprep.subr.mxu0 0.0
  %3418 = vmatpush2.msra.mxu0 0.0
  %3419 = vmatprep.subr.mxu0 0.0
  %3420 = vmatpush2.msra.mxu0 0.0
  %3421 = vmatprep.subr.mxu0 0.0
  %3422 = vmatpush2.msra.mxu0 0.0
  %3423 = vmatprep.subr.mxu0 0.0
  %3424 = vmatpush2.msra.mxu0 0.0
  %3425 = vmatprep.subr.mxu0 0.0
  %3426 = vmatpush2.msra.mxu0 0.0
  %3427 = vmatprep.subr.mxu0 0.0
  %3428 = vmatpush2.msra.mxu0 0.0
  %3429 = vmatprep.subr.mxu0 0.0
  %3430 = vmatpush2.msra.mxu0 0.0
  %3431 = vmatprep.subr.mxu0 0.0
  %3432 = vmatpush2.msra.mxu0 0.0
  %3433 = vmatprep.mubr.f32.mxu0 0.0
  %3434 = vmatmul.mubr.f32.gmra.mxu0 %v3367
  %v3435 = vpop.f32.mrf.mxu0
  %v3436 = vadd.f32 0.0, %v3435
  %v3437 = vpop.f32.mrf.mxu0
  %v3438 = vadd.f32 0.0, %v3437
  %3439 = vdwg.mxu0
  %v3440 = vadd.f32 %v3347, %v3436
  %v3441 = vadd.f32 %v3348, %v3438
  %v3442 = vld [vmem:[%s13] sm:$0x3]
  %v3444 = vlaneseq
  %v3445 = vshrl.u32 %v3444, 7
  %v3446 = vsub.s32 0, %v3445
  %v3447 = vrot.slane %v3442, %v3446
  %v3448 = vlaneseq
  %v3449 = vshrl.u32 %v3448, 7
  %v3450 = vsub.s32 1, %v3449
  %v3451 = vrot.slane %v3442, %v3450
  %v3454 = vadd.f32 %v3440, %v3447
  %v3455 = vadd.f32 %v3441, %v3451
  %v3456 = vld [vmem:[%s14] sm:$0x3]
  %v3457 = vmul.f32 %v3455, 0.5
  %v3458 = vmul.f32 %v3457, 1.442695
  %v3459 = vpow.pop %v3458
  %v3460 = vmul.f32 %v3456, %v3459
  %v3461 = vadd.f32 %v3454, %v3460
  %3462 = vst [vmem:[%s15] sm:$0x3] %v3454
  %3463 = vst [vmem:[%s15 + $0x2] sm:$0x3] %v3455
  %3464 = vst [vmem:[%s15 + $0x4] sm:$0x3] %v3461
  // Predicated region
  $region83: #{vae_enc_forward.1} parent=0 // pred_check
    _
  $region84: #{vae_enc_forward.1} parent=0 // pred_check_branch
    %3466 = sbr.rel (0) target = $region86
  $region85: #{vae_enc_forward.1} parent=0 // pred_region
    _
  $region86: #{vae_enc_forward.1} parent=0 // pred_fallthru
    _
  // Predicated region
  $region87: #{vae_enc_forward.1} parent=0 // pred_check
    _
  $region88: #{vae_enc_forward.1} parent=0 // pred_check_branch
    %3468 = sbr.rel (0) target = $region90
  $region89: #{vae_enc_forward.1} parent=0 // pred_region
    _
  $region90: #{vae_enc_forward.1} parent=0 // pred_fallthru
    _

</llo_original>
